<compile_context>
chip_gen: v7x
topology: tpu7x:2x2x1
jax: 0.10.0
libtpu: 0.0.40
codegen_flags: <defaults>
</compile_context>

<pallas_src>
import functools

import jax
import jax.numpy as jnp
from jax.experimental import pallas as pl
from jax.experimental.pallas import tpu as pltpu


def _l1loss_beta_kernel(yb_ref, yt_ref, l_ref, p1_ref, p2_ref, *,
                        n_valid, apply_mask):
    """One (tm, tn) block of Y@Y^T feeds both loss terms; emits (8,128) partials."""
    i = pl.program_id(0)
    j = pl.program_id(1)
    tm = yb_ref.shape[0]
    tn = yt_ref.shape[1]

    # Single MXU matmul: (tm, d) @ (d, tn) -> (tm, tn), f32 accumulation.
    # Pad rows/cols of Y are zero-filled in the wrapper, so yyt is exact
    # (exactly 0) outside the valid [0, n_valid) x [0, n_valid) region.
    yyt = jnp.dot(yb_ref[...], yt_ref[...], preferred_element_type=jnp.float32)

    if apply_mask:
        # Edge blocks of L read past (n, n); the padded contents are
        # unspecified (possibly NaN/Inf), so they must be zeroed before the
        # multiply.  |yyt| needs no mask (it is exactly 0 there).
        col_ok = (jax.lax.broadcasted_iota(jnp.int32, (8, tn), 1)
                  + j * tn) < n_valid
        row_base = jax.lax.broadcasted_iota(jnp.int32, (8, tn), 0) + i * tm

    # Row fold (tm, tn) -> (8, tn): tile-aligned static 8-row slices + VPU adds
    # only.  L load / multiply / abs / mask are interleaved per slice so the
    # full-size products are never materialized (only yyt is).
    a1 = None
    a2 = None
    for g in range(tm // 8):
        sl = slice(g * 8, (g + 1) * 8)
        yy_s = yyt[sl, :]
        t1_s = l_ref[sl, :].astype(jnp.float32) * yy_s
        if apply_mask:
            ok = col_ok & ((row_base + g * 8) < n_valid)
            t1_s = jnp.where(ok, t1_s, 0.0)
        t2_s = jnp.abs(yy_s)
        a1 = t1_s if a1 is None else a1 + t1_s
        a2 = t2_s if a2 is None else a2 + t2_s

    # Lane fold (8, tn) -> (8, 128): 128-lane aligned slices + VPU adds.
    p1 = a1[:, 0:128]
    p2 = a2[:, 0:128]
    for c in range(1, tn // 128):
        sl = slice(c * 128, (c + 1) * 128)
        p1 = p1 + a1[:, sl]
        p2 = p2 + a2[:, sl]

    p1_ref[...] = p1
    p2_ref[...] = p2


def _plan_tiles(n, d, y_itemsize, l_itemsize):
    """Pick (tm, tn) tiles: multiples of (8, 128), sized to fit every device's
    DEFAULT scoped-VMEM budget (v5e 16 MiB is the smallest)."""
    tn = min(512, pl.cdiv(n, 128) * 128)
    n_sub = pl.cdiv(n, 8) * 8
    budget = 12 << 20  # leave headroom under the 16 MiB v5e default
    tm = 8
    for cand in (1024, 512, 256, 128, 64, 32, 16, 8):
        tm = min(cand, n_sub)
        need = (2 * tm * tn * l_itemsize      # double-buffered L block
                + tm * tn * 4                 # f32 Y@Y^T block
                + 2 * d * tn * y_itemsize     # double-buffered Y^T col block
                + 2 * tm * d * y_itemsize     # double-buffered Y row block
                + (1 << 20))                  # folds, masks, outputs, slack
        if need <= budget:
            break
    return tm, tn


def l1_loss_beta(Y, W, L, *, beta=1.0, isDivW=False):
    """Pallas implementation of L1LossBeta.forward(Y, W, L)."""
    del isDivW  # unused in the reference forward pass
    n, d = Y.shape
    assert L.shape == (n, n), f"L must be ({n},{n}), got {L.shape}"
    n_w = W.shape[0]

    tm, tn = _plan_tiles(n, d,
                         jnp.dtype(Y.dtype).itemsize,
                         jnp.dtype(L.dtype).itemsize)
    grid_i = pl.cdiv(n, tm)
    grid_j = pl.cdiv(n, tn)

    # Zero-pad only Y (tiny: n x d) so every Y row block / Y^T col block the
    # kernel reads is in-bounds and exactly zero beyond row n.  L is NOT padded.
    n_pad_rows = max(grid_i * tm, grid_j * tn)
    Yp = jnp.pad(Y, ((0, n_pad_rows - n), (0, 0))) if n_pad_rows != n else Y
    Yt = Yp.T  # (d, n_pad_rows)

    apply_mask = (n % tm != 0) or (n % tn != 0)
    kernel = functools.partial(_l1loss_beta_kernel,
                               n_valid=n, apply_mask=apply_mask)

    nblk = grid_i * grid_j
    p1, p2 = pl.pallas_call(
        kernel,
        out_shape=(
            jax.ShapeDtypeStruct((nblk * 8, 128), jnp.float32),
            jax.ShapeDtypeStruct((nblk * 8, 128), jnp.float32),
        ),
        grid=(grid_i, grid_j),
        in_specs=[
            pl.BlockSpec((tm, d), lambda i, j: (i, 0)),    # Y row block (reused across j)
            pl.BlockSpec((d, tn), lambda i, j: (0, j)),    # Y^T col block
            pl.BlockSpec((tm, tn), lambda i, j: (i, j)),   # L block (dominant stream)
        ],
        out_specs=(
            pl.BlockSpec((8, 128), lambda i, j: (i * grid_j + j, 0)),  # term1 partials
            pl.BlockSpec((8, 128), lambda i, j: (i * grid_j + j, 0)),  # term2 partials
        ),
        compiler_params=pltpu.CompilerParams(
            dimension_semantics=("parallel", "parallel"),  # megacore-shardable
        ),
    )(Yp, Yt, L)

    term1 = jnp.sum(p1)          # trace(Y^T L Y) == sum(L ⊙ YY^T)
    term2 = jnp.sum(p2)          # sum(|YY^T|)
    return (term1 + jnp.float32(beta) * term2) / jnp.float32(n_w)


if __name__ == "__main__":
    key = jax.random.PRNGKey(0)
    k_y1, k_l1, k_y2, k_l2 = jax.random.split(key, 4)

    def reference(Y, W, L, beta):
        hp = jax.lax.Precision.HIGHEST
        t1 = jnp.trace(jnp.matmul(jnp.matmul(Y.T, L, precision=hp), Y, precision=hp))
        yyt = jnp.matmul(Y, Y.T, precision=hp)
        return t1 / W.shape[0] + beta * jnp.sum(jnp.abs(yyt)) / W.shape[0]

    # Case 1: unaligned n -> multi-block grid + in-kernel edge masking.
    n, d, kdim, beta = 600, 32, 8, 0.7
    Y = jax.random.normal(k_y1, (n, d), dtype=jnp.float32)
    W = jnp.zeros((n, kdim), dtype=jnp.float32)       # only shape[0] is used
    Ls = jax.random.normal(k_l1, (n, n), dtype=jnp.float32)
    L = 0.5 * (Ls + Ls.T)
    out1 = jax.block_until_ready(
        jax.jit(functools.partial(l1_loss_beta, beta=beta))(Y, W, L))
    ref1 = reference(Y, W, L, beta)
    assert jnp.allclose(out1, ref1, rtol=1e-3, atol=1e-2), (float(out1), float(ref1))

    # Case 2: tile-aligned n -> no-mask / no-pad fast path.
    n, d, kdim, beta = 256, 16, 4, 1.0
    Y = jax.random.normal(k_y2, (n, d), dtype=jnp.float32)
    W = jnp.zeros((n, kdim), dtype=jnp.float32)
    Ls = jax.random.normal(k_l2, (n, n), dtype=jnp.float32)
    L = 0.5 * (Ls + Ls.T)
    out2 = jax.block_until_ready(
        jax.jit(functools.partial(l1_loss_beta, beta=beta))(Y, W, L))
    ref2 = reference(Y, W, L, beta)
    assert jnp.allclose(out2, ref2, rtol=1e-3, atol=1e-2), (float(out2), float(ref2))

    print("KERNEL_OK")
</pallas_src>

<mosaic_0001>
module attributes {stable_mosaic.version = 11 : i64} {
  func.func @_l1loss_beta_kernel(%arg0: i32, %arg1: i32, %arg2: memref<600x32xf32, #tpu.memory_space<vmem>>, %arg3: memref<32x512xf32, #tpu.memory_space<vmem>>, %arg4: memref<600x512xf32, #tpu.memory_space<vmem>>, %arg5: memref<8x128xf32, #tpu.memory_space<vmem>>, %arg6: memref<8x128xf32, #tpu.memory_space<vmem>>) attributes {dimension_semantics = [#tpu.dimension_semantics<parallel>, #tpu.dimension_semantics<parallel>], iteration_bounds = array<i64: 1, 2>, scalar_prefetch = 0 : i64, scratch_operands = 0 : i64, tpu.core_type = #tpu.core_type<tc>, window_params = [{transform_indices = @transform_0, window_bounds = array<i64: 600, 32>}, {transform_indices = @transform_1, window_bounds = array<i64: 32, 512>}, {transform_indices = @transform_2, window_bounds = array<i64: 600, 512>}, {transform_indices = @transform_3, window_bounds = array<i64: 8, 128>}, {transform_indices = @transform_4, window_bounds = array<i64: 8, 128>}]} {
    %c0 = arith.constant 0 : index
    %c0_0 = arith.constant 0 : index
    %0 = vector.load %arg2[%c0, %c0_0] : memref<600x32xf32, #tpu.memory_space<vmem>>, vector<600x32xf32>
    %c0_1 = arith.constant 0 : index
    %c0_2 = arith.constant 0 : index
    %1 = vector.load %arg3[%c0_1, %c0_2] : memref<32x512xf32, #tpu.memory_space<vmem>>, vector<32x512xf32>
    %cst = arith.constant dense<0.000000e+00> : vector<600x512xf32>
    %2 = tpu.matmul %0, %1, %cst {dimension_numbers = #tpu.dot_dimension_numbers<[1], [0], [0], [1], [0, 0, 1, 1], [], []>} : vector<600x32xf32>, vector<32x512xf32>, vector<600x512xf32> -> vector<600x512xf32>
    %3 = tpu.iota {dimensions = array<i32: 1>} : vector<8x512xi32>
    %c512_i32 = arith.constant 512 : i32
    %4 = arith.muli %arg1, %c512_i32 : i32
    %5 = vector.broadcast %4 : i32 to vector<8x512xi32>
    %6 = arith.addi %3, %5 : vector<8x512xi32>
    %c600_i32 = arith.constant 600 : i32
    %7 = vector.broadcast %c600_i32 : i32 to vector<8x512xi32>
    %8 = arith.cmpi slt, %6, %7 : vector<8x512xi32>
    %9 = tpu.iota {dimensions = array<i32: 0>} : vector<8x512xi32>
    %c600_i32_3 = arith.constant 600 : i32
    %10 = arith.muli %arg0, %c600_i32_3 : i32
    %11 = vector.broadcast %10 : i32 to vector<8x512xi32>
    %12 = arith.addi %9, %11 : vector<8x512xi32>
    %13 = vector.extract_strided_slice %2 {offsets = [0, 0], sizes = [8, 512], strides = [1, 1]} : vector<600x512xf32> to vector<8x512xf32>
    %c0_4 = arith.constant 0 : index
    %c0_5 = arith.constant 0 : index
    %14 = vector.load %arg4[%c0_4, %c0_5] : memref<600x512xf32, #tpu.memory_space<vmem>>, vector<8x512xf32>
    %15 = arith.mulf %14, %13 : vector<8x512xf32>
    %c0_i32 = arith.constant 0 : i32
    %16 = vector.broadcast %c0_i32 : i32 to vector<8x512xi32>
    %17 = arith.addi %12, %16 : vector<8x512xi32>
    %c600_i32_6 = arith.constant 600 : i32
    %18 = vector.broadcast %c600_i32_6 : i32 to vector<8x512xi32>
    %19 = arith.cmpi slt, %17, %18 : vector<8x512xi32>
    %20 = arith.andi %8, %19 : vector<8x512xi1>
    %cst_7 = arith.constant 0.000000e+00 : f32
    %21 = vector.broadcast %cst_7 : f32 to vector<8x512xf32>
    %22 = arith.select %20, %15, %21 : vector<8x512xi1>, vector<8x512xf32>
    %23 = math.absf %13 : vector<8x512xf32>
    %24 = vector.extract_strided_slice %2 {offsets = [8, 0], sizes = [8, 512], strides = [1, 1]} : vector<600x512xf32> to vector<8x512xf32>
    %c8 = arith.constant 8 : index
    %c0_8 = arith.constant 0 : index
    %25 = vector.load %arg4[%c8, %c0_8] : memref<600x512xf32, #tpu.memory_space<vmem>>, vector<8x512xf32>
    %26 = arith.mulf %25, %24 : vector<8x512xf32>
    %c8_i32 = arith.constant 8 : i32
    %27 = vector.broadcast %c8_i32 : i32 to vector<8x512xi32>
    %28 = arith.addi %12, %27 : vector<8x512xi32>
    %c600_i32_9 = arith.constant 600 : i32
    %29 = vector.broadcast %c600_i32_9 : i32 to vector<8x512xi32>
    %30 = arith.cmpi slt, %28, %29 : vector<8x512xi32>
    %31 = arith.andi %8, %30 : vector<8x512xi1>
    %cst_10 = arith.constant 0.000000e+00 : f32
    %32 = vector.broadcast %cst_10 : f32 to vector<8x512xf32>
    %33 = arith.select %31, %26, %32 : vector<8x512xi1>, vector<8x512xf32>
    %34 = math.absf %24 : vector<8x512xf32>
    %35 = arith.addf %22, %33 : vector<8x512xf32>
    %36 = arith.addf %23, %34 : vector<8x512xf32>
    %37 = vector.extract_strided_slice %2 {offsets = [16, 0], sizes = [8, 512], strides = [1, 1]} : vector<600x512xf32> to vector<8x512xf32>
    %c16 = arith.constant 16 : index
    %c0_11 = arith.constant 0 : index
    %38 = vector.load %arg4[%c16, %c0_11] : memref<600x512xf32, #tpu.memory_space<vmem>>, vector<8x512xf32>
    %39 = arith.mulf %38, %37 : vector<8x512xf32>
    %c16_i32 = arith.constant 16 : i32
    %40 = vector.broadcast %c16_i32 : i32 to vector<8x512xi32>
    %41 = arith.addi %12, %40 : vector<8x512xi32>
    %c600_i32_12 = arith.constant 600 : i32
    %42 = vector.broadcast %c600_i32_12 : i32 to vector<8x512xi32>
    %43 = arith.cmpi slt, %41, %42 : vector<8x512xi32>
    %44 = arith.andi %8, %43 : vector<8x512xi1>
    %cst_13 = arith.constant 0.000000e+00 : f32
    %45 = vector.broadcast %cst_13 : f32 to vector<8x512xf32>
    %46 = arith.select %44, %39, %45 : vector<8x512xi1>, vector<8x512xf32>
    %47 = math.absf %37 : vector<8x512xf32>
    %48 = arith.addf %35, %46 : vector<8x512xf32>
    %49 = arith.addf %36, %47 : vector<8x512xf32>
    %50 = vector.extract_strided_slice %2 {offsets = [24, 0], sizes = [8, 512], strides = [1, 1]} : vector<600x512xf32> to vector<8x512xf32>
    %c24 = arith.constant 24 : index
    %c0_14 = arith.constant 0 : index
    %51 = vector.load %arg4[%c24, %c0_14] : memref<600x512xf32, #tpu.memory_space<vmem>>, vector<8x512xf32>
    %52 = arith.mulf %51, %50 : vector<8x512xf32>
    %c24_i32 = arith.constant 24 : i32
    %53 = vector.broadcast %c24_i32 : i32 to vector<8x512xi32>
    %54 = arith.addi %12, %53 : vector<8x512xi32>
    %c600_i32_15 = arith.constant 600 : i32
    %55 = vector.broadcast %c600_i32_15 : i32 to vector<8x512xi32>
    %56 = arith.cmpi slt, %54, %55 : vector<8x512xi32>
    %57 = arith.andi %8, %56 : vector<8x512xi1>
    %cst_16 = arith.constant 0.000000e+00 : f32
    %58 = vector.broadcast %cst_16 : f32 to vector<8x512xf32>
    %59 = arith.select %57, %52, %58 : vector<8x512xi1>, vector<8x512xf32>
    %60 = math.absf %50 : vector<8x512xf32>
    %61 = arith.addf %48, %59 : vector<8x512xf32>
    %62 = arith.addf %49, %60 : vector<8x512xf32>
    %63 = vector.extract_strided_slice %2 {offsets = [32, 0], sizes = [8, 512], strides = [1, 1]} : vector<600x512xf32> to vector<8x512xf32>
    %c32 = arith.constant 32 : index
    %c0_17 = arith.constant 0 : index
    %64 = vector.load %arg4[%c32, %c0_17] : memref<600x512xf32, #tpu.memory_space<vmem>>, vector<8x512xf32>
    %65 = arith.mulf %64, %63 : vector<8x512xf32>
    %c32_i32 = arith.constant 32 : i32
    %66 = vector.broadcast %c32_i32 : i32 to vector<8x512xi32>
    %67 = arith.addi %12, %66 : vector<8x512xi32>
    %c600_i32_18 = arith.constant 600 : i32
    %68 = vector.broadcast %c600_i32_18 : i32 to vector<8x512xi32>
    %69 = arith.cmpi slt, %67, %68 : vector<8x512xi32>
    %70 = arith.andi %8, %69 : vector<8x512xi1>
    %cst_19 = arith.constant 0.000000e+00 : f32
    %71 = vector.broadcast %cst_19 : f32 to vector<8x512xf32>
    %72 = arith.select %70, %65, %71 : vector<8x512xi1>, vector<8x512xf32>
    %73 = math.absf %63 : vector<8x512xf32>
    %74 = arith.addf %61, %72 : vector<8x512xf32>
    %75 = arith.addf %62, %73 : vector<8x512xf32>
    %76 = vector.extract_strided_slice %2 {offsets = [40, 0], sizes = [8, 512], strides = [1, 1]} : vector<600x512xf32> to vector<8x512xf32>
    %c40 = arith.constant 40 : index
    %c0_20 = arith.constant 0 : index
    %77 = vector.load %arg4[%c40, %c0_20] : memref<600x512xf32, #tpu.memory_space<vmem>>, vector<8x512xf32>
    %78 = arith.mulf %77, %76 : vector<8x512xf32>
    %c40_i32 = arith.constant 40 : i32
    %79 = vector.broadcast %c40_i32 : i32 to vector<8x512xi32>
    %80 = arith.addi %12, %79 : vector<8x512xi32>
    %c600_i32_21 = arith.constant 600 : i32
    %81 = vector.broadcast %c600_i32_21 : i32 to vector<8x512xi32>
    %82 = arith.cmpi slt, %80, %81 : vector<8x512xi32>
    %83 = arith.andi %8, %82 : vector<8x512xi1>
    %cst_22 = arith.constant 0.000000e+00 : f32
    %84 = vector.broadcast %cst_22 : f32 to vector<8x512xf32>
    %85 = arith.select %83, %78, %84 : vector<8x512xi1>, vector<8x512xf32>
    %86 = math.absf %76 : vector<8x512xf32>
    %87 = arith.addf %74, %85 : vector<8x512xf32>
    %88 = arith.addf %75, %86 : vector<8x512xf32>
    %89 = vector.extract_strided_slice %2 {offsets = [48, 0], sizes = [8, 512], strides = [1, 1]} : vector<600x512xf32> to vector<8x512xf32>
    %c48 = arith.constant 48 : index
    %c0_23 = arith.constant 0 : index
    %90 = vector.load %arg4[%c48, %c0_23] : memref<600x512xf32, #tpu.memory_space<vmem>>, vector<8x512xf32>
    %91 = arith.mulf %90, %89 : vector<8x512xf32>
    %c48_i32 = arith.constant 48 : i32
    %92 = vector.broadcast %c48_i32 : i32 to vector<8x512xi32>
    %93 = arith.addi %12, %92 : vector<8x512xi32>
    %c600_i32_24 = arith.constant 600 : i32
    %94 = vector.broadcast %c600_i32_24 : i32 to vector<8x512xi32>
    %95 = arith.cmpi slt, %93, %94 : vector<8x512xi32>
    %96 = arith.andi %8, %95 : vector<8x512xi1>
    %cst_25 = arith.constant 0.000000e+00 : f32
    %97 = vector.broadcast %cst_25 : f32 to vector<8x512xf32>
    %98 = arith.select %96, %91, %97 : vector<8x512xi1>, vector<8x512xf32>
    %99 = math.absf %89 : vector<8x512xf32>
    %100 = arith.addf %87, %98 : vector<8x512xf32>
    %101 = arith.addf %88, %99 : vector<8x512xf32>
    %102 = vector.extract_strided_slice %2 {offsets = [56, 0], sizes = [8, 512], strides = [1, 1]} : vector<600x512xf32> to vector<8x512xf32>
    %c56 = arith.constant 56 : index
    %c0_26 = arith.constant 0 : index
    %103 = vector.load %arg4[%c56, %c0_26] : memref<600x512xf32, #tpu.memory_space<vmem>>, vector<8x512xf32>
    %104 = arith.mulf %103, %102 : vector<8x512xf32>
    %c56_i32 = arith.constant 56 : i32
    %105 = vector.broadcast %c56_i32 : i32 to vector<8x512xi32>
    %106 = arith.addi %12, %105 : vector<8x512xi32>
    %c600_i32_27 = arith.constant 600 : i32
    %107 = vector.broadcast %c600_i32_27 : i32 to vector<8x512xi32>
    %108 = arith.cmpi slt, %106, %107 : vector<8x512xi32>
    %109 = arith.andi %8, %108 : vector<8x512xi1>
    %cst_28 = arith.constant 0.000000e+00 : f32
    %110 = vector.broadcast %cst_28 : f32 to vector<8x512xf32>
    %111 = arith.select %109, %104, %110 : vector<8x512xi1>, vector<8x512xf32>
    %112 = math.absf %102 : vector<8x512xf32>
    %113 = arith.addf %100, %111 : vector<8x512xf32>
    %114 = arith.addf %101, %112 : vector<8x512xf32>
    %115 = vector.extract_strided_slice %2 {offsets = [64, 0], sizes = [8, 512], strides = [1, 1]} : vector<600x512xf32> to vector<8x512xf32>
    %c64 = arith.constant 64 : index
    %c0_29 = arith.constant 0 : index
    %116 = vector.load %arg4[%c64, %c0_29] : memref<600x512xf32, #tpu.memory_space<vmem>>, vector<8x512xf32>
    %117 = arith.mulf %116, %115 : vector<8x512xf32>
    %c64_i32 = arith.constant 64 : i32
    %118 = vector.broadcast %c64_i32 : i32 to vector<8x512xi32>
    %119 = arith.addi %12, %118 : vector<8x512xi32>
    %c600_i32_30 = arith.constant 600 : i32
    %120 = vector.broadcast %c600_i32_30 : i32 to vector<8x512xi32>
    %121 = arith.cmpi slt, %119, %120 : vector<8x512xi32>
    %122 = arith.andi %8, %121 : vector<8x512xi1>
    %cst_31 = arith.constant 0.000000e+00 : f32
    %123 = vector.broadcast %cst_31 : f32 to vector<8x512xf32>
    %124 = arith.select %122, %117, %123 : vector<8x512xi1>, vector<8x512xf32>
    %125 = math.absf %115 : vector<8x512xf32>
    %126 = arith.addf %113, %124 : vector<8x512xf32>
    %127 = arith.addf %114, %125 : vector<8x512xf32>
    %128 = vector.extract_strided_slice %2 {offsets = [72, 0], sizes = [8, 512], strides = [1, 1]} : vector<600x512xf32> to vector<8x512xf32>
    %c72 = arith.constant 72 : index
    %c0_32 = arith.constant 0 : index
    %129 = vector.load %arg4[%c72, %c0_32] : memref<600x512xf32, #tpu.memory_space<vmem>>, vector<8x512xf32>
    %130 = arith.mulf %129, %128 : vector<8x512xf32>
    %c72_i32 = arith.constant 72 : i32
    %131 = vector.broadcast %c72_i32 : i32 to vector<8x512xi32>
    %132 = arith.addi %12, %131 : vector<8x512xi32>
    %c600_i32_33 = arith.constant 600 : i32
    %133 = vector.broadcast %c600_i32_33 : i32 to vector<8x512xi32>
    %134 = arith.cmpi slt, %132, %133 : vector<8x512xi32>
    %135 = arith.andi %8, %134 : vector<8x512xi1>
    %cst_34 = arith.constant 0.000000e+00 : f32
    %136 = vector.broadcast %cst_34 : f32 to vector<8x512xf32>
    %137 = arith.select %135, %130, %136 : vector<8x512xi1>, vector<8x512xf32>
    %138 = math.absf %128 : vector<8x512xf32>
    %139 = arith.addf %126, %137 : vector<8x512xf32>
    %140 = arith.addf %127, %138 : vector<8x512xf32>
    %141 = vector.extract_strided_slice %2 {offsets = [80, 0], sizes = [8, 512], strides = [1, 1]} : vector<600x512xf32> to vector<8x512xf32>
    %c80 = arith.constant 80 : index
    %c0_35 = arith.constant 0 : index
    %142 = vector.load %arg4[%c80, %c0_35] : memref<600x512xf32, #tpu.memory_space<vmem>>, vector<8x512xf32>
    %143 = arith.mulf %142, %141 : vector<8x512xf32>
    %c80_i32 = arith.constant 80 : i32
    %144 = vector.broadcast %c80_i32 : i32 to vector<8x512xi32>
    %145 = arith.addi %12, %144 : vector<8x512xi32>
    %c600_i32_36 = arith.constant 600 : i32
    %146 = vector.broadcast %c600_i32_36 : i32 to vector<8x512xi32>
    %147 = arith.cmpi slt, %145, %146 : vector<8x512xi32>
    %148 = arith.andi %8, %147 : vector<8x512xi1>
    %cst_37 = arith.constant 0.000000e+00 : f32
    %149 = vector.broadcast %cst_37 : f32 to vector<8x512xf32>
    %150 = arith.select %148, %143, %149 : vector<8x512xi1>, vector<8x512xf32>
    %151 = math.absf %141 : vector<8x512xf32>
    %152 = arith.addf %139, %150 : vector<8x512xf32>
    %153 = arith.addf %140, %151 : vector<8x512xf32>
    %154 = vector.extract_strided_slice %2 {offsets = [88, 0], sizes = [8, 512], strides = [1, 1]} : vector<600x512xf32> to vector<8x512xf32>
    %c88 = arith.constant 88 : index
    %c0_38 = arith.constant 0 : index
    %155 = vector.load %arg4[%c88, %c0_38] : memref<600x512xf32, #tpu.memory_space<vmem>>, vector<8x512xf32>
    %156 = arith.mulf %155, %154 : vector<8x512xf32>
    %c88_i32 = arith.constant 88 : i32
    %157 = vector.broadcast %c88_i32 : i32 to vector<8x512xi32>
    %158 = arith.addi %12, %157 : vector<8x512xi32>
    %c600_i32_39 = arith.constant 600 : i32
    %159 = vector.broadcast %c600_i32_39 : i32 to vector<8x512xi32>
    %160 = arith.cmpi slt, %158, %159 : vector<8x512xi32>
    %161 = arith.andi %8, %160 : vector<8x512xi1>
    %cst_40 = arith.constant 0.000000e+00 : f32
    %162 = vector.broadcast %cst_40 : f32 to vector<8x512xf32>
    %163 = arith.select %161, %156, %162 : vector<8x512xi1>, vector<8x512xf32>
    %164 = math.absf %154 : vector<8x512xf32>
    %165 = arith.addf %152, %163 : vector<8x512xf32>
    %166 = arith.addf %153, %164 : vector<8x512xf32>
    %167 = vector.extract_strided_slice %2 {offsets = [96, 0], sizes = [8, 512], strides = [1, 1]} : vector<600x512xf32> to vector<8x512xf32>
    %c96 = arith.constant 96 : index
    %c0_41 = arith.constant 0 : index
    %168 = vector.load %arg4[%c96, %c0_41] : memref<600x512xf32, #tpu.memory_space<vmem>>, vector<8x512xf32>
    %169 = arith.mulf %168, %167 : vector<8x512xf32>
    %c96_i32 = arith.constant 96 : i32
    %170 = vector.broadcast %c96_i32 : i32 to vector<8x512xi32>
    %171 = arith.addi %12, %170 : vector<8x512xi32>
    %c600_i32_42 = arith.constant 600 : i32
    %172 = vector.broadcast %c600_i32_42 : i32 to vector<8x512xi32>
    %173 = arith.cmpi slt, %171, %172 : vector<8x512xi32>
    %174 = arith.andi %8, %173 : vector<8x512xi1>
    %cst_43 = arith.constant 0.000000e+00 : f32
    %175 = vector.broadcast %cst_43 : f32 to vector<8x512xf32>
    %176 = arith.select %174, %169, %175 : vector<8x512xi1>, vector<8x512xf32>
    %177 = math.absf %167 : vector<8x512xf32>
    %178 = arith.addf %165, %176 : vector<8x512xf32>
    %179 = arith.addf %166, %177 : vector<8x512xf32>
    %180 = vector.extract_strided_slice %2 {offsets = [104, 0], sizes = [8, 512], strides = [1, 1]} : vector<600x512xf32> to vector<8x512xf32>
    %c104 = arith.constant 104 : index
    %c0_44 = arith.constant 0 : index
    %181 = vector.load %arg4[%c104, %c0_44] : memref<600x512xf32, #tpu.memory_space<vmem>>, vector<8x512xf32>
    %182 = arith.mulf %181, %180 : vector<8x512xf32>
    %c104_i32 = arith.constant 104 : i32
    %183 = vector.broadcast %c104_i32 : i32 to vector<8x512xi32>
    %184 = arith.addi %12, %183 : vector<8x512xi32>
    %c600_i32_45 = arith.constant 600 : i32
    %185 = vector.broadcast %c600_i32_45 : i32 to vector<8x512xi32>
    %186 = arith.cmpi slt, %184, %185 : vector<8x512xi32>
    %187 = arith.andi %8, %186 : vector<8x512xi1>
    %cst_46 = arith.constant 0.000000e+00 : f32
    %188 = vector.broadcast %cst_46 : f32 to vector<8x512xf32>
    %189 = arith.select %187, %182, %188 : vector<8x512xi1>, vector<8x512xf32>
    %190 = math.absf %180 : vector<8x512xf32>
    %191 = arith.addf %178, %189 : vector<8x512xf32>
    %192 = arith.addf %179, %190 : vector<8x512xf32>
    %193 = vector.extract_strided_slice %2 {offsets = [112, 0], sizes = [8, 512], strides = [1, 1]} : vector<600x512xf32> to vector<8x512xf32>
    %c112 = arith.constant 112 : index
    %c0_47 = arith.constant 0 : index
    %194 = vector.load %arg4[%c112, %c0_47] : memref<600x512xf32, #tpu.memory_space<vmem>>, vector<8x512xf32>
    %195 = arith.mulf %194, %193 : vector<8x512xf32>
    %c112_i32 = arith.constant 112 : i32
    %196 = vector.broadcast %c112_i32 : i32 to vector<8x512xi32>
    %197 = arith.addi %12, %196 : vector<8x512xi32>
    %c600_i32_48 = arith.constant 600 : i32
    %198 = vector.broadcast %c600_i32_48 : i32 to vector<8x512xi32>
    %199 = arith.cmpi slt, %197, %198 : vector<8x512xi32>
    %200 = arith.andi %8, %199 : vector<8x512xi1>
    %cst_49 = arith.constant 0.000000e+00 : f32
    %201 = vector.broadcast %cst_49 : f32 to vector<8x512xf32>
    %202 = arith.select %200, %195, %201 : vector<8x512xi1>, vector<8x512xf32>
    %203 = math.absf %193 : vector<8x512xf32>
    %204 = arith.addf %191, %202 : vector<8x512xf32>
    %205 = arith.addf %192, %203 : vector<8x512xf32>
    %206 = vector.extract_strided_slice %2 {offsets = [120, 0], sizes = [8, 512], strides = [1, 1]} : vector<600x512xf32> to vector<8x512xf32>
    %c120 = arith.constant 120 : index
    %c0_50 = arith.constant 0 : index
    %207 = vector.load %arg4[%c120, %c0_50] : memref<600x512xf32, #tpu.memory_space<vmem>>, vector<8x512xf32>
    %208 = arith.mulf %207, %206 : vector<8x512xf32>
    %c120_i32 = arith.constant 120 : i32
    %209 = vector.broadcast %c120_i32 : i32 to vector<8x512xi32>
    %210 = arith.addi %12, %209 : vector<8x512xi32>
    %c600_i32_51 = arith.constant 600 : i32
    %211 = vector.broadcast %c600_i32_51 : i32 to vector<8x512xi32>
    %212 = arith.cmpi slt, %210, %211 : vector<8x512xi32>
    %213 = arith.andi %8, %212 : vector<8x512xi1>
    %cst_52 = arith.constant 0.000000e+00 : f32
    %214 = vector.broadcast %cst_52 : f32 to vector<8x512xf32>
    %215 = arith.select %213, %208, %214 : vector<8x512xi1>, vector<8x512xf32>
    %216 = math.absf %206 : vector<8x512xf32>
    %217 = arith.addf %204, %215 : vector<8x512xf32>
    %218 = arith.addf %205, %216 : vector<8x512xf32>
    %219 = vector.extract_strided_slice %2 {offsets = [128, 0], sizes = [8, 512], strides = [1, 1]} : vector<600x512xf32> to vector<8x512xf32>
    %c128 = arith.constant 128 : index
    %c0_53 = arith.constant 0 : index
    %220 = vector.load %arg4[%c128, %c0_53] : memref<600x512xf32, #tpu.memory_space<vmem>>, vector<8x512xf32>
    %221 = arith.mulf %220, %219 : vector<8x512xf32>
    %c128_i32 = arith.constant 128 : i32
    %222 = vector.broadcast %c128_i32 : i32 to vector<8x512xi32>
    %223 = arith.addi %12, %222 : vector<8x512xi32>
    %c600_i32_54 = arith.constant 600 : i32
    %224 = vector.broadcast %c600_i32_54 : i32 to vector<8x512xi32>
    %225 = arith.cmpi slt, %223, %224 : vector<8x512xi32>
    %226 = arith.andi %8, %225 : vector<8x512xi1>
    %cst_55 = arith.constant 0.000000e+00 : f32
    %227 = vector.broadcast %cst_55 : f32 to vector<8x512xf32>
    %228 = arith.select %226, %221, %227 : vector<8x512xi1>, vector<8x512xf32>
    %229 = math.absf %219 : vector<8x512xf32>
    %230 = arith.addf %217, %228 : vector<8x512xf32>
    %231 = arith.addf %218, %229 : vector<8x512xf32>
    %232 = vector.extract_strided_slice %2 {offsets = [136, 0], sizes = [8, 512], strides = [1, 1]} : vector<600x512xf32> to vector<8x512xf32>
    %c136 = arith.constant 136 : index
    %c0_56 = arith.constant 0 : index
    %233 = vector.load %arg4[%c136, %c0_56] : memref<600x512xf32, #tpu.memory_space<vmem>>, vector<8x512xf32>
    %234 = arith.mulf %233, %232 : vector<8x512xf32>
    %c136_i32 = arith.constant 136 : i32
    %235 = vector.broadcast %c136_i32 : i32 to vector<8x512xi32>
    %236 = arith.addi %12, %235 : vector<8x512xi32>
    %c600_i32_57 = arith.constant 600 : i32
    %237 = vector.broadcast %c600_i32_57 : i32 to vector<8x512xi32>
    %238 = arith.cmpi slt, %236, %237 : vector<8x512xi32>
    %239 = arith.andi %8, %238 : vector<8x512xi1>
    %cst_58 = arith.constant 0.000000e+00 : f32
    %240 = vector.broadcast %cst_58 : f32 to vector<8x512xf32>
    %241 = arith.select %239, %234, %240 : vector<8x512xi1>, vector<8x512xf32>
    %242 = math.absf %232 : vector<8x512xf32>
    %243 = arith.addf %230, %241 : vector<8x512xf32>
    %244 = arith.addf %231, %242 : vector<8x512xf32>
    %245 = vector.extract_strided_slice %2 {offsets = [144, 0], sizes = [8, 512], strides = [1, 1]} : vector<600x512xf32> to vector<8x512xf32>
    %c144 = arith.constant 144 : index
    %c0_59 = arith.constant 0 : index
    %246 = vector.load %arg4[%c144, %c0_59] : memref<600x512xf32, #tpu.memory_space<vmem>>, vector<8x512xf32>
    %247 = arith.mulf %246, %245 : vector<8x512xf32>
    %c144_i32 = arith.constant 144 : i32
    %248 = vector.broadcast %c144_i32 : i32 to vector<8x512xi32>
    %249 = arith.addi %12, %248 : vector<8x512xi32>
    %c600_i32_60 = arith.constant 600 : i32
    %250 = vector.broadcast %c600_i32_60 : i32 to vector<8x512xi32>
    %251 = arith.cmpi slt, %249, %250 : vector<8x512xi32>
    %252 = arith.andi %8, %251 : vector<8x512xi1>
    %cst_61 = arith.constant 0.000000e+00 : f32
    %253 = vector.broadcast %cst_61 : f32 to vector<8x512xf32>
    %254 = arith.select %252, %247, %253 : vector<8x512xi1>, vector<8x512xf32>
    %255 = math.absf %245 : vector<8x512xf32>
    %256 = arith.addf %243, %254 : vector<8x512xf32>
    %257 = arith.addf %244, %255 : vector<8x512xf32>
    %258 = vector.extract_strided_slice %2 {offsets = [152, 0], sizes = [8, 512], strides = [1, 1]} : vector<600x512xf32> to vector<8x512xf32>
    %c152 = arith.constant 152 : index
    %c0_62 = arith.constant 0 : index
    %259 = vector.load %arg4[%c152, %c0_62] : memref<600x512xf32, #tpu.memory_space<vmem>>, vector<8x512xf32>
    %260 = arith.mulf %259, %258 : vector<8x512xf32>
    %c152_i32 = arith.constant 152 : i32
    %261 = vector.broadcast %c152_i32 : i32 to vector<8x512xi32>
    %262 = arith.addi %12, %261 : vector<8x512xi32>
    %c600_i32_63 = arith.constant 600 : i32
    %263 = vector.broadcast %c600_i32_63 : i32 to vector<8x512xi32>
    %264 = arith.cmpi slt, %262, %263 : vector<8x512xi32>
    %265 = arith.andi %8, %264 : vector<8x512xi1>
    %cst_64 = arith.constant 0.000000e+00 : f32
    %266 = vector.broadcast %cst_64 : f32 to vector<8x512xf32>
    %267 = arith.select %265, %260, %266 : vector<8x512xi1>, vector<8x512xf32>
    %268 = math.absf %258 : vector<8x512xf32>
    %269 = arith.addf %256, %267 : vector<8x512xf32>
    %270 = arith.addf %257, %268 : vector<8x512xf32>
    %271 = vector.extract_strided_slice %2 {offsets = [160, 0], sizes = [8, 512], strides = [1, 1]} : vector<600x512xf32> to vector<8x512xf32>
    %c160 = arith.constant 160 : index
    %c0_65 = arith.constant 0 : index
    %272 = vector.load %arg4[%c160, %c0_65] : memref<600x512xf32, #tpu.memory_space<vmem>>, vector<8x512xf32>
    %273 = arith.mulf %272, %271 : vector<8x512xf32>
    %c160_i32 = arith.constant 160 : i32
    %274 = vector.broadcast %c160_i32 : i32 to vector<8x512xi32>
    %275 = arith.addi %12, %274 : vector<8x512xi32>
    %c600_i32_66 = arith.constant 600 : i32
    %276 = vector.broadcast %c600_i32_66 : i32 to vector<8x512xi32>
    %277 = arith.cmpi slt, %275, %276 : vector<8x512xi32>
    %278 = arith.andi %8, %277 : vector<8x512xi1>
    %cst_67 = arith.constant 0.000000e+00 : f32
    %279 = vector.broadcast %cst_67 : f32 to vector<8x512xf32>
    %280 = arith.select %278, %273, %279 : vector<8x512xi1>, vector<8x512xf32>
    %281 = math.absf %271 : vector<8x512xf32>
    %282 = arith.addf %269, %280 : vector<8x512xf32>
    %283 = arith.addf %270, %281 : vector<8x512xf32>
    %284 = vector.extract_strided_slice %2 {offsets = [168, 0], sizes = [8, 512], strides = [1, 1]} : vector<600x512xf32> to vector<8x512xf32>
    %c168 = arith.constant 168 : index
    %c0_68 = arith.constant 0 : index
    %285 = vector.load %arg4[%c168, %c0_68] : memref<600x512xf32, #tpu.memory_space<vmem>>, vector<8x512xf32>
    %286 = arith.mulf %285, %284 : vector<8x512xf32>
    %c168_i32 = arith.constant 168 : i32
    %287 = vector.broadcast %c168_i32 : i32 to vector<8x512xi32>
    %288 = arith.addi %12, %287 : vector<8x512xi32>
    %c600_i32_69 = arith.constant 600 : i32
    %289 = vector.broadcast %c600_i32_69 : i32 to vector<8x512xi32>
    %290 = arith.cmpi slt, %288, %289 : vector<8x512xi32>
    %291 = arith.andi %8, %290 : vector<8x512xi1>
    %cst_70 = arith.constant 0.000000e+00 : f32
    %292 = vector.broadcast %cst_70 : f32 to vector<8x512xf32>
    %293 = arith.select %291, %286, %292 : vector<8x512xi1>, vector<8x512xf32>
    %294 = math.absf %284 : vector<8x512xf32>
    %295 = arith.addf %282, %293 : vector<8x512xf32>
    %296 = arith.addf %283, %294 : vector<8x512xf32>
    %297 = vector.extract_strided_slice %2 {offsets = [176, 0], sizes = [8, 512], strides = [1, 1]} : vector<600x512xf32> to vector<8x512xf32>
    %c176 = arith.constant 176 : index
    %c0_71 = arith.constant 0 : index
    %298 = vector.load %arg4[%c176, %c0_71] : memref<600x512xf32, #tpu.memory_space<vmem>>, vector<8x512xf32>
    %299 = arith.mulf %298, %297 : vector<8x512xf32>
    %c176_i32 = arith.constant 176 : i32
    %300 = vector.broadcast %c176_i32 : i32 to vector<8x512xi32>
    %301 = arith.addi %12, %300 : vector<8x512xi32>
    %c600_i32_72 = arith.constant 600 : i32
    %302 = vector.broadcast %c600_i32_72 : i32 to vector<8x512xi32>
    %303 = arith.cmpi slt, %301, %302 : vector<8x512xi32>
    %304 = arith.andi %8, %303 : vector<8x512xi1>
    %cst_73 = arith.constant 0.000000e+00 : f32
    %305 = vector.broadcast %cst_73 : f32 to vector<8x512xf32>
    %306 = arith.select %304, %299, %305 : vector<8x512xi1>, vector<8x512xf32>
    %307 = math.absf %297 : vector<8x512xf32>
    %308 = arith.addf %295, %306 : vector<8x512xf32>
    %309 = arith.addf %296, %307 : vector<8x512xf32>
    %310 = vector.extract_strided_slice %2 {offsets = [184, 0], sizes = [8, 512], strides = [1, 1]} : vector<600x512xf32> to vector<8x512xf32>
    %c184 = arith.constant 184 : index
    %c0_74 = arith.constant 0 : index
    %311 = vector.load %arg4[%c184, %c0_74] : memref<600x512xf32, #tpu.memory_space<vmem>>, vector<8x512xf32>
    %312 = arith.mulf %311, %310 : vector<8x512xf32>
    %c184_i32 = arith.constant 184 : i32
    %313 = vector.broadcast %c184_i32 : i32 to vector<8x512xi32>
    %314 = arith.addi %12, %313 : vector<8x512xi32>
    %c600_i32_75 = arith.constant 600 : i32
    %315 = vector.broadcast %c600_i32_75 : i32 to vector<8x512xi32>
    %316 = arith.cmpi slt, %314, %315 : vector<8x512xi32>
    %317 = arith.andi %8, %316 : vector<8x512xi1>
    %cst_76 = arith.constant 0.000000e+00 : f32
    %318 = vector.broadcast %cst_76 : f32 to vector<8x512xf32>
    %319 = arith.select %317, %312, %318 : vector<8x512xi1>, vector<8x512xf32>
    %320 = math.absf %310 : vector<8x512xf32>
    %321 = arith.addf %308, %319 : vector<8x512xf32>
    %322 = arith.addf %309, %320 : vector<8x512xf32>
    %323 = vector.extract_strided_slice %2 {offsets = [192, 0], sizes = [8, 512], strides = [1, 1]} : vector<600x512xf32> to vector<8x512xf32>
    %c192 = arith.constant 192 : index
    %c0_77 = arith.constant 0 : index
    %324 = vector.load %arg4[%c192, %c0_77] : memref<600x512xf32, #tpu.memory_space<vmem>>, vector<8x512xf32>
    %325 = arith.mulf %324, %323 : vector<8x512xf32>
    %c192_i32 = arith.constant 192 : i32
    %326 = vector.broadcast %c192_i32 : i32 to vector<8x512xi32>
    %327 = arith.addi %12, %326 : vector<8x512xi32>
    %c600_i32_78 = arith.constant 600 : i32
    %328 = vector.broadcast %c600_i32_78 : i32 to vector<8x512xi32>
    %329 = arith.cmpi slt, %327, %328 : vector<8x512xi32>
    %330 = arith.andi %8, %329 : vector<8x512xi1>
    %cst_79 = arith.constant 0.000000e+00 : f32
    %331 = vector.broadcast %cst_79 : f32 to vector<8x512xf32>
    %332 = arith.select %330, %325, %331 : vector<8x512xi1>, vector<8x512xf32>
    %333 = math.absf %323 : vector<8x512xf32>
    %334 = arith.addf %321, %332 : vector<8x512xf32>
    %335 = arith.addf %322, %333 : vector<8x512xf32>
    %336 = vector.extract_strided_slice %2 {offsets = [200, 0], sizes = [8, 512], strides = [1, 1]} : vector<600x512xf32> to vector<8x512xf32>
    %c200 = arith.constant 200 : index
    %c0_80 = arith.constant 0 : index
    %337 = vector.load %arg4[%c200, %c0_80] : memref<600x512xf32, #tpu.memory_space<vmem>>, vector<8x512xf32>
    %338 = arith.mulf %337, %336 : vector<8x512xf32>
    %c200_i32 = arith.constant 200 : i32
    %339 = vector.broadcast %c200_i32 : i32 to vector<8x512xi32>
    %340 = arith.addi %12, %339 : vector<8x512xi32>
    %c600_i32_81 = arith.constant 600 : i32
    %341 = vector.broadcast %c600_i32_81 : i32 to vector<8x512xi32>
    %342 = arith.cmpi slt, %340, %341 : vector<8x512xi32>
    %343 = arith.andi %8, %342 : vector<8x512xi1>
    %cst_82 = arith.constant 0.000000e+00 : f32
    %344 = vector.broadcast %cst_82 : f32 to vector<8x512xf32>
    %345 = arith.select %343, %338, %344 : vector<8x512xi1>, vector<8x512xf32>
    %346 = math.absf %336 : vector<8x512xf32>
    %347 = arith.addf %334, %345 : vector<8x512xf32>
    %348 = arith.addf %335, %346 : vector<8x512xf32>
    %349 = vector.extract_strided_slice %2 {offsets = [208, 0], sizes = [8, 512], strides = [1, 1]} : vector<600x512xf32> to vector<8x512xf32>
    %c208 = arith.constant 208 : index
    %c0_83 = arith.constant 0 : index
    %350 = vector.load %arg4[%c208, %c0_83] : memref<600x512xf32, #tpu.memory_space<vmem>>, vector<8x512xf32>
    %351 = arith.mulf %350, %349 : vector<8x512xf32>
    %c208_i32 = arith.constant 208 : i32
    %352 = vector.broadcast %c208_i32 : i32 to vector<8x512xi32>
    %353 = arith.addi %12, %352 : vector<8x512xi32>
    %c600_i32_84 = arith.constant 600 : i32
    %354 = vector.broadcast %c600_i32_84 : i32 to vector<8x512xi32>
    %355 = arith.cmpi slt, %353, %354 : vector<8x512xi32>
    %356 = arith.andi %8, %355 : vector<8x512xi1>
    %cst_85 = arith.constant 0.000000e+00 : f32
    %357 = vector.broadcast %cst_85 : f32 to vector<8x512xf32>
    %358 = arith.select %356, %351, %357 : vector<8x512xi1>, vector<8x512xf32>
    %359 = math.absf %349 : vector<8x512xf32>
    %360 = arith.addf %347, %358 : vector<8x512xf32>
    %361 = arith.addf %348, %359 : vector<8x512xf32>
    %362 = vector.extract_strided_slice %2 {offsets = [216, 0], sizes = [8, 512], strides = [1, 1]} : vector<600x512xf32> to vector<8x512xf32>
    %c216 = arith.constant 216 : index
    %c0_86 = arith.constant 0 : index
    %363 = vector.load %arg4[%c216, %c0_86] : memref<600x512xf32, #tpu.memory_space<vmem>>, vector<8x512xf32>
    %364 = arith.mulf %363, %362 : vector<8x512xf32>
    %c216_i32 = arith.constant 216 : i32
    %365 = vector.broadcast %c216_i32 : i32 to vector<8x512xi32>
    %366 = arith.addi %12, %365 : vector<8x512xi32>
    %c600_i32_87 = arith.constant 600 : i32
    %367 = vector.broadcast %c600_i32_87 : i32 to vector<8x512xi32>
    %368 = arith.cmpi slt, %366, %367 : vector<8x512xi32>
    %369 = arith.andi %8, %368 : vector<8x512xi1>
    %cst_88 = arith.constant 0.000000e+00 : f32
    %370 = vector.broadcast %cst_88 : f32 to vector<8x512xf32>
    %371 = arith.select %369, %364, %370 : vector<8x512xi1>, vector<8x512xf32>
    %372 = math.absf %362 : vector<8x512xf32>
    %373 = arith.addf %360, %371 : vector<8x512xf32>
    %374 = arith.addf %361, %372 : vector<8x512xf32>
    %375 = vector.extract_strided_slice %2 {offsets = [224, 0], sizes = [8, 512], strides = [1, 1]} : vector<600x512xf32> to vector<8x512xf32>
    %c224 = arith.constant 224 : index
    %c0_89 = arith.constant 0 : index
    %376 = vector.load %arg4[%c224, %c0_89] : memref<600x512xf32, #tpu.memory_space<vmem>>, vector<8x512xf32>
    %377 = arith.mulf %376, %375 : vector<8x512xf32>
    %c224_i32 = arith.constant 224 : i32
    %378 = vector.broadcast %c224_i32 : i32 to vector<8x512xi32>
    %379 = arith.addi %12, %378 : vector<8x512xi32>
    %c600_i32_90 = arith.constant 600 : i32
    %380 = vector.broadcast %c600_i32_90 : i32 to vector<8x512xi32>
    %381 = arith.cmpi slt, %379, %380 : vector<8x512xi32>
    %382 = arith.andi %8, %381 : vector<8x512xi1>
    %cst_91 = arith.constant 0.000000e+00 : f32
    %383 = vector.broadcast %cst_91 : f32 to vector<8x512xf32>
    %384 = arith.select %382, %377, %383 : vector<8x512xi1>, vector<8x512xf32>
    %385 = math.absf %375 : vector<8x512xf32>
    %386 = arith.addf %373, %384 : vector<8x512xf32>
    %387 = arith.addf %374, %385 : vector<8x512xf32>
    %388 = vector.extract_strided_slice %2 {offsets = [232, 0], sizes = [8, 512], strides = [1, 1]} : vector<600x512xf32> to vector<8x512xf32>
    %c232 = arith.constant 232 : index
    %c0_92 = arith.constant 0 : index
    %389 = vector.load %arg4[%c232, %c0_92] : memref<600x512xf32, #tpu.memory_space<vmem>>, vector<8x512xf32>
    %390 = arith.mulf %389, %388 : vector<8x512xf32>
    %c232_i32 = arith.constant 232 : i32
    %391 = vector.broadcast %c232_i32 : i32 to vector<8x512xi32>
    %392 = arith.addi %12, %391 : vector<8x512xi32>
    %c600_i32_93 = arith.constant 600 : i32
    %393 = vector.broadcast %c600_i32_93 : i32 to vector<8x512xi32>
    %394 = arith.cmpi slt, %392, %393 : vector<8x512xi32>
    %395 = arith.andi %8, %394 : vector<8x512xi1>
    %cst_94 = arith.constant 0.000000e+00 : f32
    %396 = vector.broadcast %cst_94 : f32 to vector<8x512xf32>
    %397 = arith.select %395, %390, %396 : vector<8x512xi1>, vector<8x512xf32>
    %398 = math.absf %388 : vector<8x512xf32>
    %399 = arith.addf %386, %397 : vector<8x512xf32>
    %400 = arith.addf %387, %398 : vector<8x512xf32>
    %401 = vector.extract_strided_slice %2 {offsets = [240, 0], sizes = [8, 512], strides = [1, 1]} : vector<600x512xf32> to vector<8x512xf32>
    %c240 = arith.constant 240 : index
    %c0_95 = arith.constant 0 : index
    %402 = vector.load %arg4[%c240, %c0_95] : memref<600x512xf32, #tpu.memory_space<vmem>>, vector<8x512xf32>
    %403 = arith.mulf %402, %401 : vector<8x512xf32>
    %c240_i32 = arith.constant 240 : i32
    %404 = vector.broadcast %c240_i32 : i32 to vector<8x512xi32>
    %405 = arith.addi %12, %404 : vector<8x512xi32>
    %c600_i32_96 = arith.constant 600 : i32
    %406 = vector.broadcast %c600_i32_96 : i32 to vector<8x512xi32>
    %407 = arith.cmpi slt, %405, %406 : vector<8x512xi32>
    %408 = arith.andi %8, %407 : vector<8x512xi1>
    %cst_97 = arith.constant 0.000000e+00 : f32
    %409 = vector.broadcast %cst_97 : f32 to vector<8x512xf32>
    %410 = arith.select %408, %403, %409 : vector<8x512xi1>, vector<8x512xf32>
    %411 = math.absf %401 : vector<8x512xf32>
    %412 = arith.addf %399, %410 : vector<8x512xf32>
    %413 = arith.addf %400, %411 : vector<8x512xf32>
    %414 = vector.extract_strided_slice %2 {offsets = [248, 0], sizes = [8, 512], strides = [1, 1]} : vector<600x512xf32> to vector<8x512xf32>
    %c248 = arith.constant 248 : index
    %c0_98 = arith.constant 0 : index
    %415 = vector.load %arg4[%c248, %c0_98] : memref<600x512xf32, #tpu.memory_space<vmem>>, vector<8x512xf32>
    %416 = arith.mulf %415, %414 : vector<8x512xf32>
    %c248_i32 = arith.constant 248 : i32
    %417 = vector.broadcast %c248_i32 : i32 to vector<8x512xi32>
    %418 = arith.addi %12, %417 : vector<8x512xi32>
    %c600_i32_99 = arith.constant 600 : i32
    %419 = vector.broadcast %c600_i32_99 : i32 to vector<8x512xi32>
    %420 = arith.cmpi slt, %418, %419 : vector<8x512xi32>
    %421 = arith.andi %8, %420 : vector<8x512xi1>
    %cst_100 = arith.constant 0.000000e+00 : f32
    %422 = vector.broadcast %cst_100 : f32 to vector<8x512xf32>
    %423 = arith.select %421, %416, %422 : vector<8x512xi1>, vector<8x512xf32>
    %424 = math.absf %414 : vector<8x512xf32>
    %425 = arith.addf %412, %423 : vector<8x512xf32>
    %426 = arith.addf %413, %424 : vector<8x512xf32>
    %427 = vector.extract_strided_slice %2 {offsets = [256, 0], sizes = [8, 512], strides = [1, 1]} : vector<600x512xf32> to vector<8x512xf32>
    %c256 = arith.constant 256 : index
    %c0_101 = arith.constant 0 : index
    %428 = vector.load %arg4[%c256, %c0_101] : memref<600x512xf32, #tpu.memory_space<vmem>>, vector<8x512xf32>
    %429 = arith.mulf %428, %427 : vector<8x512xf32>
    %c256_i32 = arith.constant 256 : i32
    %430 = vector.broadcast %c256_i32 : i32 to vector<8x512xi32>
    %431 = arith.addi %12, %430 : vector<8x512xi32>
    %c600_i32_102 = arith.constant 600 : i32
    %432 = vector.broadcast %c600_i32_102 : i32 to vector<8x512xi32>
    %433 = arith.cmpi slt, %431, %432 : vector<8x512xi32>
    %434 = arith.andi %8, %433 : vector<8x512xi1>
    %cst_103 = arith.constant 0.000000e+00 : f32
    %435 = vector.broadcast %cst_103 : f32 to vector<8x512xf32>
    %436 = arith.select %434, %429, %435 : vector<8x512xi1>, vector<8x512xf32>
    %437 = math.absf %427 : vector<8x512xf32>
    %438 = arith.addf %425, %436 : vector<8x512xf32>
    %439 = arith.addf %426, %437 : vector<8x512xf32>
    %440 = vector.extract_strided_slice %2 {offsets = [264, 0], sizes = [8, 512], strides = [1, 1]} : vector<600x512xf32> to vector<8x512xf32>
    %c264 = arith.constant 264 : index
    %c0_104 = arith.constant 0 : index
    %441 = vector.load %arg4[%c264, %c0_104] : memref<600x512xf32, #tpu.memory_space<vmem>>, vector<8x512xf32>
    %442 = arith.mulf %441, %440 : vector<8x512xf32>
    %c264_i32 = arith.constant 264 : i32
    %443 = vector.broadcast %c264_i32 : i32 to vector<8x512xi32>
    %444 = arith.addi %12, %443 : vector<8x512xi32>
    %c600_i32_105 = arith.constant 600 : i32
    %445 = vector.broadcast %c600_i32_105 : i32 to vector<8x512xi32>
    %446 = arith.cmpi slt, %444, %445 : vector<8x512xi32>
    %447 = arith.andi %8, %446 : vector<8x512xi1>
    %cst_106 = arith.constant 0.000000e+00 : f32
    %448 = vector.broadcast %cst_106 : f32 to vector<8x512xf32>
    %449 = arith.select %447, %442, %448 : vector<8x512xi1>, vector<8x512xf32>
    %450 = math.absf %440 : vector<8x512xf32>
    %451 = arith.addf %438, %449 : vector<8x512xf32>
    %452 = arith.addf %439, %450 : vector<8x512xf32>
    %453 = vector.extract_strided_slice %2 {offsets = [272, 0], sizes = [8, 512], strides = [1, 1]} : vector<600x512xf32> to vector<8x512xf32>
    %c272 = arith.constant 272 : index
    %c0_107 = arith.constant 0 : index
    %454 = vector.load %arg4[%c272, %c0_107] : memref<600x512xf32, #tpu.memory_space<vmem>>, vector<8x512xf32>
    %455 = arith.mulf %454, %453 : vector<8x512xf32>
    %c272_i32 = arith.constant 272 : i32
    %456 = vector.broadcast %c272_i32 : i32 to vector<8x512xi32>
    %457 = arith.addi %12, %456 : vector<8x512xi32>
    %c600_i32_108 = arith.constant 600 : i32
    %458 = vector.broadcast %c600_i32_108 : i32 to vector<8x512xi32>
    %459 = arith.cmpi slt, %457, %458 : vector<8x512xi32>
    %460 = arith.andi %8, %459 : vector<8x512xi1>
    %cst_109 = arith.constant 0.000000e+00 : f32
    %461 = vector.broadcast %cst_109 : f32 to vector<8x512xf32>
    %462 = arith.select %460, %455, %461 : vector<8x512xi1>, vector<8x512xf32>
    %463 = math.absf %453 : vector<8x512xf32>
    %464 = arith.addf %451, %462 : vector<8x512xf32>
    %465 = arith.addf %452, %463 : vector<8x512xf32>
    %466 = vector.extract_strided_slice %2 {offsets = [280, 0], sizes = [8, 512], strides = [1, 1]} : vector<600x512xf32> to vector<8x512xf32>
    %c280 = arith.constant 280 : index
    %c0_110 = arith.constant 0 : index
    %467 = vector.load %arg4[%c280, %c0_110] : memref<600x512xf32, #tpu.memory_space<vmem>>, vector<8x512xf32>
    %468 = arith.mulf %467, %466 : vector<8x512xf32>
    %c280_i32 = arith.constant 280 : i32
    %469 = vector.broadcast %c280_i32 : i32 to vector<8x512xi32>
    %470 = arith.addi %12, %469 : vector<8x512xi32>
    %c600_i32_111 = arith.constant 600 : i32
    %471 = vector.broadcast %c600_i32_111 : i32 to vector<8x512xi32>
    %472 = arith.cmpi slt, %470, %471 : vector<8x512xi32>
    %473 = arith.andi %8, %472 : vector<8x512xi1>
    %cst_112 = arith.constant 0.000000e+00 : f32
    %474 = vector.broadcast %cst_112 : f32 to vector<8x512xf32>
    %475 = arith.select %473, %468, %474 : vector<8x512xi1>, vector<8x512xf32>
    %476 = math.absf %466 : vector<8x512xf32>
    %477 = arith.addf %464, %475 : vector<8x512xf32>
    %478 = arith.addf %465, %476 : vector<8x512xf32>
    %479 = vector.extract_strided_slice %2 {offsets = [288, 0], sizes = [8, 512], strides = [1, 1]} : vector<600x512xf32> to vector<8x512xf32>
    %c288 = arith.constant 288 : index
    %c0_113 = arith.constant 0 : index
    %480 = vector.load %arg4[%c288, %c0_113] : memref<600x512xf32, #tpu.memory_space<vmem>>, vector<8x512xf32>
    %481 = arith.mulf %480, %479 : vector<8x512xf32>
    %c288_i32 = arith.constant 288 : i32
    %482 = vector.broadcast %c288_i32 : i32 to vector<8x512xi32>
    %483 = arith.addi %12, %482 : vector<8x512xi32>
    %c600_i32_114 = arith.constant 600 : i32
    %484 = vector.broadcast %c600_i32_114 : i32 to vector<8x512xi32>
    %485 = arith.cmpi slt, %483, %484 : vector<8x512xi32>
    %486 = arith.andi %8, %485 : vector<8x512xi1>
    %cst_115 = arith.constant 0.000000e+00 : f32
    %487 = vector.broadcast %cst_115 : f32 to vector<8x512xf32>
    %488 = arith.select %486, %481, %487 : vector<8x512xi1>, vector<8x512xf32>
    %489 = math.absf %479 : vector<8x512xf32>
    %490 = arith.addf %477, %488 : vector<8x512xf32>
    %491 = arith.addf %478, %489 : vector<8x512xf32>
    %492 = vector.extract_strided_slice %2 {offsets = [296, 0], sizes = [8, 512], strides = [1, 1]} : vector<600x512xf32> to vector<8x512xf32>
    %c296 = arith.constant 296 : index
    %c0_116 = arith.constant 0 : index
    %493 = vector.load %arg4[%c296, %c0_116] : memref<600x512xf32, #tpu.memory_space<vmem>>, vector<8x512xf32>
    %494 = arith.mulf %493, %492 : vector<8x512xf32>
    %c296_i32 = arith.constant 296 : i32
    %495 = vector.broadcast %c296_i32 : i32 to vector<8x512xi32>
    %496 = arith.addi %12, %495 : vector<8x512xi32>
    %c600_i32_117 = arith.constant 600 : i32
    %497 = vector.broadcast %c600_i32_117 : i32 to vector<8x512xi32>
    %498 = arith.cmpi slt, %496, %497 : vector<8x512xi32>
    %499 = arith.andi %8, %498 : vector<8x512xi1>
    %cst_118 = arith.constant 0.000000e+00 : f32
    %500 = vector.broadcast %cst_118 : f32 to vector<8x512xf32>
    %501 = arith.select %499, %494, %500 : vector<8x512xi1>, vector<8x512xf32>
    %502 = math.absf %492 : vector<8x512xf32>
    %503 = arith.addf %490, %501 : vector<8x512xf32>
    %504 = arith.addf %491, %502 : vector<8x512xf32>
    %505 = vector.extract_strided_slice %2 {offsets = [304, 0], sizes = [8, 512], strides = [1, 1]} : vector<600x512xf32> to vector<8x512xf32>
    %c304 = arith.constant 304 : index
    %c0_119 = arith.constant 0 : index
    %506 = vector.load %arg4[%c304, %c0_119] : memref<600x512xf32, #tpu.memory_space<vmem>>, vector<8x512xf32>
    %507 = arith.mulf %506, %505 : vector<8x512xf32>
    %c304_i32 = arith.constant 304 : i32
    %508 = vector.broadcast %c304_i32 : i32 to vector<8x512xi32>
    %509 = arith.addi %12, %508 : vector<8x512xi32>
    %c600_i32_120 = arith.constant 600 : i32
    %510 = vector.broadcast %c600_i32_120 : i32 to vector<8x512xi32>
    %511 = arith.cmpi slt, %509, %510 : vector<8x512xi32>
    %512 = arith.andi %8, %511 : vector<8x512xi1>
    %cst_121 = arith.constant 0.000000e+00 : f32
    %513 = vector.broadcast %cst_121 : f32 to vector<8x512xf32>
    %514 = arith.select %512, %507, %513 : vector<8x512xi1>, vector<8x512xf32>
    %515 = math.absf %505 : vector<8x512xf32>
    %516 = arith.addf %503, %514 : vector<8x512xf32>
    %517 = arith.addf %504, %515 : vector<8x512xf32>
    %518 = vector.extract_strided_slice %2 {offsets = [312, 0], sizes = [8, 512], strides = [1, 1]} : vector<600x512xf32> to vector<8x512xf32>
    %c312 = arith.constant 312 : index
    %c0_122 = arith.constant 0 : index
    %519 = vector.load %arg4[%c312, %c0_122] : memref<600x512xf32, #tpu.memory_space<vmem>>, vector<8x512xf32>
    %520 = arith.mulf %519, %518 : vector<8x512xf32>
    %c312_i32 = arith.constant 312 : i32
    %521 = vector.broadcast %c312_i32 : i32 to vector<8x512xi32>
    %522 = arith.addi %12, %521 : vector<8x512xi32>
    %c600_i32_123 = arith.constant 600 : i32
    %523 = vector.broadcast %c600_i32_123 : i32 to vector<8x512xi32>
    %524 = arith.cmpi slt, %522, %523 : vector<8x512xi32>
    %525 = arith.andi %8, %524 : vector<8x512xi1>
    %cst_124 = arith.constant 0.000000e+00 : f32
    %526 = vector.broadcast %cst_124 : f32 to vector<8x512xf32>
    %527 = arith.select %525, %520, %526 : vector<8x512xi1>, vector<8x512xf32>
    %528 = math.absf %518 : vector<8x512xf32>
    %529 = arith.addf %516, %527 : vector<8x512xf32>
    %530 = arith.addf %517, %528 : vector<8x512xf32>
    %531 = vector.extract_strided_slice %2 {offsets = [320, 0], sizes = [8, 512], strides = [1, 1]} : vector<600x512xf32> to vector<8x512xf32>
    %c320 = arith.constant 320 : index
    %c0_125 = arith.constant 0 : index
    %532 = vector.load %arg4[%c320, %c0_125] : memref<600x512xf32, #tpu.memory_space<vmem>>, vector<8x512xf32>
    %533 = arith.mulf %532, %531 : vector<8x512xf32>
    %c320_i32 = arith.constant 320 : i32
    %534 = vector.broadcast %c320_i32 : i32 to vector<8x512xi32>
    %535 = arith.addi %12, %534 : vector<8x512xi32>
    %c600_i32_126 = arith.constant 600 : i32
    %536 = vector.broadcast %c600_i32_126 : i32 to vector<8x512xi32>
    %537 = arith.cmpi slt, %535, %536 : vector<8x512xi32>
    %538 = arith.andi %8, %537 : vector<8x512xi1>
    %cst_127 = arith.constant 0.000000e+00 : f32
    %539 = vector.broadcast %cst_127 : f32 to vector<8x512xf32>
    %540 = arith.select %538, %533, %539 : vector<8x512xi1>, vector<8x512xf32>
    %541 = math.absf %531 : vector<8x512xf32>
    %542 = arith.addf %529, %540 : vector<8x512xf32>
    %543 = arith.addf %530, %541 : vector<8x512xf32>
    %544 = vector.extract_strided_slice %2 {offsets = [328, 0], sizes = [8, 512], strides = [1, 1]} : vector<600x512xf32> to vector<8x512xf32>
    %c328 = arith.constant 328 : index
    %c0_128 = arith.constant 0 : index
    %545 = vector.load %arg4[%c328, %c0_128] : memref<600x512xf32, #tpu.memory_space<vmem>>, vector<8x512xf32>
    %546 = arith.mulf %545, %544 : vector<8x512xf32>
    %c328_i32 = arith.constant 328 : i32
    %547 = vector.broadcast %c328_i32 : i32 to vector<8x512xi32>
    %548 = arith.addi %12, %547 : vector<8x512xi32>
    %c600_i32_129 = arith.constant 600 : i32
    %549 = vector.broadcast %c600_i32_129 : i32 to vector<8x512xi32>
    %550 = arith.cmpi slt, %548, %549 : vector<8x512xi32>
    %551 = arith.andi %8, %550 : vector<8x512xi1>
    %cst_130 = arith.constant 0.000000e+00 : f32
    %552 = vector.broadcast %cst_130 : f32 to vector<8x512xf32>
    %553 = arith.select %551, %546, %552 : vector<8x512xi1>, vector<8x512xf32>
    %554 = math.absf %544 : vector<8x512xf32>
    %555 = arith.addf %542, %553 : vector<8x512xf32>
    %556 = arith.addf %543, %554 : vector<8x512xf32>
    %557 = vector.extract_strided_slice %2 {offsets = [336, 0], sizes = [8, 512], strides = [1, 1]} : vector<600x512xf32> to vector<8x512xf32>
    %c336 = arith.constant 336 : index
    %c0_131 = arith.constant 0 : index
    %558 = vector.load %arg4[%c336, %c0_131] : memref<600x512xf32, #tpu.memory_space<vmem>>, vector<8x512xf32>
    %559 = arith.mulf %558, %557 : vector<8x512xf32>
    %c336_i32 = arith.constant 336 : i32
    %560 = vector.broadcast %c336_i32 : i32 to vector<8x512xi32>
    %561 = arith.addi %12, %560 : vector<8x512xi32>
    %c600_i32_132 = arith.constant 600 : i32
    %562 = vector.broadcast %c600_i32_132 : i32 to vector<8x512xi32>
    %563 = arith.cmpi slt, %561, %562 : vector<8x512xi32>
    %564 = arith.andi %8, %563 : vector<8x512xi1>
    %cst_133 = arith.constant 0.000000e+00 : f32
    %565 = vector.broadcast %cst_133 : f32 to vector<8x512xf32>
    %566 = arith.select %564, %559, %565 : vector<8x512xi1>, vector<8x512xf32>
    %567 = math.absf %557 : vector<8x512xf32>
    %568 = arith.addf %555, %566 : vector<8x512xf32>
    %569 = arith.addf %556, %567 : vector<8x512xf32>
    %570 = vector.extract_strided_slice %2 {offsets = [344, 0], sizes = [8, 512], strides = [1, 1]} : vector<600x512xf32> to vector<8x512xf32>
    %c344 = arith.constant 344 : index
    %c0_134 = arith.constant 0 : index
    %571 = vector.load %arg4[%c344, %c0_134] : memref<600x512xf32, #tpu.memory_space<vmem>>, vector<8x512xf32>
    %572 = arith.mulf %571, %570 : vector<8x512xf32>
    %c344_i32 = arith.constant 344 : i32
    %573 = vector.broadcast %c344_i32 : i32 to vector<8x512xi32>
    %574 = arith.addi %12, %573 : vector<8x512xi32>
    %c600_i32_135 = arith.constant 600 : i32
    %575 = vector.broadcast %c600_i32_135 : i32 to vector<8x512xi32>
    %576 = arith.cmpi slt, %574, %575 : vector<8x512xi32>
    %577 = arith.andi %8, %576 : vector<8x512xi1>
    %cst_136 = arith.constant 0.000000e+00 : f32
    %578 = vector.broadcast %cst_136 : f32 to vector<8x512xf32>
    %579 = arith.select %577, %572, %578 : vector<8x512xi1>, vector<8x512xf32>
    %580 = math.absf %570 : vector<8x512xf32>
    %581 = arith.addf %568, %579 : vector<8x512xf32>
    %582 = arith.addf %569, %580 : vector<8x512xf32>
    %583 = vector.extract_strided_slice %2 {offsets = [352, 0], sizes = [8, 512], strides = [1, 1]} : vector<600x512xf32> to vector<8x512xf32>
    %c352 = arith.constant 352 : index
    %c0_137 = arith.constant 0 : index
    %584 = vector.load %arg4[%c352, %c0_137] : memref<600x512xf32, #tpu.memory_space<vmem>>, vector<8x512xf32>
    %585 = arith.mulf %584, %583 : vector<8x512xf32>
    %c352_i32 = arith.constant 352 : i32
    %586 = vector.broadcast %c352_i32 : i32 to vector<8x512xi32>
    %587 = arith.addi %12, %586 : vector<8x512xi32>
    %c600_i32_138 = arith.constant 600 : i32
    %588 = vector.broadcast %c600_i32_138 : i32 to vector<8x512xi32>
    %589 = arith.cmpi slt, %587, %588 : vector<8x512xi32>
    %590 = arith.andi %8, %589 : vector<8x512xi1>
    %cst_139 = arith.constant 0.000000e+00 : f32
    %591 = vector.broadcast %cst_139 : f32 to vector<8x512xf32>
    %592 = arith.select %590, %585, %591 : vector<8x512xi1>, vector<8x512xf32>
    %593 = math.absf %583 : vector<8x512xf32>
    %594 = arith.addf %581, %592 : vector<8x512xf32>
    %595 = arith.addf %582, %593 : vector<8x512xf32>
    %596 = vector.extract_strided_slice %2 {offsets = [360, 0], sizes = [8, 512], strides = [1, 1]} : vector<600x512xf32> to vector<8x512xf32>
    %c360 = arith.constant 360 : index
    %c0_140 = arith.constant 0 : index
    %597 = vector.load %arg4[%c360, %c0_140] : memref<600x512xf32, #tpu.memory_space<vmem>>, vector<8x512xf32>
    %598 = arith.mulf %597, %596 : vector<8x512xf32>
    %c360_i32 = arith.constant 360 : i32
    %599 = vector.broadcast %c360_i32 : i32 to vector<8x512xi32>
    %600 = arith.addi %12, %599 : vector<8x512xi32>
    %c600_i32_141 = arith.constant 600 : i32
    %601 = vector.broadcast %c600_i32_141 : i32 to vector<8x512xi32>
    %602 = arith.cmpi slt, %600, %601 : vector<8x512xi32>
    %603 = arith.andi %8, %602 : vector<8x512xi1>
    %cst_142 = arith.constant 0.000000e+00 : f32
    %604 = vector.broadcast %cst_142 : f32 to vector<8x512xf32>
    %605 = arith.select %603, %598, %604 : vector<8x512xi1>, vector<8x512xf32>
    %606 = math.absf %596 : vector<8x512xf32>
    %607 = arith.addf %594, %605 : vector<8x512xf32>
    %608 = arith.addf %595, %606 : vector<8x512xf32>
    %609 = vector.extract_strided_slice %2 {offsets = [368, 0], sizes = [8, 512], strides = [1, 1]} : vector<600x512xf32> to vector<8x512xf32>
    %c368 = arith.constant 368 : index
    %c0_143 = arith.constant 0 : index
    %610 = vector.load %arg4[%c368, %c0_143] : memref<600x512xf32, #tpu.memory_space<vmem>>, vector<8x512xf32>
    %611 = arith.mulf %610, %609 : vector<8x512xf32>
    %c368_i32 = arith.constant 368 : i32
    %612 = vector.broadcast %c368_i32 : i32 to vector<8x512xi32>
    %613 = arith.addi %12, %612 : vector<8x512xi32>
    %c600_i32_144 = arith.constant 600 : i32
    %614 = vector.broadcast %c600_i32_144 : i32 to vector<8x512xi32>
    %615 = arith.cmpi slt, %613, %614 : vector<8x512xi32>
    %616 = arith.andi %8, %615 : vector<8x512xi1>
    %cst_145 = arith.constant 0.000000e+00 : f32
    %617 = vector.broadcast %cst_145 : f32 to vector<8x512xf32>
    %618 = arith.select %616, %611, %617 : vector<8x512xi1>, vector<8x512xf32>
    %619 = math.absf %609 : vector<8x512xf32>
    %620 = arith.addf %607, %618 : vector<8x512xf32>
    %621 = arith.addf %608, %619 : vector<8x512xf32>
    %622 = vector.extract_strided_slice %2 {offsets = [376, 0], sizes = [8, 512], strides = [1, 1]} : vector<600x512xf32> to vector<8x512xf32>
    %c376 = arith.constant 376 : index
    %c0_146 = arith.constant 0 : index
    %623 = vector.load %arg4[%c376, %c0_146] : memref<600x512xf32, #tpu.memory_space<vmem>>, vector<8x512xf32>
    %624 = arith.mulf %623, %622 : vector<8x512xf32>
    %c376_i32 = arith.constant 376 : i32
    %625 = vector.broadcast %c376_i32 : i32 to vector<8x512xi32>
    %626 = arith.addi %12, %625 : vector<8x512xi32>
    %c600_i32_147 = arith.constant 600 : i32
    %627 = vector.broadcast %c600_i32_147 : i32 to vector<8x512xi32>
    %628 = arith.cmpi slt, %626, %627 : vector<8x512xi32>
    %629 = arith.andi %8, %628 : vector<8x512xi1>
    %cst_148 = arith.constant 0.000000e+00 : f32
    %630 = vector.broadcast %cst_148 : f32 to vector<8x512xf32>
    %631 = arith.select %629, %624, %630 : vector<8x512xi1>, vector<8x512xf32>
    %632 = math.absf %622 : vector<8x512xf32>
    %633 = arith.addf %620, %631 : vector<8x512xf32>
    %634 = arith.addf %621, %632 : vector<8x512xf32>
    %635 = vector.extract_strided_slice %2 {offsets = [384, 0], sizes = [8, 512], strides = [1, 1]} : vector<600x512xf32> to vector<8x512xf32>
    %c384 = arith.constant 384 : index
    %c0_149 = arith.constant 0 : index
    %636 = vector.load %arg4[%c384, %c0_149] : memref<600x512xf32, #tpu.memory_space<vmem>>, vector<8x512xf32>
    %637 = arith.mulf %636, %635 : vector<8x512xf32>
    %c384_i32 = arith.constant 384 : i32
    %638 = vector.broadcast %c384_i32 : i32 to vector<8x512xi32>
    %639 = arith.addi %12, %638 : vector<8x512xi32>
    %c600_i32_150 = arith.constant 600 : i32
    %640 = vector.broadcast %c600_i32_150 : i32 to vector<8x512xi32>
    %641 = arith.cmpi slt, %639, %640 : vector<8x512xi32>
    %642 = arith.andi %8, %641 : vector<8x512xi1>
    %cst_151 = arith.constant 0.000000e+00 : f32
    %643 = vector.broadcast %cst_151 : f32 to vector<8x512xf32>
    %644 = arith.select %642, %637, %643 : vector<8x512xi1>, vector<8x512xf32>
    %645 = math.absf %635 : vector<8x512xf32>
    %646 = arith.addf %633, %644 : vector<8x512xf32>
    %647 = arith.addf %634, %645 : vector<8x512xf32>
    %648 = vector.extract_strided_slice %2 {offsets = [392, 0], sizes = [8, 512], strides = [1, 1]} : vector<600x512xf32> to vector<8x512xf32>
    %c392 = arith.constant 392 : index
    %c0_152 = arith.constant 0 : index
    %649 = vector.load %arg4[%c392, %c0_152] : memref<600x512xf32, #tpu.memory_space<vmem>>, vector<8x512xf32>
    %650 = arith.mulf %649, %648 : vector<8x512xf32>
    %c392_i32 = arith.constant 392 : i32
    %651 = vector.broadcast %c392_i32 : i32 to vector<8x512xi32>
    %652 = arith.addi %12, %651 : vector<8x512xi32>
    %c600_i32_153 = arith.constant 600 : i32
    %653 = vector.broadcast %c600_i32_153 : i32 to vector<8x512xi32>
    %654 = arith.cmpi slt, %652, %653 : vector<8x512xi32>
    %655 = arith.andi %8, %654 : vector<8x512xi1>
    %cst_154 = arith.constant 0.000000e+00 : f32
    %656 = vector.broadcast %cst_154 : f32 to vector<8x512xf32>
    %657 = arith.select %655, %650, %656 : vector<8x512xi1>, vector<8x512xf32>
    %658 = math.absf %648 : vector<8x512xf32>
    %659 = arith.addf %646, %657 : vector<8x512xf32>
    %660 = arith.addf %647, %658 : vector<8x512xf32>
    %661 = vector.extract_strided_slice %2 {offsets = [400, 0], sizes = [8, 512], strides = [1, 1]} : vector<600x512xf32> to vector<8x512xf32>
    %c400 = arith.constant 400 : index
    %c0_155 = arith.constant 0 : index
    %662 = vector.load %arg4[%c400, %c0_155] : memref<600x512xf32, #tpu.memory_space<vmem>>, vector<8x512xf32>
    %663 = arith.mulf %662, %661 : vector<8x512xf32>
    %c400_i32 = arith.constant 400 : i32
    %664 = vector.broadcast %c400_i32 : i32 to vector<8x512xi32>
    %665 = arith.addi %12, %664 : vector<8x512xi32>
    %c600_i32_156 = arith.constant 600 : i32
    %666 = vector.broadcast %c600_i32_156 : i32 to vector<8x512xi32>
    %667 = arith.cmpi slt, %665, %666 : vector<8x512xi32>
    %668 = arith.andi %8, %667 : vector<8x512xi1>
    %cst_157 = arith.constant 0.000000e+00 : f32
    %669 = vector.broadcast %cst_157 : f32 to vector<8x512xf32>
    %670 = arith.select %668, %663, %669 : vector<8x512xi1>, vector<8x512xf32>
    %671 = math.absf %661 : vector<8x512xf32>
    %672 = arith.addf %659, %670 : vector<8x512xf32>
    %673 = arith.addf %660, %671 : vector<8x512xf32>
    %674 = vector.extract_strided_slice %2 {offsets = [408, 0], sizes = [8, 512], strides = [1, 1]} : vector<600x512xf32> to vector<8x512xf32>
    %c408 = arith.constant 408 : index
    %c0_158 = arith.constant 0 : index
    %675 = vector.load %arg4[%c408, %c0_158] : memref<600x512xf32, #tpu.memory_space<vmem>>, vector<8x512xf32>
    %676 = arith.mulf %675, %674 : vector<8x512xf32>
    %c408_i32 = arith.constant 408 : i32
    %677 = vector.broadcast %c408_i32 : i32 to vector<8x512xi32>
    %678 = arith.addi %12, %677 : vector<8x512xi32>
    %c600_i32_159 = arith.constant 600 : i32
    %679 = vector.broadcast %c600_i32_159 : i32 to vector<8x512xi32>
    %680 = arith.cmpi slt, %678, %679 : vector<8x512xi32>
    %681 = arith.andi %8, %680 : vector<8x512xi1>
    %cst_160 = arith.constant 0.000000e+00 : f32
    %682 = vector.broadcast %cst_160 : f32 to vector<8x512xf32>
    %683 = arith.select %681, %676, %682 : vector<8x512xi1>, vector<8x512xf32>
    %684 = math.absf %674 : vector<8x512xf32>
    %685 = arith.addf %672, %683 : vector<8x512xf32>
    %686 = arith.addf %673, %684 : vector<8x512xf32>
    %687 = vector.extract_strided_slice %2 {offsets = [416, 0], sizes = [8, 512], strides = [1, 1]} : vector<600x512xf32> to vector<8x512xf32>
    %c416 = arith.constant 416 : index
    %c0_161 = arith.constant 0 : index
    %688 = vector.load %arg4[%c416, %c0_161] : memref<600x512xf32, #tpu.memory_space<vmem>>, vector<8x512xf32>
    %689 = arith.mulf %688, %687 : vector<8x512xf32>
    %c416_i32 = arith.constant 416 : i32
    %690 = vector.broadcast %c416_i32 : i32 to vector<8x512xi32>
    %691 = arith.addi %12, %690 : vector<8x512xi32>
    %c600_i32_162 = arith.constant 600 : i32
    %692 = vector.broadcast %c600_i32_162 : i32 to vector<8x512xi32>
    %693 = arith.cmpi slt, %691, %692 : vector<8x512xi32>
    %694 = arith.andi %8, %693 : vector<8x512xi1>
    %cst_163 = arith.constant 0.000000e+00 : f32
    %695 = vector.broadcast %cst_163 : f32 to vector<8x512xf32>
    %696 = arith.select %694, %689, %695 : vector<8x512xi1>, vector<8x512xf32>
    %697 = math.absf %687 : vector<8x512xf32>
    %698 = arith.addf %685, %696 : vector<8x512xf32>
    %699 = arith.addf %686, %697 : vector<8x512xf32>
    %700 = vector.extract_strided_slice %2 {offsets = [424, 0], sizes = [8, 512], strides = [1, 1]} : vector<600x512xf32> to vector<8x512xf32>
    %c424 = arith.constant 424 : index
    %c0_164 = arith.constant 0 : index
    %701 = vector.load %arg4[%c424, %c0_164] : memref<600x512xf32, #tpu.memory_space<vmem>>, vector<8x512xf32>
    %702 = arith.mulf %701, %700 : vector<8x512xf32>
    %c424_i32 = arith.constant 424 : i32
    %703 = vector.broadcast %c424_i32 : i32 to vector<8x512xi32>
    %704 = arith.addi %12, %703 : vector<8x512xi32>
    %c600_i32_165 = arith.constant 600 : i32
    %705 = vector.broadcast %c600_i32_165 : i32 to vector<8x512xi32>
    %706 = arith.cmpi slt, %704, %705 : vector<8x512xi32>
    %707 = arith.andi %8, %706 : vector<8x512xi1>
    %cst_166 = arith.constant 0.000000e+00 : f32
    %708 = vector.broadcast %cst_166 : f32 to vector<8x512xf32>
    %709 = arith.select %707, %702, %708 : vector<8x512xi1>, vector<8x512xf32>
    %710 = math.absf %700 : vector<8x512xf32>
    %711 = arith.addf %698, %709 : vector<8x512xf32>
    %712 = arith.addf %699, %710 : vector<8x512xf32>
    %713 = vector.extract_strided_slice %2 {offsets = [432, 0], sizes = [8, 512], strides = [1, 1]} : vector<600x512xf32> to vector<8x512xf32>
    %c432 = arith.constant 432 : index
    %c0_167 = arith.constant 0 : index
    %714 = vector.load %arg4[%c432, %c0_167] : memref<600x512xf32, #tpu.memory_space<vmem>>, vector<8x512xf32>
    %715 = arith.mulf %714, %713 : vector<8x512xf32>
    %c432_i32 = arith.constant 432 : i32
    %716 = vector.broadcast %c432_i32 : i32 to vector<8x512xi32>
    %717 = arith.addi %12, %716 : vector<8x512xi32>
    %c600_i32_168 = arith.constant 600 : i32
    %718 = vector.broadcast %c600_i32_168 : i32 to vector<8x512xi32>
    %719 = arith.cmpi slt, %717, %718 : vector<8x512xi32>
    %720 = arith.andi %8, %719 : vector<8x512xi1>
    %cst_169 = arith.constant 0.000000e+00 : f32
    %721 = vector.broadcast %cst_169 : f32 to vector<8x512xf32>
    %722 = arith.select %720, %715, %721 : vector<8x512xi1>, vector<8x512xf32>
    %723 = math.absf %713 : vector<8x512xf32>
    %724 = arith.addf %711, %722 : vector<8x512xf32>
    %725 = arith.addf %712, %723 : vector<8x512xf32>
    %726 = vector.extract_strided_slice %2 {offsets = [440, 0], sizes = [8, 512], strides = [1, 1]} : vector<600x512xf32> to vector<8x512xf32>
    %c440 = arith.constant 440 : index
    %c0_170 = arith.constant 0 : index
    %727 = vector.load %arg4[%c440, %c0_170] : memref<600x512xf32, #tpu.memory_space<vmem>>, vector<8x512xf32>
    %728 = arith.mulf %727, %726 : vector<8x512xf32>
    %c440_i32 = arith.constant 440 : i32
    %729 = vector.broadcast %c440_i32 : i32 to vector<8x512xi32>
    %730 = arith.addi %12, %729 : vector<8x512xi32>
    %c600_i32_171 = arith.constant 600 : i32
    %731 = vector.broadcast %c600_i32_171 : i32 to vector<8x512xi32>
    %732 = arith.cmpi slt, %730, %731 : vector<8x512xi32>
    %733 = arith.andi %8, %732 : vector<8x512xi1>
    %cst_172 = arith.constant 0.000000e+00 : f32
    %734 = vector.broadcast %cst_172 : f32 to vector<8x512xf32>
    %735 = arith.select %733, %728, %734 : vector<8x512xi1>, vector<8x512xf32>
    %736 = math.absf %726 : vector<8x512xf32>
    %737 = arith.addf %724, %735 : vector<8x512xf32>
    %738 = arith.addf %725, %736 : vector<8x512xf32>
    %739 = vector.extract_strided_slice %2 {offsets = [448, 0], sizes = [8, 512], strides = [1, 1]} : vector<600x512xf32> to vector<8x512xf32>
    %c448 = arith.constant 448 : index
    %c0_173 = arith.constant 0 : index
    %740 = vector.load %arg4[%c448, %c0_173] : memref<600x512xf32, #tpu.memory_space<vmem>>, vector<8x512xf32>
    %741 = arith.mulf %740, %739 : vector<8x512xf32>
    %c448_i32 = arith.constant 448 : i32
    %742 = vector.broadcast %c448_i32 : i32 to vector<8x512xi32>
    %743 = arith.addi %12, %742 : vector<8x512xi32>
    %c600_i32_174 = arith.constant 600 : i32
    %744 = vector.broadcast %c600_i32_174 : i32 to vector<8x512xi32>
    %745 = arith.cmpi slt, %743, %744 : vector<8x512xi32>
    %746 = arith.andi %8, %745 : vector<8x512xi1>
    %cst_175 = arith.constant 0.000000e+00 : f32
    %747 = vector.broadcast %cst_175 : f32 to vector<8x512xf32>
    %748 = arith.select %746, %741, %747 : vector<8x512xi1>, vector<8x512xf32>
    %749 = math.absf %739 : vector<8x512xf32>
    %750 = arith.addf %737, %748 : vector<8x512xf32>
    %751 = arith.addf %738, %749 : vector<8x512xf32>
    %752 = vector.extract_strided_slice %2 {offsets = [456, 0], sizes = [8, 512], strides = [1, 1]} : vector<600x512xf32> to vector<8x512xf32>
    %c456 = arith.constant 456 : index
    %c0_176 = arith.constant 0 : index
    %753 = vector.load %arg4[%c456, %c0_176] : memref<600x512xf32, #tpu.memory_space<vmem>>, vector<8x512xf32>
    %754 = arith.mulf %753, %752 : vector<8x512xf32>
    %c456_i32 = arith.constant 456 : i32
    %755 = vector.broadcast %c456_i32 : i32 to vector<8x512xi32>
    %756 = arith.addi %12, %755 : vector<8x512xi32>
    %c600_i32_177 = arith.constant 600 : i32
    %757 = vector.broadcast %c600_i32_177 : i32 to vector<8x512xi32>
    %758 = arith.cmpi slt, %756, %757 : vector<8x512xi32>
    %759 = arith.andi %8, %758 : vector<8x512xi1>
    %cst_178 = arith.constant 0.000000e+00 : f32
    %760 = vector.broadcast %cst_178 : f32 to vector<8x512xf32>
    %761 = arith.select %759, %754, %760 : vector<8x512xi1>, vector<8x512xf32>
    %762 = math.absf %752 : vector<8x512xf32>
    %763 = arith.addf %750, %761 : vector<8x512xf32>
    %764 = arith.addf %751, %762 : vector<8x512xf32>
    %765 = vector.extract_strided_slice %2 {offsets = [464, 0], sizes = [8, 512], strides = [1, 1]} : vector<600x512xf32> to vector<8x512xf32>
    %c464 = arith.constant 464 : index
    %c0_179 = arith.constant 0 : index
    %766 = vector.load %arg4[%c464, %c0_179] : memref<600x512xf32, #tpu.memory_space<vmem>>, vector<8x512xf32>
    %767 = arith.mulf %766, %765 : vector<8x512xf32>
    %c464_i32 = arith.constant 464 : i32
    %768 = vector.broadcast %c464_i32 : i32 to vector<8x512xi32>
    %769 = arith.addi %12, %768 : vector<8x512xi32>
    %c600_i32_180 = arith.constant 600 : i32
    %770 = vector.broadcast %c600_i32_180 : i32 to vector<8x512xi32>
    %771 = arith.cmpi slt, %769, %770 : vector<8x512xi32>
    %772 = arith.andi %8, %771 : vector<8x512xi1>
    %cst_181 = arith.constant 0.000000e+00 : f32
    %773 = vector.broadcast %cst_181 : f32 to vector<8x512xf32>
    %774 = arith.select %772, %767, %773 : vector<8x512xi1>, vector<8x512xf32>
    %775 = math.absf %765 : vector<8x512xf32>
    %776 = arith.addf %763, %774 : vector<8x512xf32>
    %777 = arith.addf %764, %775 : vector<8x512xf32>
    %778 = vector.extract_strided_slice %2 {offsets = [472, 0], sizes = [8, 512], strides = [1, 1]} : vector<600x512xf32> to vector<8x512xf32>
    %c472 = arith.constant 472 : index
    %c0_182 = arith.constant 0 : index
    %779 = vector.load %arg4[%c472, %c0_182] : memref<600x512xf32, #tpu.memory_space<vmem>>, vector<8x512xf32>
    %780 = arith.mulf %779, %778 : vector<8x512xf32>
    %c472_i32 = arith.constant 472 : i32
    %781 = vector.broadcast %c472_i32 : i32 to vector<8x512xi32>
    %782 = arith.addi %12, %781 : vector<8x512xi32>
    %c600_i32_183 = arith.constant 600 : i32
    %783 = vector.broadcast %c600_i32_183 : i32 to vector<8x512xi32>
    %784 = arith.cmpi slt, %782, %783 : vector<8x512xi32>
    %785 = arith.andi %8, %784 : vector<8x512xi1>
    %cst_184 = arith.constant 0.000000e+00 : f32
    %786 = vector.broadcast %cst_184 : f32 to vector<8x512xf32>
    %787 = arith.select %785, %780, %786 : vector<8x512xi1>, vector<8x512xf32>
    %788 = math.absf %778 : vector<8x512xf32>
    %789 = arith.addf %776, %787 : vector<8x512xf32>
    %790 = arith.addf %777, %788 : vector<8x512xf32>
    %791 = vector.extract_strided_slice %2 {offsets = [480, 0], sizes = [8, 512], strides = [1, 1]} : vector<600x512xf32> to vector<8x512xf32>
    %c480 = arith.constant 480 : index
    %c0_185 = arith.constant 0 : index
    %792 = vector.load %arg4[%c480, %c0_185] : memref<600x512xf32, #tpu.memory_space<vmem>>, vector<8x512xf32>
    %793 = arith.mulf %792, %791 : vector<8x512xf32>
    %c480_i32 = arith.constant 480 : i32
    %794 = vector.broadcast %c480_i32 : i32 to vector<8x512xi32>
    %795 = arith.addi %12, %794 : vector<8x512xi32>
    %c600_i32_186 = arith.constant 600 : i32
    %796 = vector.broadcast %c600_i32_186 : i32 to vector<8x512xi32>
    %797 = arith.cmpi slt, %795, %796 : vector<8x512xi32>
    %798 = arith.andi %8, %797 : vector<8x512xi1>
    %cst_187 = arith.constant 0.000000e+00 : f32
    %799 = vector.broadcast %cst_187 : f32 to vector<8x512xf32>
    %800 = arith.select %798, %793, %799 : vector<8x512xi1>, vector<8x512xf32>
    %801 = math.absf %791 : vector<8x512xf32>
    %802 = arith.addf %789, %800 : vector<8x512xf32>
    %803 = arith.addf %790, %801 : vector<8x512xf32>
    %804 = vector.extract_strided_slice %2 {offsets = [488, 0], sizes = [8, 512], strides = [1, 1]} : vector<600x512xf32> to vector<8x512xf32>
    %c488 = arith.constant 488 : index
    %c0_188 = arith.constant 0 : index
    %805 = vector.load %arg4[%c488, %c0_188] : memref<600x512xf32, #tpu.memory_space<vmem>>, vector<8x512xf32>
    %806 = arith.mulf %805, %804 : vector<8x512xf32>
    %c488_i32 = arith.constant 488 : i32
    %807 = vector.broadcast %c488_i32 : i32 to vector<8x512xi32>
    %808 = arith.addi %12, %807 : vector<8x512xi32>
    %c600_i32_189 = arith.constant 600 : i32
    %809 = vector.broadcast %c600_i32_189 : i32 to vector<8x512xi32>
    %810 = arith.cmpi slt, %808, %809 : vector<8x512xi32>
    %811 = arith.andi %8, %810 : vector<8x512xi1>
    %cst_190 = arith.constant 0.000000e+00 : f32
    %812 = vector.broadcast %cst_190 : f32 to vector<8x512xf32>
    %813 = arith.select %811, %806, %812 : vector<8x512xi1>, vector<8x512xf32>
    %814 = math.absf %804 : vector<8x512xf32>
    %815 = arith.addf %802, %813 : vector<8x512xf32>
    %816 = arith.addf %803, %814 : vector<8x512xf32>
    %817 = vector.extract_strided_slice %2 {offsets = [496, 0], sizes = [8, 512], strides = [1, 1]} : vector<600x512xf32> to vector<8x512xf32>
    %c496 = arith.constant 496 : index
    %c0_191 = arith.constant 0 : index
    %818 = vector.load %arg4[%c496, %c0_191] : memref<600x512xf32, #tpu.memory_space<vmem>>, vector<8x512xf32>
    %819 = arith.mulf %818, %817 : vector<8x512xf32>
    %c496_i32 = arith.constant 496 : i32
    %820 = vector.broadcast %c496_i32 : i32 to vector<8x512xi32>
    %821 = arith.addi %12, %820 : vector<8x512xi32>
    %c600_i32_192 = arith.constant 600 : i32
    %822 = vector.broadcast %c600_i32_192 : i32 to vector<8x512xi32>
    %823 = arith.cmpi slt, %821, %822 : vector<8x512xi32>
    %824 = arith.andi %8, %823 : vector<8x512xi1>
    %cst_193 = arith.constant 0.000000e+00 : f32
    %825 = vector.broadcast %cst_193 : f32 to vector<8x512xf32>
    %826 = arith.select %824, %819, %825 : vector<8x512xi1>, vector<8x512xf32>
    %827 = math.absf %817 : vector<8x512xf32>
    %828 = arith.addf %815, %826 : vector<8x512xf32>
    %829 = arith.addf %816, %827 : vector<8x512xf32>
    %830 = vector.extract_strided_slice %2 {offsets = [504, 0], sizes = [8, 512], strides = [1, 1]} : vector<600x512xf32> to vector<8x512xf32>
    %c504 = arith.constant 504 : index
    %c0_194 = arith.constant 0 : index
    %831 = vector.load %arg4[%c504, %c0_194] : memref<600x512xf32, #tpu.memory_space<vmem>>, vector<8x512xf32>
    %832 = arith.mulf %831, %830 : vector<8x512xf32>
    %c504_i32 = arith.constant 504 : i32
    %833 = vector.broadcast %c504_i32 : i32 to vector<8x512xi32>
    %834 = arith.addi %12, %833 : vector<8x512xi32>
    %c600_i32_195 = arith.constant 600 : i32
    %835 = vector.broadcast %c600_i32_195 : i32 to vector<8x512xi32>
    %836 = arith.cmpi slt, %834, %835 : vector<8x512xi32>
    %837 = arith.andi %8, %836 : vector<8x512xi1>
    %cst_196 = arith.constant 0.000000e+00 : f32
    %838 = vector.broadcast %cst_196 : f32 to vector<8x512xf32>
    %839 = arith.select %837, %832, %838 : vector<8x512xi1>, vector<8x512xf32>
    %840 = math.absf %830 : vector<8x512xf32>
    %841 = arith.addf %828, %839 : vector<8x512xf32>
    %842 = arith.addf %829, %840 : vector<8x512xf32>
    %843 = vector.extract_strided_slice %2 {offsets = [512, 0], sizes = [8, 512], strides = [1, 1]} : vector<600x512xf32> to vector<8x512xf32>
    %c512 = arith.constant 512 : index
    %c0_197 = arith.constant 0 : index
    %844 = vector.load %arg4[%c512, %c0_197] : memref<600x512xf32, #tpu.memory_space<vmem>>, vector<8x512xf32>
    %845 = arith.mulf %844, %843 : vector<8x512xf32>
    %c512_i32_198 = arith.constant 512 : i32
    %846 = vector.broadcast %c512_i32_198 : i32 to vector<8x512xi32>
    %847 = arith.addi %12, %846 : vector<8x512xi32>
    %c600_i32_199 = arith.constant 600 : i32
    %848 = vector.broadcast %c600_i32_199 : i32 to vector<8x512xi32>
    %849 = arith.cmpi slt, %847, %848 : vector<8x512xi32>
    %850 = arith.andi %8, %849 : vector<8x512xi1>
    %cst_200 = arith.constant 0.000000e+00 : f32
    %851 = vector.broadcast %cst_200 : f32 to vector<8x512xf32>
    %852 = arith.select %850, %845, %851 : vector<8x512xi1>, vector<8x512xf32>
    %853 = math.absf %843 : vector<8x512xf32>
    %854 = arith.addf %841, %852 : vector<8x512xf32>
    %855 = arith.addf %842, %853 : vector<8x512xf32>
    %856 = vector.extract_strided_slice %2 {offsets = [520, 0], sizes = [8, 512], strides = [1, 1]} : vector<600x512xf32> to vector<8x512xf32>
    %c520 = arith.constant 520 : index
    %c0_201 = arith.constant 0 : index
    %857 = vector.load %arg4[%c520, %c0_201] : memref<600x512xf32, #tpu.memory_space<vmem>>, vector<8x512xf32>
    %858 = arith.mulf %857, %856 : vector<8x512xf32>
    %c520_i32 = arith.constant 520 : i32
    %859 = vector.broadcast %c520_i32 : i32 to vector<8x512xi32>
    %860 = arith.addi %12, %859 : vector<8x512xi32>
    %c600_i32_202 = arith.constant 600 : i32
    %861 = vector.broadcast %c600_i32_202 : i32 to vector<8x512xi32>
    %862 = arith.cmpi slt, %860, %861 : vector<8x512xi32>
    %863 = arith.andi %8, %862 : vector<8x512xi1>
    %cst_203 = arith.constant 0.000000e+00 : f32
    %864 = vector.broadcast %cst_203 : f32 to vector<8x512xf32>
    %865 = arith.select %863, %858, %864 : vector<8x512xi1>, vector<8x512xf32>
    %866 = math.absf %856 : vector<8x512xf32>
    %867 = arith.addf %854, %865 : vector<8x512xf32>
    %868 = arith.addf %855, %866 : vector<8x512xf32>
    %869 = vector.extract_strided_slice %2 {offsets = [528, 0], sizes = [8, 512], strides = [1, 1]} : vector<600x512xf32> to vector<8x512xf32>
    %c528 = arith.constant 528 : index
    %c0_204 = arith.constant 0 : index
    %870 = vector.load %arg4[%c528, %c0_204] : memref<600x512xf32, #tpu.memory_space<vmem>>, vector<8x512xf32>
    %871 = arith.mulf %870, %869 : vector<8x512xf32>
    %c528_i32 = arith.constant 528 : i32
    %872 = vector.broadcast %c528_i32 : i32 to vector<8x512xi32>
    %873 = arith.addi %12, %872 : vector<8x512xi32>
    %c600_i32_205 = arith.constant 600 : i32
    %874 = vector.broadcast %c600_i32_205 : i32 to vector<8x512xi32>
    %875 = arith.cmpi slt, %873, %874 : vector<8x512xi32>
    %876 = arith.andi %8, %875 : vector<8x512xi1>
    %cst_206 = arith.constant 0.000000e+00 : f32
    %877 = vector.broadcast %cst_206 : f32 to vector<8x512xf32>
    %878 = arith.select %876, %871, %877 : vector<8x512xi1>, vector<8x512xf32>
    %879 = math.absf %869 : vector<8x512xf32>
    %880 = arith.addf %867, %878 : vector<8x512xf32>
    %881 = arith.addf %868, %879 : vector<8x512xf32>
    %882 = vector.extract_strided_slice %2 {offsets = [536, 0], sizes = [8, 512], strides = [1, 1]} : vector<600x512xf32> to vector<8x512xf32>
    %c536 = arith.constant 536 : index
    %c0_207 = arith.constant 0 : index
    %883 = vector.load %arg4[%c536, %c0_207] : memref<600x512xf32, #tpu.memory_space<vmem>>, vector<8x512xf32>
    %884 = arith.mulf %883, %882 : vector<8x512xf32>
    %c536_i32 = arith.constant 536 : i32
    %885 = vector.broadcast %c536_i32 : i32 to vector<8x512xi32>
    %886 = arith.addi %12, %885 : vector<8x512xi32>
    %c600_i32_208 = arith.constant 600 : i32
    %887 = vector.broadcast %c600_i32_208 : i32 to vector<8x512xi32>
    %888 = arith.cmpi slt, %886, %887 : vector<8x512xi32>
    %889 = arith.andi %8, %888 : vector<8x512xi1>
    %cst_209 = arith.constant 0.000000e+00 : f32
    %890 = vector.broadcast %cst_209 : f32 to vector<8x512xf32>
    %891 = arith.select %889, %884, %890 : vector<8x512xi1>, vector<8x512xf32>
    %892 = math.absf %882 : vector<8x512xf32>
    %893 = arith.addf %880, %891 : vector<8x512xf32>
    %894 = arith.addf %881, %892 : vector<8x512xf32>
    %895 = vector.extract_strided_slice %2 {offsets = [544, 0], sizes = [8, 512], strides = [1, 1]} : vector<600x512xf32> to vector<8x512xf32>
    %c544 = arith.constant 544 : index
    %c0_210 = arith.constant 0 : index
    %896 = vector.load %arg4[%c544, %c0_210] : memref<600x512xf32, #tpu.memory_space<vmem>>, vector<8x512xf32>
    %897 = arith.mulf %896, %895 : vector<8x512xf32>
    %c544_i32 = arith.constant 544 : i32
    %898 = vector.broadcast %c544_i32 : i32 to vector<8x512xi32>
    %899 = arith.addi %12, %898 : vector<8x512xi32>
    %c600_i32_211 = arith.constant 600 : i32
    %900 = vector.broadcast %c600_i32_211 : i32 to vector<8x512xi32>
    %901 = arith.cmpi slt, %899, %900 : vector<8x512xi32>
    %902 = arith.andi %8, %901 : vector<8x512xi1>
    %cst_212 = arith.constant 0.000000e+00 : f32
    %903 = vector.broadcast %cst_212 : f32 to vector<8x512xf32>
    %904 = arith.select %902, %897, %903 : vector<8x512xi1>, vector<8x512xf32>
    %905 = math.absf %895 : vector<8x512xf32>
    %906 = arith.addf %893, %904 : vector<8x512xf32>
    %907 = arith.addf %894, %905 : vector<8x512xf32>
    %908 = vector.extract_strided_slice %2 {offsets = [552, 0], sizes = [8, 512], strides = [1, 1]} : vector<600x512xf32> to vector<8x512xf32>
    %c552 = arith.constant 552 : index
    %c0_213 = arith.constant 0 : index
    %909 = vector.load %arg4[%c552, %c0_213] : memref<600x512xf32, #tpu.memory_space<vmem>>, vector<8x512xf32>
    %910 = arith.mulf %909, %908 : vector<8x512xf32>
    %c552_i32 = arith.constant 552 : i32
    %911 = vector.broadcast %c552_i32 : i32 to vector<8x512xi32>
    %912 = arith.addi %12, %911 : vector<8x512xi32>
    %c600_i32_214 = arith.constant 600 : i32
    %913 = vector.broadcast %c600_i32_214 : i32 to vector<8x512xi32>
    %914 = arith.cmpi slt, %912, %913 : vector<8x512xi32>
    %915 = arith.andi %8, %914 : vector<8x512xi1>
    %cst_215 = arith.constant 0.000000e+00 : f32
    %916 = vector.broadcast %cst_215 : f32 to vector<8x512xf32>
    %917 = arith.select %915, %910, %916 : vector<8x512xi1>, vector<8x512xf32>
    %918 = math.absf %908 : vector<8x512xf32>
    %919 = arith.addf %906, %917 : vector<8x512xf32>
    %920 = arith.addf %907, %918 : vector<8x512xf32>
    %921 = vector.extract_strided_slice %2 {offsets = [560, 0], sizes = [8, 512], strides = [1, 1]} : vector<600x512xf32> to vector<8x512xf32>
    %c560 = arith.constant 560 : index
    %c0_216 = arith.constant 0 : index
    %922 = vector.load %arg4[%c560, %c0_216] : memref<600x512xf32, #tpu.memory_space<vmem>>, vector<8x512xf32>
    %923 = arith.mulf %922, %921 : vector<8x512xf32>
    %c560_i32 = arith.constant 560 : i32
    %924 = vector.broadcast %c560_i32 : i32 to vector<8x512xi32>
    %925 = arith.addi %12, %924 : vector<8x512xi32>
    %c600_i32_217 = arith.constant 600 : i32
    %926 = vector.broadcast %c600_i32_217 : i32 to vector<8x512xi32>
    %927 = arith.cmpi slt, %925, %926 : vector<8x512xi32>
    %928 = arith.andi %8, %927 : vector<8x512xi1>
    %cst_218 = arith.constant 0.000000e+00 : f32
    %929 = vector.broadcast %cst_218 : f32 to vector<8x512xf32>
    %930 = arith.select %928, %923, %929 : vector<8x512xi1>, vector<8x512xf32>
    %931 = math.absf %921 : vector<8x512xf32>
    %932 = arith.addf %919, %930 : vector<8x512xf32>
    %933 = arith.addf %920, %931 : vector<8x512xf32>
    %934 = vector.extract_strided_slice %2 {offsets = [568, 0], sizes = [8, 512], strides = [1, 1]} : vector<600x512xf32> to vector<8x512xf32>
    %c568 = arith.constant 568 : index
    %c0_219 = arith.constant 0 : index
    %935 = vector.load %arg4[%c568, %c0_219] : memref<600x512xf32, #tpu.memory_space<vmem>>, vector<8x512xf32>
    %936 = arith.mulf %935, %934 : vector<8x512xf32>
    %c568_i32 = arith.constant 568 : i32
    %937 = vector.broadcast %c568_i32 : i32 to vector<8x512xi32>
    %938 = arith.addi %12, %937 : vector<8x512xi32>
    %c600_i32_220 = arith.constant 600 : i32
    %939 = vector.broadcast %c600_i32_220 : i32 to vector<8x512xi32>
    %940 = arith.cmpi slt, %938, %939 : vector<8x512xi32>
    %941 = arith.andi %8, %940 : vector<8x512xi1>
    %cst_221 = arith.constant 0.000000e+00 : f32
    %942 = vector.broadcast %cst_221 : f32 to vector<8x512xf32>
    %943 = arith.select %941, %936, %942 : vector<8x512xi1>, vector<8x512xf32>
    %944 = math.absf %934 : vector<8x512xf32>
    %945 = arith.addf %932, %943 : vector<8x512xf32>
    %946 = arith.addf %933, %944 : vector<8x512xf32>
    %947 = vector.extract_strided_slice %2 {offsets = [576, 0], sizes = [8, 512], strides = [1, 1]} : vector<600x512xf32> to vector<8x512xf32>
    %c576 = arith.constant 576 : index
    %c0_222 = arith.constant 0 : index
    %948 = vector.load %arg4[%c576, %c0_222] : memref<600x512xf32, #tpu.memory_space<vmem>>, vector<8x512xf32>
    %949 = arith.mulf %948, %947 : vector<8x512xf32>
    %c576_i32 = arith.constant 576 : i32
    %950 = vector.broadcast %c576_i32 : i32 to vector<8x512xi32>
    %951 = arith.addi %12, %950 : vector<8x512xi32>
    %c600_i32_223 = arith.constant 600 : i32
    %952 = vector.broadcast %c600_i32_223 : i32 to vector<8x512xi32>
    %953 = arith.cmpi slt, %951, %952 : vector<8x512xi32>
    %954 = arith.andi %8, %953 : vector<8x512xi1>
    %cst_224 = arith.constant 0.000000e+00 : f32
    %955 = vector.broadcast %cst_224 : f32 to vector<8x512xf32>
    %956 = arith.select %954, %949, %955 : vector<8x512xi1>, vector<8x512xf32>
    %957 = math.absf %947 : vector<8x512xf32>
    %958 = arith.addf %945, %956 : vector<8x512xf32>
    %959 = arith.addf %946, %957 : vector<8x512xf32>
    %960 = vector.extract_strided_slice %2 {offsets = [584, 0], sizes = [8, 512], strides = [1, 1]} : vector<600x512xf32> to vector<8x512xf32>
    %c584 = arith.constant 584 : index
    %c0_225 = arith.constant 0 : index
    %961 = vector.load %arg4[%c584, %c0_225] : memref<600x512xf32, #tpu.memory_space<vmem>>, vector<8x512xf32>
    %962 = arith.mulf %961, %960 : vector<8x512xf32>
    %c584_i32 = arith.constant 584 : i32
    %963 = vector.broadcast %c584_i32 : i32 to vector<8x512xi32>
    %964 = arith.addi %12, %963 : vector<8x512xi32>
    %c600_i32_226 = arith.constant 600 : i32
    %965 = vector.broadcast %c600_i32_226 : i32 to vector<8x512xi32>
    %966 = arith.cmpi slt, %964, %965 : vector<8x512xi32>
    %967 = arith.andi %8, %966 : vector<8x512xi1>
    %cst_227 = arith.constant 0.000000e+00 : f32
    %968 = vector.broadcast %cst_227 : f32 to vector<8x512xf32>
    %969 = arith.select %967, %962, %968 : vector<8x512xi1>, vector<8x512xf32>
    %970 = math.absf %960 : vector<8x512xf32>
    %971 = arith.addf %958, %969 : vector<8x512xf32>
    %972 = arith.addf %959, %970 : vector<8x512xf32>
    %973 = vector.extract_strided_slice %2 {offsets = [592, 0], sizes = [8, 512], strides = [1, 1]} : vector<600x512xf32> to vector<8x512xf32>
    %c592 = arith.constant 592 : index
    %c0_228 = arith.constant 0 : index
    %974 = vector.load %arg4[%c592, %c0_228] : memref<600x512xf32, #tpu.memory_space<vmem>>, vector<8x512xf32>
    %975 = arith.mulf %974, %973 : vector<8x512xf32>
    %c592_i32 = arith.constant 592 : i32
    %976 = vector.broadcast %c592_i32 : i32 to vector<8x512xi32>
    %977 = arith.addi %12, %976 : vector<8x512xi32>
    %c600_i32_229 = arith.constant 600 : i32
    %978 = vector.broadcast %c600_i32_229 : i32 to vector<8x512xi32>
    %979 = arith.cmpi slt, %977, %978 : vector<8x512xi32>
    %980 = arith.andi %8, %979 : vector<8x512xi1>
    %cst_230 = arith.constant 0.000000e+00 : f32
    %981 = vector.broadcast %cst_230 : f32 to vector<8x512xf32>
    %982 = arith.select %980, %975, %981 : vector<8x512xi1>, vector<8x512xf32>
    %983 = math.absf %973 : vector<8x512xf32>
    %984 = arith.addf %971, %982 : vector<8x512xf32>
    %985 = arith.addf %972, %983 : vector<8x512xf32>
    %986 = vector.extract_strided_slice %984 {offsets = [0, 0], sizes = [8, 128], strides = [1, 1]} : vector<8x512xf32> to vector<8x128xf32>
    %987 = vector.extract_strided_slice %985 {offsets = [0, 0], sizes = [8, 128], strides = [1, 1]} : vector<8x512xf32> to vector<8x128xf32>
    %988 = vector.extract_strided_slice %984 {offsets = [0, 128], sizes = [8, 128], strides = [1, 1]} : vector<8x512xf32> to vector<8x128xf32>
    %989 = arith.addf %986, %988 : vector<8x128xf32>
    %990 = vector.extract_strided_slice %985 {offsets = [0, 128], sizes = [8, 128], strides = [1, 1]} : vector<8x512xf32> to vector<8x128xf32>
    %991 = arith.addf %987, %990 : vector<8x128xf32>
    %992 = vector.extract_strided_slice %984 {offsets = [0, 256], sizes = [8, 128], strides = [1, 1]} : vector<8x512xf32> to vector<8x128xf32>
    %993 = arith.addf %989, %992 : vector<8x128xf32>
    %994 = vector.extract_strided_slice %985 {offsets = [0, 256], sizes = [8, 128], strides = [1, 1]} : vector<8x512xf32> to vector<8x128xf32>
    %995 = arith.addf %991, %994 : vector<8x128xf32>
    %996 = vector.extract_strided_slice %984 {offsets = [0, 384], sizes = [8, 128], strides = [1, 1]} : vector<8x512xf32> to vector<8x128xf32>
    %997 = arith.addf %993, %996 : vector<8x128xf32>
    %998 = vector.extract_strided_slice %985 {offsets = [0, 384], sizes = [8, 128], strides = [1, 1]} : vector<8x512xf32> to vector<8x128xf32>
    %999 = arith.addf %995, %998 : vector<8x128xf32>
    %c0_231 = arith.constant 0 : index
    %c0_232 = arith.constant 0 : index
    %1000 = vector.load %arg5[%c0_231, %c0_232] : memref<8x128xf32, #tpu.memory_space<vmem>>, vector<8x128xf32>
    tpu.vector_store %arg5[%c0_231, %c0_232], %997 {strides = array<i32>} : memref<8x128xf32, #tpu.memory_space<vmem>>, vector<8x128xf32>,
    %c0_233 = arith.constant 0 : index
    %c0_234 = arith.constant 0 : index
    %1001 = vector.load %arg6[%c0_233, %c0_234] : memref<8x128xf32, #tpu.memory_space<vmem>>, vector<8x128xf32>
    tpu.vector_store %arg6[%c0_233, %c0_234], %999 {strides = array<i32>} : memref<8x128xf32, #tpu.memory_space<vmem>>, vector<8x128xf32>,
    return
  }
  func.func @transform_0(%arg0: i32, %arg1: i32) -> (i32, i32) {
    %c0_i32 = arith.constant 0 : i32
    %c0_i32_0 = arith.constant 0 : i32
    return %arg0, %c0_i32 : i32, i32
  }
  func.func @transform_1(%arg0: i32, %arg1: i32) -> (i32, i32) {
    %c0_i32 = arith.constant 0 : i32
    %c0_i32_0 = arith.constant 0 : i32
    return %c0_i32, %arg1 : i32, i32
  }
  func.func @transform_2(%arg0: i32, %arg1: i32) -> (i32, i32) {
    %c0_i32 = arith.constant 0 : i32
    return %arg0, %arg1 : i32, i32
  }
  func.func @transform_3(%arg0: i32, %arg1: i32) -> (i32, i32) {
    %c2_i32 = arith.constant 2 : i32
    %0 = arith.muli %arg0, %c2_i32 : i32
    %1 = arith.addi %0, %arg1 : i32
    %c0_i32 = arith.constant 0 : i32
    %c0_i32_0 = arith.constant 0 : i32
    return %1, %c0_i32 : i32, i32
  }
  func.func @transform_4(%arg0: i32, %arg1: i32) -> (i32, i32) {
    %c2_i32 = arith.constant 2 : i32
    %0 = arith.muli %arg0, %c2_i32 : i32
    %1 = arith.addi %0, %arg1 : i32
    %c0_i32 = arith.constant 0 : i32
    %c0_i32_0 = arith.constant 0 : i32
    return %1, %c0_i32 : i32, i32
  }
}

</mosaic_0001>

<llo_original>
// kernel: l1_loss_beta.1
$region0: #{l1_loss_beta.1}
  #allocation0 [shape = 'u32[]', space=smem, size = 0x4, offset = 0x4, fixed_abs, tag = 'smem constant byte address 0x4 - core index']
  #allocation1 [shape = 'u32[144,128]{1,0:T(1,128)}', space=vmem, size = 0x12000, scoped, tag = 'internal scratch']
  %s0 = inlined_call_operand.vmem [shape: f32[1024,32], index: 0, kind: input, shape index: {}]
  %s1 = inlined_call_operand.vmem [shape: f32[32,1024], index: 1, kind: input, shape index: {}]
  %s2 = inlined_call_operand.hbm [shape: f32[600,600], index: 2, kind: input, shape index: {}]
  %s3 = inlined_call_operand.vmem [shape: f32[16,128], index: 3, kind: output, shape index: {0}]
  %s4 = inlined_call_operand.vmem [shape: f32[16,128], index: 4, kind: output, shape index: {1}]
  %5 = xla_tuple %s3, %s4
  %s6 = sld [smem:[#allocation0]]
  $region80: #{l1_loss_beta.1} parent=0
    _
  %s8 = ssub.s32 1, %s6
  %s9 = scalar_select 0, %s8, %s6
  $region1: #{l1_loss_beta.1} parent=0
    #allocation2 [shape = 'u8[131072]{0}', space=vmem, size = 0x20000, scoped, tag = 'input window, operand 1']
    #allocation3 [shape = 'u8[2457600]{0}', space=vmem, size = 0x258000, scoped, tag = 'input window, operand 2']
    #allocation4 [shape = 's32[2]{0}', space=sflag, size = 0x8, scoped, tag = 'scoped memory for l1_loss_beta.1']
    %10 = vsyncpa [#allocation4], 0
    %s11 = scalar_lea.sflag [#allocation4], 1
    %12 = vsyncpa %s11, 0
    loop: start=0, step=1, limit=4
    $region2: #{l1_loss_beta.1} parent=1 // loop_pre_header
      _
    $region3: #{l1_loss_beta.1} parent=1 // loop_header
      %s14 = sphi 0, %s18
      %p15 = scmp.ge.s32.totalorder %s14, 4
      %s21 = sphi 0, %s33
      %s22 = sphi 0, %s29
      %s23 = sphi 0, %s21
      %s24 = sphi 0, %s22
      %s25 = sphi 0, %s23
      %s26 = sphi 0, %s24
      %s36 = sphi 0, %s38
      %s39 = sphi 0, %s36
      %s40 = sphi 0, %s39
      %s56 = sphi 0, %s40
      %s62 = sphi 0, %s64
      %s65 = sphi 0, %s62
      %s66 = sphi 0, %s65
      %s82 = sphi 0, %s66
      %s90 = sphi 0, %s92
      %s93 = sphi 0, %s90
      %s94 = sphi 0, %s93
      %s110 = sphi 0, %s94
      %s120 = sphi 0, %s122
      %s123 = sphi 0, %s120
      %s124 = sphi 0, %s123
      %s140 = sphi 0, %s124
      %s150 = sphi 0, %s152
      %s153 = sphi 0, %s150
      %s154 = sphi 0, %s153
      %s170 = sphi 0, %s154
    $region4: #{l1_loss_beta.1} parent=1 // loop_header_branch
      %17 = sbr.rel (%p15) target = $region8
    $region5: #{l1_loss_beta.1} parent=1 // loop_body
      %s19 = ssub.s32 %s14, 1
      %s20 = ssub.s32 %s14, 2
      %s27 = sadd.s32 1, %s22
      %p28 = scmp.ge.s32.totalorder %s27, 2
      %s29 = scalar_select %p28, 0, %s27
      %s30 = sadd.s32 1, %s21
      %s31 = scalar_select %p28, %s30, %s21
      %p32 = scmp.ge.s32.totalorder %s31, 1
      %s33 = scalar_select %p32, 0, %s31
      %s34 = ssub.s32 %s21, %s33
      %p35 = scmp.eq.s32.totalorder %s34, 0
      %s37 = sadd.s32 %s36, 1
      %s38 = scalar_select %p35, %s36, %s37
      %p41 = pneg %p35
      %p42 = scmp.eq.s32.totalorder %s14, 1
      %p43 = por %p41, %p42
      %p44 = scmp.ne.s32.totalorder %s36, %s39
      %p45 = scmp.eq.s32.totalorder %s14, 0
      %p46 = por %p44, %p45
      %p47 = scmp.ne.s32.totalorder %s36, %s39
      %p48 = scmp.eq.s32.totalorder %s19, 1
      %p49 = por %p47, %p48
      %p50 = scmp.ne.s32.totalorder %s39, %s40
      %p51 = scmp.eq.s32.totalorder %s19, 0
      %p52 = por %p50, %p51
      %p53 = scmp.ne.s32.totalorder %s39, %s40
      %p54 = scmp.eq.s32.totalorder %s20, 1
      %p55 = por %p53, %p54
      %p57 = scmp.ne.s32.totalorder %s40, %s56
      %p58 = scmp.eq.s32.totalorder %s20, 0
      %p59 = por %p57, %p58
      %s60 = ssub.s32 %s22, %s29
      %p61 = scmp.eq.s32.totalorder %s60, 0
      %s63 = sadd.s32 %s62, 1
      %s64 = scalar_select %p61, %s62, %s63
      %p67 = pneg %p61
      %p68 = scmp.eq.s32.totalorder %s14, 1
      %p69 = por %p67, %p68
      %p70 = scmp.ne.s32.totalorder %s62, %s65
      %p71 = scmp.eq.s32.totalorder %s14, 0
      %p72 = por %p70, %p71
      %p73 = scmp.ne.s32.totalorder %s62, %s65
      %p74 = scmp.eq.s32.totalorder %s19, 1
      %p75 = por %p73, %p74
      %p76 = scmp.ne.s32.totalorder %s65, %s66
      %p77 = scmp.eq.s32.totalorder %s19, 0
      %p78 = por %p76, %p77
      %p79 = scmp.ne.s32.totalorder %s65, %s66
      %p80 = scmp.eq.s32.totalorder %s20, 1
      %p81 = por %p79, %p80
      %p83 = scmp.ne.s32.totalorder %s66, %s82
      %p84 = scmp.eq.s32.totalorder %s20, 0
      %p85 = por %p83, %p84
      %s86 = ssub.s32 %s21, %s33
      %s87 = ssub.s32 %s22, %s29
      %s88 = sor.u32 %s86, %s87
      %p89 = scmp.eq.s32.totalorder %s88, 0
      %s91 = sadd.s32 %s90, 1
      %s92 = scalar_select %p89, %s90, %s91
      %p95 = pneg %p89
      %p96 = scmp.eq.s32.totalorder %s14, 1
      %p97 = por %p95, %p96
      %p98 = scmp.ne.s32.totalorder %s90, %s93
      %p99 = scmp.eq.s32.totalorder %s14, 0
      %p100 = por %p98, %p99
      %p101 = scmp.ne.s32.totalorder %s90, %s93
      %p102 = scmp.eq.s32.totalorder %s19, 1
      %p103 = por %p101, %p102
      %p104 = scmp.ne.s32.totalorder %s93, %s94
      %p105 = scmp.eq.s32.totalorder %s19, 0
      %p106 = por %p104, %p105
      %p107 = scmp.ne.s32.totalorder %s93, %s94
      %p108 = scmp.eq.s32.totalorder %s20, 1
      %p109 = por %p107, %p108
      %p111 = scmp.ne.s32.totalorder %s94, %s110
      %p112 = scmp.eq.s32.totalorder %s20, 0
      %p113 = por %p111, %p112
      %s114 = smul.u32 %s21, 2
      %s115 = sadd.s32 %s114, %s22
      %s116 = smul.u32 %s33, 2
      %s117 = sadd.s32 %s116, %s29
      %s118 = ssub.s32 %s115, %s117
      %p119 = scmp.eq.s32.totalorder %s118, 0
      %s121 = sadd.s32 %s120, 1
      %s122 = scalar_select %p119, %s120, %s121
      %p125 = pneg %p119
      %p126 = scmp.eq.s32.totalorder %s14, 1
      %p127 = por %p125, %p126
      %p128 = scmp.ne.s32.totalorder %s120, %s123
      %p129 = scmp.eq.s32.totalorder %s14, 0
      %p130 = por %p128, %p129
      %p131 = scmp.ne.s32.totalorder %s120, %s123
      %p132 = scmp.eq.s32.totalorder %s19, 1
      %p133 = por %p131, %p132
      %p134 = scmp.ne.s32.totalorder %s123, %s124
      %p135 = scmp.eq.s32.totalorder %s19, 0
      %p136 = por %p134, %p135
      %p137 = scmp.ne.s32.totalorder %s123, %s124
      %p138 = scmp.eq.s32.totalorder %s20, 1
      %p139 = por %p137, %p138
      %p141 = scmp.ne.s32.totalorder %s124, %s140
      %p142 = scmp.eq.s32.totalorder %s20, 0
      %p143 = por %p141, %p142
      %s144 = smul.u32 %s21, 2
      %s145 = sadd.s32 %s144, %s22
      %s146 = smul.u32 %s33, 2
      %s147 = sadd.s32 %s146, %s29
      %s148 = ssub.s32 %s145, %s147
      %p149 = scmp.eq.s32.totalorder %s148, 0
      %s151 = sadd.s32 %s150, 1
      %s152 = scalar_select %p149, %s150, %s151
      %p155 = pneg %p149
      %p156 = scmp.eq.s32.totalorder %s14, 1
      %p157 = por %p155, %p156
      %p158 = scmp.ne.s32.totalorder %s150, %s153
      %p159 = scmp.eq.s32.totalorder %s14, 0
      %p160 = por %p158, %p159
      %p161 = scmp.ne.s32.totalorder %s150, %s153
      %p162 = scmp.eq.s32.totalorder %s19, 1
      %p163 = por %p161, %p162
      %p164 = scmp.ne.s32.totalorder %s153, %s154
      %p165 = scmp.eq.s32.totalorder %s19, 0
      %p166 = por %p164, %p165
      %p167 = scmp.ne.s32.totalorder %s153, %s154
      %p168 = scmp.eq.s32.totalorder %s20, 1
      %p169 = por %p167, %p168
      %p171 = scmp.ne.s32.totalorder %s154, %s170
      %p172 = scmp.eq.s32.totalorder %s20, 0
      %p173 = por %p171, %p172
      %p174 = scmp.le.s32.totalorder 1, %s14
      %p175 = scmp.lt.s32.totalorder %s14, 3
      %p176 = pnand %p174, %p175
      %p177 = pneg %p176
      // Predicated region
      $region9: #{l1_loss_beta.1} parent=5 // pred_check
        _
      $region10: #{l1_loss_beta.1} parent=5 // pred_check_branch
        %179 = sbr.rel (%p176) target = $region12
      $region11: #{l1_loss_beta.1} parent=5 // pred_region
        %s180 = ssub.s32 %s14, 1
        // Predicated region
        $region13: #{l1_loss_beta.1} parent=11 // pred_check
          %p181 = pneg %p52
        $region14: #{l1_loss_beta.1} parent=11 // pred_check_branch
          %183 = sbr.rel (%p181) target = $region16
        $region15: #{l1_loss_beta.1} parent=11 // pred_region
          %s184 = smul.u32 75, %s23
          %s185 = ssub.s32 128, %s184
          %p186 = scmp.lt.s32.totalorder %s185, 75
          %s187 = scalar_select %p186, %s185, 75
          %s188 = smul.u32 128, %s187
          %p189 = scmp.lt.s32.totalorder %s184, 127
          %s190 = scalar_select %p189, %s184, 127
          %s191 = smul.addr %s190, 8
          %s192 = scalar_lea.vmem %s0, %s191
          %s193 = smul.u32 75, %s23
          %s194 = ssub.s32 128, %s193
          %p195 = scmp.lt.s32.totalorder %s194, 75
          %s196 = scalar_select %p195, %s194, 75
          %s197 = smul.u32 128, %s196
        $region16: #{l1_loss_beta.1} parent=11 // pred_fallthru
          _
      $region12: #{l1_loss_beta.1} parent=5 // pred_fallthru
        _
      %p198 = scmp.lt.s32.totalorder %s14, 2
      // Predicated region
      $region17: #{l1_loss_beta.1} parent=5 // pred_check
        %p199 = pneg %p198
      $region18: #{l1_loss_beta.1} parent=5 // pred_check_branch
        %201 = sbr.rel (%p199) target = $region20
      $region19: #{l1_loss_beta.1} parent=5 // pred_region
        // Predicated region
        $region21: #{l1_loss_beta.1} parent=19 // pred_check
          %p202 = pneg %p72
        $region22: #{l1_loss_beta.1} parent=19 // pred_check_branch
          %204 = sbr.rel (%p202) target = $region24
        $region23: #{l1_loss_beta.1} parent=19 // pred_region
          %s205 = sand.u32 %s62, 1
          %s206 = sand.u32 %s62, 1
          %s207 = smul.addr %s206, 128
          %s208 = scalar_lea.vmem [#allocation2], %s207
          %s209 = smul.u32 4, %s22
          %s210 = smul.addr %s209, 8
          %s211 = scalar_lea.vmem %s1, %s210
          // Predicated region
          $region25: #{l1_loss_beta.1} parent=23 // pred_check
            _
          $region26: #{l1_loss_beta.1} parent=23 // pred_check_branch
            %213 = sbr.rel (0) target = $region28
          $region27: #{l1_loss_beta.1} parent=23 // pred_region
            // Predicated region
            $region29: #{l1_loss_beta.1} parent=27 // pred_check
              _
            $region30: #{l1_loss_beta.1} parent=27 // pred_check_branch
              %215 = sbr.rel (0) target = $region32
            $region31: #{l1_loss_beta.1} parent=27 // pred_region
              loop: start=0, step=1, limit=1
              $region33: #{l1_loss_beta.1} parent=31 // loop_pre_header
                _
              $region34: #{l1_loss_beta.1} parent=31 // loop_header
                %s217 = sphi 0, %s221
                %p218 = scmp.ge.s32.totalorder %s217, 1
                %s222 = sphi %s211, %s211
                %s223 = sphi %s208, %s208
              $region35: #{l1_loss_beta.1} parent=31 // loop_header_branch
                %220 = sbr.rel (%p218) target = $region39
              $region36: #{l1_loss_beta.1} parent=31 // loop_body
                %v224 = vld [vmem:[%s222] sm:$0xff]
                %225 = vst [vmem:[%s223] sm:$0xff] %v224
                %v226 = vld [vmem:[%s222 + $0x8] sm:$0xff]
                %227 = vst [vmem:[%s223 + $0x8] sm:$0xff] %v226
                %v228 = vld [vmem:[%s222 + $0x10] sm:$0xff]
                %229 = vst [vmem:[%s223 + $0x10] sm:$0xff] %v228
                %v230 = vld [vmem:[%s222 + $0x18] sm:$0xff]
                %231 = vst [vmem:[%s223 + $0x18] sm:$0xff] %v230
                %v232 = vld [vmem:[%s222 + $0x40] sm:$0xff]
                %233 = vst [vmem:[%s223 + $0x20] sm:$0xff] %v232
                %v234 = vld [vmem:[%s222 + $0x48] sm:$0xff]
                %235 = vst [vmem:[%s223 + $0x28] sm:$0xff] %v234
                %v236 = vld [vmem:[%s222 + $0x50] sm:$0xff]
                %237 = vst [vmem:[%s223 + $0x30] sm:$0xff] %v236
                %v238 = vld [vmem:[%s222 + $0x58] sm:$0xff]
                %239 = vst [vmem:[%s223 + $0x38] sm:$0xff] %v238
                %v240 = vld [vmem:[%s222 + $0x80] sm:$0xff]
                %241 = vst [vmem:[%s223 + $0x40] sm:$0xff] %v240
                %v242 = vld [vmem:[%s222 + $0x88] sm:$0xff]
                %243 = vst [vmem:[%s223 + $0x48] sm:$0xff] %v242
                %v244 = vld [vmem:[%s222 + $0x90] sm:$0xff]
                %245 = vst [vmem:[%s223 + $0x50] sm:$0xff] %v244
                %v246 = vld [vmem:[%s222 + $0x98] sm:$0xff]
                %247 = vst [vmem:[%s223 + $0x58] sm:$0xff] %v246
                %v248 = vld [vmem:[%s222 + $0xc0] sm:$0xff]
                %249 = vst [vmem:[%s223 + $0x60] sm:$0xff] %v248
                %v250 = vld [vmem:[%s222 + $0xc8] sm:$0xff]
                %251 = vst [vmem:[%s223 + $0x68] sm:$0xff] %v250
                %v252 = vld [vmem:[%s222 + $0xd0] sm:$0xff]
                %253 = vst [vmem:[%s223 + $0x70] sm:$0xff] %v252
                %v254 = vld [vmem:[%s222 + $0xd8] sm:$0xff]
                %255 = vst [vmem:[%s223 + $0x78] sm:$0xff] %v254
              $region37: #{l1_loss_beta.1} parent=31 // loop_footer
                %s221 = sadd.s32 1, %s217
              $region38: #{l1_loss_beta.1} parent=31 // loop_footer_branch
                %216 = sbr.rel target = $region34
              $region39: #{l1_loss_beta.1} parent=31 // loop_exit
                _
            $region32: #{l1_loss_beta.1} parent=27 // pred_fallthru
              _
            // Predicated region
            $region40: #{l1_loss_beta.1} parent=27 // pred_check
              _
            $region41: #{l1_loss_beta.1} parent=27 // pred_check_branch
              %257 = sbr.rel target = $region43
            $region42: #{l1_loss_beta.1} parent=27 // pred_region
              _
            $region43: #{l1_loss_beta.1} parent=27 // pred_fallthru
              _
          $region28: #{l1_loss_beta.1} parent=23 // pred_fallthru
            _
          %258 = vnop
        $region24: #{l1_loss_beta.1} parent=19 // pred_fallthru
          _
        // Predicated region
        $region44: #{l1_loss_beta.1} parent=19 // pred_check
          %p259 = pneg %p100
        $region45: #{l1_loss_beta.1} parent=19 // pred_check_branch
          %261 = sbr.rel (%p259) target = $region47
        $region46: #{l1_loss_beta.1} parent=19 // pred_region
          %s262 = sand.u32 %s90, 1
          %s263 = scalar_lea.sflag [#allocation4], %s262
          %s264 = sand.u32 %s90, 1
          %s265 = smul.addr %s264, 2400
          %s266 = scalar_lea.vmem [#allocation3], %s265
          %s267 = smul.u32 75, %s21
          %s268 = smul.u32 4, %s22
          %s269 = ssub.s32 5, %s268
          %p270 = scmp.lt.s32.totalorder %s269, 4
          %s271 = scalar_select %p270, %s269, 4
          %s272 = smul.u32 9600, %s271
          %s274 = ssub.s32 38400, %s272
          %275 = vsyncadd %s263, %s274
          %p276 = scmp.ne.s32.totalorder 0, %s272
          %s277 = smul.addr %s267, 5
          %s278 = sadd.s32 %s268, %s277
          %s279 = smul.addr %s278, 128
          %s280 = scalar_lea.hbm %s2, %s279
          %s281 = smul.u32 %s271, 8
          %s282 = smul.u32 %s281, 75
          %s283 = sshll.u32 %s266, 4
          %s284 = int_to_ptr.vmem [resolvable:$true] %s283
          %s285 = sshll.u32 %s282, 4
          %289 = dma.hbm_to_vmem [thread:$0]  (%p276), %s280, %s285, %s284, %s263, 640, 512, %s281
        $region47: #{l1_loss_beta.1} parent=19 // pred_fallthru
          _
      $region20: #{l1_loss_beta.1} parent=5 // pred_fallthru
        _
      %p290 = scmp.le.s32.totalorder 1, %s14
      %p291 = scmp.lt.s32.totalorder %s14, 3
      %p292 = pnand %p290, %p291
      %p293 = pneg %p292
      // Predicated region
      $region48: #{l1_loss_beta.1} parent=5 // pred_check
        _
      $region49: #{l1_loss_beta.1} parent=5 // pred_check_branch
        %295 = sbr.rel (%p292) target = $region51
      $region50: #{l1_loss_beta.1} parent=5 // pred_region
        %s296 = ssub.s32 %s14, 1
        %s297 = sand.u32 %s65, 1
        %s298 = sand.u32 %s65, 1
        %s299 = smul.addr %s298, 128
        %s300 = scalar_lea.vmem [#allocation2], %s299
        // Predicated region
        $region52: #{l1_loss_beta.1} parent=50 // pred_check
          %p301 = pneg %p78
        $region53: #{l1_loss_beta.1} parent=50 // pred_check_branch
          %303 = sbr.rel (%p301) target = $region55
        $region54: #{l1_loss_beta.1} parent=50 // pred_region
          _
        $region55: #{l1_loss_beta.1} parent=50 // pred_fallthru
          _
        %s304 = sand.u32 %s93, 1
        %s305 = scalar_lea.sflag [#allocation4], %s304
        %s306 = sand.u32 %s93, 1
        %s307 = smul.addr %s306, 2400
        %s308 = scalar_lea.vmem [#allocation3], %s307
        // Predicated region
        $region56: #{l1_loss_beta.1} parent=50 // pred_check
          %p309 = pneg %p106
        $region57: #{l1_loss_beta.1} parent=50 // pred_check_branch
          %311 = sbr.rel (%p309) target = $region59
        $region58: #{l1_loss_beta.1} parent=50 // pred_region
          %312 = dma.done %s305, 38400
        $region59: #{l1_loss_beta.1} parent=50 // pred_fallthru
          _
        %s313 = smul.u32 75, %s23
        %s314 = ssub.s32 128, %s313
        %p315 = scmp.lt.s32.totalorder %s314, 75
        %s316 = scalar_select %p315, %s314, 75
        %s317 = smul.u32 128, %s316
        %p318 = scmp.lt.s32.totalorder %s313, 127
        %s319 = scalar_select %p318, %s313, 127
        %s320 = smul.addr %s319, 8
        %s321 = scalar_lea.vmem %s0, %s320
        %p322 = pneg %p52
        %p323 = pneg %p49
        %s324 = sand.u32 %s65, 1
        %s325 = sand.u32 %s65, 1
        %s326 = smul.addr %s325, 128
        %s327 = scalar_lea.vmem [#allocation2], %s326
        %p328 = pneg %p78
        %p329 = pneg %p75
        %s330 = sand.u32 %s93, 1
        %s331 = scalar_lea.sflag [#allocation4], %s330
        %s332 = sand.u32 %s93, 1
        %s333 = smul.addr %s332, 2400
        %s334 = scalar_lea.vmem [#allocation3], %s333
        %p335 = pneg %p106
        %p336 = pneg %p103
        %p337 = pneg %p136
        %p338 = pneg %p133
        %s339 = smul.u32 %s23, 2
        %s340 = sadd.s32 %s339, %s24
        %p341 = scmp.lt.s32.totalorder %s340, 1
        %s342 = scalar_select %p341, %s340, 1
        %s343 = smul.addr %s342, 8
        %s344 = scalar_lea.vmem %s3, %s343
        %p345 = pneg %p166
        %p346 = pneg %p163
        %s347 = smul.u32 %s23, 2
        %s348 = sadd.s32 %s347, %s24
        %p349 = scmp.lt.s32.totalorder %s348, 1
        %s350 = scalar_select %p349, %s348, 1
        %s351 = smul.addr %s350, 8
        %s352 = scalar_lea.vmem %s4, %s351
        %s353 = smul.u32 75, %s23
        %s354 = ssub.s32 128, %s353
        %p355 = scmp.lt.s32.totalorder %s354, 75
        %s356 = scalar_select %p355, %s354, 75
        %s357 = smul.u32 128, %s356
        %p358 = scmp.lt.s32.totalorder %s353, 127
        %s359 = scalar_select %p358, %s353, 127
        %s360 = smul.addr %s359, 8
        %s361 = scalar_lea.vmem %s0, %s360
        %s362 = smul.u32 75, %s23
        %s363 = ssub.s32 128, %s362
        %p364 = scmp.lt.s32.totalorder %s363, 75
        %s365 = scalar_select %p364, %s363, 75
        %s366 = smul.u32 128, %s365
        %s367 = smul.u32 4, %s24
        %s368 = smul.u32 75, %s23
        %s369 = smul.u32 4, %s24
        %s370 = ssub.s32 5, %s369
        %p371 = scmp.lt.s32.totalorder %s370, 4
        %s372 = scalar_select %p371, %s370, 4
        %s373 = smul.u32 9600, %s372
        %s374 = smul.u32 %s23, 2
        %s375 = sadd.s32 %s374, %s24
        %p376 = scmp.lt.s32.totalorder %s375, 1
        %s377 = scalar_select %p376, %s375, 1
        %s378 = smul.addr %s377, 8
        %s379 = scalar_lea.vmem %s3, %s378
        %s380 = smul.u32 %s23, 2
        %s381 = sadd.s32 %s380, %s24
        %s382 = smul.u32 %s23, 2
        %s383 = sadd.s32 %s382, %s24
        %p384 = scmp.lt.s32.totalorder %s383, 1
        %s385 = scalar_select %p384, %s383, 1
        %s386 = smul.addr %s385, 8
        %s387 = scalar_lea.vmem %s4, %s386
        %s388 = smul.u32 %s23, 2
        %s389 = sadd.s32 %s388, %s24
        %v390 = vld [vmem:[%s361] sm:$0xff]
        %v391 = vld [vmem:[%s361 + $0x8] sm:$0xff]
        %v392 = vld [vmem:[%s361 + $0x10] sm:$0xff]
        %v393 = vld [vmem:[%s361 + $0x18] sm:$0xff]
        %v394 = vld [vmem:[%s361 + $0x20] sm:$0xff]
        %v395 = vld [vmem:[%s361 + $0x28] sm:$0xff]
        %v396 = vld [vmem:[%s361 + $0x30] sm:$0xff]
        %v397 = vld [vmem:[%s361 + $0x38] sm:$0xff]
        %v398 = vld [vmem:[%s361 + $0x40] sm:$0xff]
        %v399 = vld [vmem:[%s361 + $0x48] sm:$0xff]
        %v400 = vld [vmem:[%s361 + $0x50] sm:$0xff]
        %v401 = vld [vmem:[%s361 + $0x58] sm:$0xff]
        %v402 = vld [vmem:[%s361 + $0x60] sm:$0xff]
        %v403 = vld [vmem:[%s361 + $0x68] sm:$0xff]
        %v404 = vld [vmem:[%s361 + $0x70] sm:$0xff]
        %v405 = vld [vmem:[%s361 + $0x78] sm:$0xff]
        %v406 = vld [vmem:[%s361 + $0x80] sm:$0xff]
        %v407 = vld [vmem:[%s361 + $0x88] sm:$0xff]
        %v408 = vld [vmem:[%s361 + $0x90] sm:$0xff]
        %v409 = vld [vmem:[%s361 + $0x98] sm:$0xff]
        %v410 = vld [vmem:[%s361 + $0xa0] sm:$0xff]
        %v411 = vld [vmem:[%s361 + $0xa8] sm:$0xff]
        %v412 = vld [vmem:[%s361 + $0xb0] sm:$0xff]
        %v413 = vld [vmem:[%s361 + $0xb8] sm:$0xff]
        %v414 = vld [vmem:[%s361 + $0xc0] sm:$0xff]
        %v415 = vld [vmem:[%s361 + $0xc8] sm:$0xff]
        %v416 = vld [vmem:[%s361 + $0xd0] sm:$0xff]
        %v417 = vld [vmem:[%s361 + $0xd8] sm:$0xff]
        %v418 = vld [vmem:[%s361 + $0xe0] sm:$0xff]
        %v419 = vld [vmem:[%s361 + $0xe8] sm:$0xff]
        %v420 = vld [vmem:[%s361 + $0xf0] sm:$0xff]
        %v421 = vld [vmem:[%s361 + $0xf8] sm:$0xff]
        %v422 = vld [vmem:[%s361 + $0x100] sm:$0xff]
        %v423 = vld [vmem:[%s361 + $0x108] sm:$0xff]
        %v424 = vld [vmem:[%s361 + $0x110] sm:$0xff]
        %v425 = vld [vmem:[%s361 + $0x118] sm:$0xff]
        %v426 = vld [vmem:[%s361 + $0x120] sm:$0xff]
        %v427 = vld [vmem:[%s361 + $0x128] sm:$0xff]
        %v428 = vld [vmem:[%s361 + $0x130] sm:$0xff]
        %v429 = vld [vmem:[%s361 + $0x138] sm:$0xff]
        %v430 = vld [vmem:[%s361 + $0x140] sm:$0xff]
        %v431 = vld [vmem:[%s361 + $0x148] sm:$0xff]
        %v432 = vld [vmem:[%s361 + $0x150] sm:$0xff]
        %v433 = vld [vmem:[%s361 + $0x158] sm:$0xff]
        %v434 = vld [vmem:[%s361 + $0x160] sm:$0xff]
        %v435 = vld [vmem:[%s361 + $0x168] sm:$0xff]
        %v436 = vld [vmem:[%s361 + $0x170] sm:$0xff]
        %v437 = vld [vmem:[%s361 + $0x178] sm:$0xff]
        %v438 = vld [vmem:[%s361 + $0x180] sm:$0xff]
        %v439 = vld [vmem:[%s361 + $0x188] sm:$0xff]
        %v440 = vld [vmem:[%s361 + $0x190] sm:$0xff]
        %v441 = vld [vmem:[%s361 + $0x198] sm:$0xff]
        %v442 = vld [vmem:[%s361 + $0x1a0] sm:$0xff]
        %v443 = vld [vmem:[%s361 + $0x1a8] sm:$0xff]
        %v444 = vld [vmem:[%s361 + $0x1b0] sm:$0xff]
        %v445 = vld [vmem:[%s361 + $0x1b8] sm:$0xff]
        %v446 = vld [vmem:[%s361 + $0x1c0] sm:$0xff]
        %v447 = vld [vmem:[%s361 + $0x1c8] sm:$0xff]
        %v448 = vld [vmem:[%s361 + $0x1d0] sm:$0xff]
        %v449 = vld [vmem:[%s361 + $0x1d8] sm:$0xff]
        %v450 = vld [vmem:[%s361 + $0x1e0] sm:$0xff]
        %v451 = vld [vmem:[%s361 + $0x1e8] sm:$0xff]
        %v452 = vld [vmem:[%s361 + $0x1f0] sm:$0xff]
        %v453 = vld [vmem:[%s361 + $0x1f8] sm:$0xff]
        %v454 = vld [vmem:[%s361 + $0x200] sm:$0xff]
        %v455 = vld [vmem:[%s361 + $0x208] sm:$0xff]
        %v456 = vld [vmem:[%s361 + $0x210] sm:$0xff]
        %v457 = vld [vmem:[%s361 + $0x218] sm:$0xff]
        %v458 = vld [vmem:[%s361 + $0x220] sm:$0xff]
        %v459 = vld [vmem:[%s361 + $0x228] sm:$0xff]
        %v460 = vld [vmem:[%s361 + $0x230] sm:$0xff]
        %v461 = vld [vmem:[%s361 + $0x238] sm:$0xff]
        %v462 = vld [vmem:[%s361 + $0x240] sm:$0xff]
        %v463 = vld [vmem:[%s361 + $0x248] sm:$0xff]
        %v464 = vld [vmem:[%s361 + $0x250] sm:$0xff]
        %v465 = vld [vmem:[%s300] sm:$0xff]
        %v466 = vld [vmem:[%s300 + $0x8] sm:$0xff]
        %v467 = vld [vmem:[%s300 + $0x10] sm:$0xff]
        %v468 = vld [vmem:[%s300 + $0x18] sm:$0xff]
        %v469 = vld [vmem:[%s300 + $0x20] sm:$0xff]
        %v470 = vld [vmem:[%s300 + $0x28] sm:$0xff]
        %v471 = vld [vmem:[%s300 + $0x30] sm:$0xff]
        %v472 = vld [vmem:[%s300 + $0x38] sm:$0xff]
        %v473 = vld [vmem:[%s300 + $0x40] sm:$0xff]
        %v474 = vld [vmem:[%s300 + $0x48] sm:$0xff]
        %v475 = vld [vmem:[%s300 + $0x50] sm:$0xff]
        %v476 = vld [vmem:[%s300 + $0x58] sm:$0xff]
        %v477 = vld [vmem:[%s300 + $0x60] sm:$0xff]
        %v478 = vld [vmem:[%s300 + $0x68] sm:$0xff]
        %v479 = vld [vmem:[%s300 + $0x70] sm:$0xff]
        %v480 = vld [vmem:[%s300 + $0x78] sm:$0xff]
        %vm481 = vcmask 261120
        %v483 = vsel %vm481, %v390, 0
        %v486 = vsel %vm481, %v391, 0
        %v489 = vsel %vm481, %v392, 0
        %v492 = vsel %vm481, %v393, 0
        %v495 = vsel %vm481, %v394, 0
        %v498 = vsel %vm481, %v395, 0
        %v501 = vsel %vm481, %v396, 0
        %v504 = vsel %vm481, %v397, 0
        %v507 = vsel %vm481, %v398, 0
        %v510 = vsel %vm481, %v399, 0
        %v513 = vsel %vm481, %v400, 0
        %v516 = vsel %vm481, %v401, 0
        %v519 = vsel %vm481, %v402, 0
        %v522 = vsel %vm481, %v403, 0
        %v525 = vsel %vm481, %v404, 0
        %v528 = vsel %vm481, %v405, 0
        %v531 = vsel %vm481, %v406, 0
        %v534 = vsel %vm481, %v407, 0
        %v537 = vsel %vm481, %v408, 0
        %v540 = vsel %vm481, %v409, 0
        %v543 = vsel %vm481, %v410, 0
        %v546 = vsel %vm481, %v411, 0
        %v549 = vsel %vm481, %v412, 0
        %v552 = vsel %vm481, %v413, 0
        %v555 = vsel %vm481, %v414, 0
        %v558 = vsel %vm481, %v415, 0
        %v561 = vsel %vm481, %v416, 0
        %v564 = vsel %vm481, %v417, 0
        %v567 = vsel %vm481, %v418, 0
        %v570 = vsel %vm481, %v419, 0
        %v573 = vsel %vm481, %v420, 0
        %v576 = vsel %vm481, %v421, 0
        %v579 = vsel %vm481, %v422, 0
        %v582 = vsel %vm481, %v423, 0
        %v585 = vsel %vm481, %v424, 0
        %v588 = vsel %vm481, %v425, 0
        %v591 = vsel %vm481, %v426, 0
        %v594 = vsel %vm481, %v427, 0
        %v597 = vsel %vm481, %v428, 0
        %v600 = vsel %vm481, %v429, 0
        %v603 = vsel %vm481, %v430, 0
        %v606 = vsel %vm481, %v431, 0
        %v609 = vsel %vm481, %v432, 0
        %v612 = vsel %vm481, %v433, 0
        %v615 = vsel %vm481, %v434, 0
        %v618 = vsel %vm481, %v435, 0
        %v621 = vsel %vm481, %v436, 0
        %v624 = vsel %vm481, %v437, 0
        %v627 = vsel %vm481, %v438, 0
        %v630 = vsel %vm481, %v439, 0
        %v633 = vsel %vm481, %v440, 0
        %v636 = vsel %vm481, %v441, 0
        %v639 = vsel %vm481, %v442, 0
        %v642 = vsel %vm481, %v443, 0
        %v645 = vsel %vm481, %v444, 0
        %v648 = vsel %vm481, %v445, 0
        %v651 = vsel %vm481, %v446, 0
        %v654 = vsel %vm481, %v447, 0
        %v657 = vsel %vm481, %v448, 0
        %v660 = vsel %vm481, %v449, 0
        %v663 = vsel %vm481, %v450, 0
        %v666 = vsel %vm481, %v451, 0
        %v669 = vsel %vm481, %v452, 0
        %v672 = vsel %vm481, %v453, 0
        %v675 = vsel %vm481, %v454, 0
        %v678 = vsel %vm481, %v455, 0
        %v681 = vsel %vm481, %v456, 0
        %v684 = vsel %vm481, %v457, 0
        %v687 = vsel %vm481, %v458, 0
        %v690 = vsel %vm481, %v459, 0
        %v693 = vsel %vm481, %v460, 0
        %v696 = vsel %vm481, %v461, 0
        %v699 = vsel %vm481, %v462, 0
        %v702 = vsel %vm481, %v463, 0
        %v705 = vsel %vm481, %v464, 0
        %707 = vmatprep.subr.mxu0 %v466
        %708 = vmatpush1.msra.mxu0 %v465
        %709 = vmatprep.subr.mxu0 %v470
        %710 = vmatpush1.msra.mxu0 %v469
        %711 = vmatprep.subr.mxu0 %v474
        %712 = vmatpush1.msra.mxu0 %v473
        %713 = vmatprep.subr.mxu0 %v478
        %714 = vmatpush1.msra.mxu0 %v477
        %715 = vmatprep.subr.mxu0 0.0
        %716 = vmatpush1.msra.mxu0 0.0
        %717 = vmatprep.subr.mxu0 0.0
        %718 = vmatpush1.msra.mxu0 0.0
        %719 = vmatprep.subr.mxu0 0.0
        %720 = vmatpush1.msra.mxu0 0.0
        %721 = vmatprep.subr.mxu0 0.0
        %722 = vmatpush1.msra.mxu0 0.0
        %723 = vmatprep.subr.mxu0 0.0
        %724 = vmatpush1.msra.mxu0 0.0
        %725 = vmatprep.subr.mxu0 0.0
        %726 = vmatpush1.msra.mxu0 0.0
        %727 = vmatprep.subr.mxu0 0.0
        %728 = vmatpush1.msra.mxu0 0.0
        %729 = vmatprep.subr.mxu0 0.0
        %730 = vmatpush1.msra.mxu0 0.0
        %731 = vmatprep.subr.mxu0 0.0
        %732 = vmatpush1.msra.mxu0 0.0
        %733 = vmatprep.subr.mxu0 0.0
        %734 = vmatpush1.msra.mxu0 0.0
        %735 = vmatprep.subr.mxu0 0.0
        %736 = vmatpush1.msra.mxu0 0.0
        %737 = vmatprep.subr.mxu0 0.0
        %738 = vmatpush1.msra.mxu0 0.0
        %739 = vmatprep.subr.mxu0 0.0
        %740 = vmatpush1.msra.mxu0 0.0
        %741 = vmatprep.subr.mxu0 0.0
        %742 = vmatpush1.msra.mxu0 0.0
        %743 = vmatprep.subr.mxu0 0.0
        %744 = vmatpush1.msra.mxu0 0.0
        %745 = vmatprep.subr.mxu0 0.0
        %746 = vmatpush1.msra.mxu0 0.0
        %747 = vmatprep.subr.mxu0 0.0
        %748 = vmatpush1.msra.mxu0 0.0
        %749 = vmatprep.subr.mxu0 0.0
        %750 = vmatpush1.msra.mxu0 0.0
        %751 = vmatprep.subr.mxu0 0.0
        %752 = vmatpush1.msra.mxu0 0.0
        %753 = vmatprep.subr.mxu0 0.0
        %754 = vmatpush1.msra.mxu0 0.0
        %755 = vmatprep.subr.mxu0 0.0
        %756 = vmatpush1.msra.mxu0 0.0
        %757 = vmatprep.subr.mxu0 0.0
        %758 = vmatpush1.msra.mxu0 0.0
        %759 = vmatprep.subr.mxu0 0.0
        %760 = vmatpush1.msra.mxu0 0.0
        %761 = vmatprep.subr.mxu0 0.0
        %762 = vmatpush1.msra.mxu0 0.0
        %763 = vmatprep.subr.mxu0 0.0
        %764 = vmatpush1.msra.mxu0 0.0
        %765 = vmatprep.subr.mxu0 0.0
        %766 = vmatpush1.msra.mxu0 0.0
        %767 = vmatprep.subr.mxu0 0.0
        %768 = vmatpush1.msra.mxu0 0.0
        %769 = vmatprep.subr.mxu0 0.0
        %770 = vmatpush1.msra.mxu0 0.0
        %771 = vmatprep.mubr.f32.mxu0 0.0
        %772 = vmatmul.mubr.f32.gmra.mrb[0].mxu0 %v483
        %v773 = vpop.f32.mrb[0].mxu0
        %v774 = vadd.f32 0.0, %v773
        %v775 = vpop.f32.mrb[0].mxu0
        %v776 = vadd.f32 0.0, %v775
        %777 = vmatprep.mubr.f32.mxu0 0.0
        %778 = vmatmul.mubr.f32.gmra.mrb[0].mxu0 %v486
        %v779 = vpop.f32.mrb[0].mxu0
        %v780 = vadd.f32 0.0, %v779
        %v781 = vpop.f32.mrb[0].mxu0
        %v782 = vadd.f32 0.0, %v781
        %783 = vmatprep.mubr.f32.mxu0 0.0
        %784 = vmatmul.mubr.f32.gmra.mrb[0].mxu0 %v489
        %v785 = vpop.f32.mrb[0].mxu0
        %v786 = vadd.f32 0.0, %v785
        %v787 = vpop.f32.mrb[0].mxu0
        %v788 = vadd.f32 0.0, %v787
        %789 = vmatprep.mubr.f32.mxu0 0.0
        %790 = vmatmul.mubr.f32.gmra.mrb[0].mxu0 %v492
        %v791 = vpop.f32.mrb[0].mxu0
        %v792 = vadd.f32 0.0, %v791
        %v793 = vpop.f32.mrb[0].mxu0
        %v794 = vadd.f32 0.0, %v793
        %795 = vmatprep.mubr.f32.mxu0 0.0
        %796 = vmatmul.mubr.f32.gmra.mrb[0].mxu0 %v495
        %v797 = vpop.f32.mrb[0].mxu0
        %v798 = vadd.f32 0.0, %v797
        %v799 = vpop.f32.mrb[0].mxu0
        %v800 = vadd.f32 0.0, %v799
        %801 = vmatprep.mubr.f32.mxu0 0.0
        %802 = vmatmul.mubr.f32.gmra.mrb[0].mxu0 %v498
        %v803 = vpop.f32.mrb[0].mxu0
        %v804 = vadd.f32 0.0, %v803
        %v805 = vpop.f32.mrb[0].mxu0
        %v806 = vadd.f32 0.0, %v805
        %807 = vmatprep.mubr.f32.mxu0 0.0
        %808 = vmatmul.mubr.f32.gmra.mrb[0].mxu0 %v501
        %v809 = vpop.f32.mrb[0].mxu0
        %v810 = vadd.f32 0.0, %v809
        %v811 = vpop.f32.mrb[0].mxu0
        %v812 = vadd.f32 0.0, %v811
        %813 = vmatprep.mubr.f32.mxu0 0.0
        %814 = vmatmul.mubr.f32.gmra.mrb[0].mxu0 %v504
        %v815 = vpop.f32.mrb[0].mxu0
        %v816 = vadd.f32 0.0, %v815
        %v817 = vpop.f32.mrb[0].mxu0
        %v818 = vadd.f32 0.0, %v817
        %819 = vmatprep.mubr.f32.mxu0 0.0
        %820 = vmatmul.mubr.f32.gmra.mrb[0].mxu0 %v507
        %v821 = vpop.f32.mrb[0].mxu0
        %v822 = vadd.f32 0.0, %v821
        %v823 = vpop.f32.mrb[0].mxu0
        %v824 = vadd.f32 0.0, %v823
        %825 = vmatprep.mubr.f32.mxu0 0.0
        %826 = vmatmul.mubr.f32.gmra.mrb[0].mxu0 %v510
        %v827 = vpop.f32.mrb[0].mxu0
        %v828 = vadd.f32 0.0, %v827
        %v829 = vpop.f32.mrb[0].mxu0
        %v830 = vadd.f32 0.0, %v829
        %831 = vmatprep.mubr.f32.mxu0 0.0
        %832 = vmatmul.mubr.f32.gmra.mrb[0].mxu0 %v513
        %v833 = vpop.f32.mrb[0].mxu0
        %v834 = vadd.f32 0.0, %v833
        %v835 = vpop.f32.mrb[0].mxu0
        %v836 = vadd.f32 0.0, %v835
        %837 = vmatprep.mubr.f32.mxu0 0.0
        %838 = vmatmul.mubr.f32.gmra.mrb[0].mxu0 %v516
        %v839 = vpop.f32.mrb[0].mxu0
        %v840 = vadd.f32 0.0, %v839
        %v841 = vpop.f32.mrb[0].mxu0
        %v842 = vadd.f32 0.0, %v841
        %843 = vmatprep.mubr.f32.mxu0 0.0
        %844 = vmatmul.mubr.f32.gmra.mrb[0].mxu0 %v519
        %v845 = vpop.f32.mrb[0].mxu0
        %v846 = vadd.f32 0.0, %v845
        %v847 = vpop.f32.mrb[0].mxu0
        %v848 = vadd.f32 0.0, %v847
        %849 = vmatprep.mubr.f32.mxu0 0.0
        %850 = vmatmul.mubr.f32.gmra.mrb[0].mxu0 %v522
        %v851 = vpop.f32.mrb[0].mxu0
        %v852 = vadd.f32 0.0, %v851
        %v853 = vpop.f32.mrb[0].mxu0
        %v854 = vadd.f32 0.0, %v853
        %855 = vmatprep.mubr.f32.mxu0 0.0
        %856 = vmatmul.mubr.f32.gmra.mrb[0].mxu0 %v525
        %v857 = vpop.f32.mrb[0].mxu0
        %v858 = vadd.f32 0.0, %v857
        %v859 = vpop.f32.mrb[0].mxu0
        %v860 = vadd.f32 0.0, %v859
        %861 = vmatprep.mubr.f32.mxu0 0.0
        %862 = vmatmul.mubr.f32.gmra.mrb[0].mxu0 %v528
        %v863 = vpop.f32.mrb[0].mxu0
        %v864 = vadd.f32 0.0, %v863
        %v865 = vpop.f32.mrb[0].mxu0
        %v866 = vadd.f32 0.0, %v865
        %867 = vmatprep.mubr.f32.mxu0 0.0
        %868 = vmatmul.mubr.f32.gmra.mrb[0].mxu0 %v531
        %v869 = vpop.f32.mrb[0].mxu0
        %v870 = vadd.f32 0.0, %v869
        %v871 = vpop.f32.mrb[0].mxu0
        %v872 = vadd.f32 0.0, %v871
        %873 = vmatprep.mubr.f32.mxu0 0.0
        %874 = vmatmul.mubr.f32.gmra.mrb[0].mxu0 %v534
        %v875 = vpop.f32.mrb[0].mxu0
        %v876 = vadd.f32 0.0, %v875
        %v877 = vpop.f32.mrb[0].mxu0
        %v878 = vadd.f32 0.0, %v877
        %879 = vmatprep.mubr.f32.mxu0 0.0
        %880 = vmatmul.mubr.f32.gmra.mrb[0].mxu0 %v537
        %v881 = vpop.f32.mrb[0].mxu0
        %v882 = vadd.f32 0.0, %v881
        %v883 = vpop.f32.mrb[0].mxu0
        %v884 = vadd.f32 0.0, %v883
        %885 = vmatprep.mubr.f32.mxu0 0.0
        %886 = vmatmul.mubr.f32.gmra.mrb[0].mxu0 %v540
        %v887 = vpop.f32.mrb[0].mxu0
        %v888 = vadd.f32 0.0, %v887
        %v889 = vpop.f32.mrb[0].mxu0
        %v890 = vadd.f32 0.0, %v889
        %891 = vmatprep.mubr.f32.mxu0 0.0
        %892 = vmatmul.mubr.f32.gmra.mrb[0].mxu0 %v543
        %v893 = vpop.f32.mrb[0].mxu0
        %v894 = vadd.f32 0.0, %v893
        %v895 = vpop.f32.mrb[0].mxu0
        %v896 = vadd.f32 0.0, %v895
        %897 = vmatprep.mubr.f32.mxu0 0.0
        %898 = vmatmul.mubr.f32.gmra.mrb[0].mxu0 %v546
        %v899 = vpop.f32.mrb[0].mxu0
        %v900 = vadd.f32 0.0, %v899
        %v901 = vpop.f32.mrb[0].mxu0
        %v902 = vadd.f32 0.0, %v901
        %903 = vmatprep.mubr.f32.mxu0 0.0
        %904 = vmatmul.mubr.f32.gmra.mrb[0].mxu0 %v549
        %v905 = vpop.f32.mrb[0].mxu0
        %v906 = vadd.f32 0.0, %v905
        %v907 = vpop.f32.mrb[0].mxu0
        %v908 = vadd.f32 0.0, %v907
        %909 = vmatprep.mubr.f32.mxu0 0.0
        %910 = vmatmul.mubr.f32.gmra.mrb[0].mxu0 %v552
        %v911 = vpop.f32.mrb[0].mxu0
        %v912 = vadd.f32 0.0, %v911
        %v913 = vpop.f32.mrb[0].mxu0
        %v914 = vadd.f32 0.0, %v913
        %915 = vmatprep.mubr.f32.mxu0 0.0
        %916 = vmatmul.mubr.f32.gmra.mrb[0].mxu0 %v555
        %v917 = vpop.f32.mrb[0].mxu0
        %v918 = vadd.f32 0.0, %v917
        %v919 = vpop.f32.mrb[0].mxu0
        %v920 = vadd.f32 0.0, %v919
        %921 = vmatprep.mubr.f32.mxu0 0.0
        %922 = vmatmul.mubr.f32.gmra.mrb[0].mxu0 %v558
        %v923 = vpop.f32.mrb[0].mxu0
        %v924 = vadd.f32 0.0, %v923
        %v925 = vpop.f32.mrb[0].mxu0
        %v926 = vadd.f32 0.0, %v925
        %927 = vmatprep.mubr.f32.mxu0 0.0
        %928 = vmatmul.mubr.f32.gmra.mrb[0].mxu0 %v561
        %v929 = vpop.f32.mrb[0].mxu0
        %v930 = vadd.f32 0.0, %v929
        %v931 = vpop.f32.mrb[0].mxu0
        %v932 = vadd.f32 0.0, %v931
        %933 = vmatprep.mubr.f32.mxu0 0.0
        %934 = vmatmul.mubr.f32.gmra.mrb[0].mxu0 %v564
        %v935 = vpop.f32.mrb[0].mxu0
        %v936 = vadd.f32 0.0, %v935
        %v937 = vpop.f32.mrb[0].mxu0
        %v938 = vadd.f32 0.0, %v937
        %939 = vmatprep.mubr.f32.mxu0 0.0
        %940 = vmatmul.mubr.f32.gmra.mrb[0].mxu0 %v567
        %v941 = vpop.f32.mrb[0].mxu0
        %v942 = vadd.f32 0.0, %v941
        %v943 = vpop.f32.mrb[0].mxu0
        %v944 = vadd.f32 0.0, %v943
        %945 = vmatprep.mubr.f32.mxu0 0.0
        %946 = vmatmul.mubr.f32.gmra.mrb[0].mxu0 %v570
        %v947 = vpop.f32.mrb[0].mxu0
        %v948 = vadd.f32 0.0, %v947
        %v949 = vpop.f32.mrb[0].mxu0
        %v950 = vadd.f32 0.0, %v949
        %951 = vmatprep.mubr.f32.mxu0 0.0
        %952 = vmatmul.mubr.f32.gmra.mrb[0].mxu0 %v573
        %v953 = vpop.f32.mrb[0].mxu0
        %v954 = vadd.f32 0.0, %v953
        %v955 = vpop.f32.mrb[0].mxu0
        %v956 = vadd.f32 0.0, %v955
        %957 = vmatprep.mubr.f32.mxu0 0.0
        %958 = vmatmul.mubr.f32.gmra.mrb[0].mxu0 %v576
        %v959 = vpop.f32.mrb[0].mxu0
        %v960 = vadd.f32 0.0, %v959
        %v961 = vpop.f32.mrb[0].mxu0
        %v962 = vadd.f32 0.0, %v961
        %963 = vmatprep.mubr.f32.mxu0 0.0
        %964 = vmatmul.mubr.f32.gmra.mrb[0].mxu0 %v579
        %v965 = vpop.f32.mrb[0].mxu0
        %v966 = vadd.f32 0.0, %v965
        %v967 = vpop.f32.mrb[0].mxu0
        %v968 = vadd.f32 0.0, %v967
        %969 = vmatprep.mubr.f32.mxu0 0.0
        %970 = vmatmul.mubr.f32.gmra.mrb[0].mxu0 %v582
        %v971 = vpop.f32.mrb[0].mxu0
        %v972 = vadd.f32 0.0, %v971
        %v973 = vpop.f32.mrb[0].mxu0
        %v974 = vadd.f32 0.0, %v973
        %975 = vmatprep.mubr.f32.mxu0 0.0
        %976 = vmatmul.mubr.f32.gmra.mrb[0].mxu0 %v585
        %v977 = vpop.f32.mrb[0].mxu0
        %v978 = vadd.f32 0.0, %v977
        %v979 = vpop.f32.mrb[0].mxu0
        %v980 = vadd.f32 0.0, %v979
        %981 = vmatprep.mubr.f32.mxu0 0.0
        %982 = vmatmul.mubr.f32.gmra.mrb[0].mxu0 %v588
        %v983 = vpop.f32.mrb[0].mxu0
        %v984 = vadd.f32 0.0, %v983
        %v985 = vpop.f32.mrb[0].mxu0
        %v986 = vadd.f32 0.0, %v985
        %987 = vmatprep.mubr.f32.mxu0 0.0
        %988 = vmatmul.mubr.f32.gmra.mrb[0].mxu0 %v591
        %v989 = vpop.f32.mrb[0].mxu0
        %v990 = vadd.f32 0.0, %v989
        %v991 = vpop.f32.mrb[0].mxu0
        %v992 = vadd.f32 0.0, %v991
        %993 = vmatprep.mubr.f32.mxu0 0.0
        %994 = vmatmul.mubr.f32.gmra.mrb[0].mxu0 %v594
        %v995 = vpop.f32.mrb[0].mxu0
        %v996 = vadd.f32 0.0, %v995
        %v997 = vpop.f32.mrb[0].mxu0
        %v998 = vadd.f32 0.0, %v997
        %999 = vmatprep.mubr.f32.mxu0 0.0
        %1000 = vmatmul.mubr.f32.gmra.mrb[0].mxu0 %v597
        %v1001 = vpop.f32.mrb[0].mxu0
        %v1002 = vadd.f32 0.0, %v1001
        %v1003 = vpop.f32.mrb[0].mxu0
        %v1004 = vadd.f32 0.0, %v1003
        %1005 = vmatprep.mubr.f32.mxu0 0.0
        %1006 = vmatmul.mubr.f32.gmra.mrb[0].mxu0 %v600
        %v1007 = vpop.f32.mrb[0].mxu0
        %v1008 = vadd.f32 0.0, %v1007
        %v1009 = vpop.f32.mrb[0].mxu0
        %v1010 = vadd.f32 0.0, %v1009
        %1011 = vmatprep.mubr.f32.mxu0 0.0
        %1012 = vmatmul.mubr.f32.gmra.mrb[0].mxu0 %v603
        %v1013 = vpop.f32.mrb[0].mxu0
        %v1014 = vadd.f32 0.0, %v1013
        %v1015 = vpop.f32.mrb[0].mxu0
        %v1016 = vadd.f32 0.0, %v1015
        %1017 = vmatprep.mubr.f32.mxu0 0.0
        %1018 = vmatmul.mubr.f32.gmra.mrb[0].mxu0 %v606
        %v1019 = vpop.f32.mrb[0].mxu0
        %v1020 = vadd.f32 0.0, %v1019
        %v1021 = vpop.f32.mrb[0].mxu0
        %v1022 = vadd.f32 0.0, %v1021
        %1023 = vmatprep.mubr.f32.mxu0 0.0
        %1024 = vmatmul.mubr.f32.gmra.mrb[0].mxu0 %v609
        %v1025 = vpop.f32.mrb[0].mxu0
        %v1026 = vadd.f32 0.0, %v1025
        %v1027 = vpop.f32.mrb[0].mxu0
        %v1028 = vadd.f32 0.0, %v1027
        %1029 = vmatprep.mubr.f32.mxu0 0.0
        %1030 = vmatmul.mubr.f32.gmra.mrb[0].mxu0 %v612
        %v1031 = vpop.f32.mrb[0].mxu0
        %v1032 = vadd.f32 0.0, %v1031
        %v1033 = vpop.f32.mrb[0].mxu0
        %v1034 = vadd.f32 0.0, %v1033
        %1035 = vmatprep.mubr.f32.mxu0 0.0
        %1036 = vmatmul.mubr.f32.gmra.mrb[0].mxu0 %v615
        %v1037 = vpop.f32.mrb[0].mxu0
        %v1038 = vadd.f32 0.0, %v1037
        %v1039 = vpop.f32.mrb[0].mxu0
        %v1040 = vadd.f32 0.0, %v1039
        %1041 = vmatprep.mubr.f32.mxu0 0.0
        %1042 = vmatmul.mubr.f32.gmra.mrb[0].mxu0 %v618
        %v1043 = vpop.f32.mrb[0].mxu0
        %v1044 = vadd.f32 0.0, %v1043
        %v1045 = vpop.f32.mrb[0].mxu0
        %v1046 = vadd.f32 0.0, %v1045
        %1047 = vmatprep.mubr.f32.mxu0 0.0
        %1048 = vmatmul.mubr.f32.gmra.mrb[0].mxu0 %v621
        %v1049 = vpop.f32.mrb[0].mxu0
        %v1050 = vadd.f32 0.0, %v1049
        %v1051 = vpop.f32.mrb[0].mxu0
        %v1052 = vadd.f32 0.0, %v1051
        %1053 = vmatprep.mubr.f32.mxu0 0.0
        %1054 = vmatmul.mubr.f32.gmra.mrb[0].mxu0 %v624
        %v1055 = vpop.f32.mrb[0].mxu0
        %v1056 = vadd.f32 0.0, %v1055
        %v1057 = vpop.f32.mrb[0].mxu0
        %v1058 = vadd.f32 0.0, %v1057
        %1059 = vmatprep.mubr.f32.mxu0 0.0
        %1060 = vmatmul.mubr.f32.gmra.mrb[0].mxu0 %v627
        %v1061 = vpop.f32.mrb[0].mxu0
        %v1062 = vadd.f32 0.0, %v1061
        %v1063 = vpop.f32.mrb[0].mxu0
        %v1064 = vadd.f32 0.0, %v1063
        %1065 = vmatprep.mubr.f32.mxu0 0.0
        %1066 = vmatmul.mubr.f32.gmra.mrb[0].mxu0 %v630
        %v1067 = vpop.f32.mrb[0].mxu0
        %v1068 = vadd.f32 0.0, %v1067
        %v1069 = vpop.f32.mrb[0].mxu0
        %v1070 = vadd.f32 0.0, %v1069
        %1071 = vmatprep.mubr.f32.mxu0 0.0
        %1072 = vmatmul.mubr.f32.gmra.mrb[0].mxu0 %v633
        %v1073 = vpop.f32.mrb[0].mxu0
        %v1074 = vadd.f32 0.0, %v1073
        %v1075 = vpop.f32.mrb[0].mxu0
        %v1076 = vadd.f32 0.0, %v1075
        %1077 = vmatprep.mubr.f32.mxu0 0.0
        %1078 = vmatmul.mubr.f32.gmra.mrb[0].mxu0 %v636
        %v1079 = vpop.f32.mrb[0].mxu0
        %v1080 = vadd.f32 0.0, %v1079
        %v1081 = vpop.f32.mrb[0].mxu0
        %v1082 = vadd.f32 0.0, %v1081
        %1083 = vmatprep.mubr.f32.mxu0 0.0
        %1084 = vmatmul.mubr.f32.gmra.mrb[0].mxu0 %v639
        %v1085 = vpop.f32.mrb[0].mxu0
        %v1086 = vadd.f32 0.0, %v1085
        %v1087 = vpop.f32.mrb[0].mxu0
        %v1088 = vadd.f32 0.0, %v1087
        %1089 = vmatprep.mubr.f32.mxu0 0.0
        %1090 = vmatmul.mubr.f32.gmra.mrb[0].mxu0 %v642
        %v1091 = vpop.f32.mrb[0].mxu0
        %v1092 = vadd.f32 0.0, %v1091
        %v1093 = vpop.f32.mrb[0].mxu0
        %v1094 = vadd.f32 0.0, %v1093
        %1095 = vmatprep.mubr.f32.mxu0 0.0
        %1096 = vmatmul.mubr.f32.gmra.mrb[0].mxu0 %v645
        %v1097 = vpop.f32.mrb[0].mxu0
        %v1098 = vadd.f32 0.0, %v1097
        %v1099 = vpop.f32.mrb[0].mxu0
        %v1100 = vadd.f32 0.0, %v1099
        %1101 = vmatprep.mubr.f32.mxu0 0.0
        %1102 = vmatmul.mubr.f32.gmra.mrb[0].mxu0 %v648
        %v1103 = vpop.f32.mrb[0].mxu0
        %v1104 = vadd.f32 0.0, %v1103
        %v1105 = vpop.f32.mrb[0].mxu0
        %v1106 = vadd.f32 0.0, %v1105
        %1107 = vmatprep.mubr.f32.mxu0 0.0
        %1108 = vmatmul.mubr.f32.gmra.mrb[0].mxu0 %v651
        %v1109 = vpop.f32.mrb[0].mxu0
        %v1110 = vadd.f32 0.0, %v1109
        %v1111 = vpop.f32.mrb[0].mxu0
        %v1112 = vadd.f32 0.0, %v1111
        %1113 = vmatprep.mubr.f32.mxu0 0.0
        %1114 = vmatmul.mubr.f32.gmra.mrb[0].mxu0 %v654
        %v1115 = vpop.f32.mrb[0].mxu0
        %v1116 = vadd.f32 0.0, %v1115
        %v1117 = vpop.f32.mrb[0].mxu0
        %v1118 = vadd.f32 0.0, %v1117
        %1119 = vmatprep.mubr.f32.mxu0 0.0
        %1120 = vmatmul.mubr.f32.gmra.mrb[0].mxu0 %v657
        %v1121 = vpop.f32.mrb[0].mxu0
        %v1122 = vadd.f32 0.0, %v1121
        %v1123 = vpop.f32.mrb[0].mxu0
        %v1124 = vadd.f32 0.0, %v1123
        %1125 = vmatprep.mubr.f32.mxu0 0.0
        %1126 = vmatmul.mubr.f32.gmra.mrb[0].mxu0 %v660
        %v1127 = vpop.f32.mrb[0].mxu0
        %v1128 = vadd.f32 0.0, %v1127
        %v1129 = vpop.f32.mrb[0].mxu0
        %v1130 = vadd.f32 0.0, %v1129
        %1131 = vmatprep.mubr.f32.mxu0 0.0
        %1132 = vmatmul.mubr.f32.gmra.mrb[0].mxu0 %v663
        %v1133 = vpop.f32.mrb[0].mxu0
        %v1134 = vadd.f32 0.0, %v1133
        %v1135 = vpop.f32.mrb[0].mxu0
        %v1136 = vadd.f32 0.0, %v1135
        %1137 = vmatprep.mubr.f32.mxu0 0.0
        %1138 = vmatmul.mubr.f32.gmra.mrb[0].mxu0 %v666
        %v1139 = vpop.f32.mrb[0].mxu0
        %v1140 = vadd.f32 0.0, %v1139
        %v1141 = vpop.f32.mrb[0].mxu0
        %v1142 = vadd.f32 0.0, %v1141
        %1143 = vmatprep.mubr.f32.mxu0 0.0
        %1144 = vmatmul.mubr.f32.gmra.mrb[0].mxu0 %v669
        %v1145 = vpop.f32.mrb[0].mxu0
        %v1146 = vadd.f32 0.0, %v1145
        %v1147 = vpop.f32.mrb[0].mxu0
        %v1148 = vadd.f32 0.0, %v1147
        %1149 = vmatprep.mubr.f32.mxu0 0.0
        %1150 = vmatmul.mubr.f32.gmra.mrb[0].mxu0 %v672
        %v1151 = vpop.f32.mrb[0].mxu0
        %v1152 = vadd.f32 0.0, %v1151
        %v1153 = vpop.f32.mrb[0].mxu0
        %v1154 = vadd.f32 0.0, %v1153
        %1155 = vmatprep.mubr.f32.mxu0 0.0
        %1156 = vmatmul.mubr.f32.gmra.mrb[0].mxu0 %v675
        %v1157 = vpop.f32.mrb[0].mxu0
        %v1158 = vadd.f32 0.0, %v1157
        %v1159 = vpop.f32.mrb[0].mxu0
        %v1160 = vadd.f32 0.0, %v1159
        %1161 = vmatprep.mubr.f32.mxu0 0.0
        %1162 = vmatmul.mubr.f32.gmra.mrb[0].mxu0 %v678
        %v1163 = vpop.f32.mrb[0].mxu0
        %v1164 = vadd.f32 0.0, %v1163
        %v1165 = vpop.f32.mrb[0].mxu0
        %v1166 = vadd.f32 0.0, %v1165
        %1167 = vmatprep.mubr.f32.mxu0 0.0
        %1168 = vmatmul.mubr.f32.gmra.mrb[0].mxu0 %v681
        %v1169 = vpop.f32.mrb[0].mxu0
        %v1170 = vadd.f32 0.0, %v1169
        %v1171 = vpop.f32.mrb[0].mxu0
        %v1172 = vadd.f32 0.0, %v1171
        %1173 = vmatprep.mubr.f32.mxu0 0.0
        %1174 = vmatmul.mubr.f32.gmra.mrb[0].mxu0 %v684
        %v1175 = vpop.f32.mrb[0].mxu0
        %v1176 = vadd.f32 0.0, %v1175
        %v1177 = vpop.f32.mrb[0].mxu0
        %v1178 = vadd.f32 0.0, %v1177
        %1179 = vmatprep.mubr.f32.mxu0 0.0
        %1180 = vmatmul.mubr.f32.gmra.mrb[0].mxu0 %v687
        %v1181 = vpop.f32.mrb[0].mxu0
        %v1182 = vadd.f32 0.0, %v1181
        %v1183 = vpop.f32.mrb[0].mxu0
        %v1184 = vadd.f32 0.0, %v1183
        %1185 = vmatprep.mubr.f32.mxu0 0.0
        %1186 = vmatmul.mubr.f32.gmra.mrb[0].mxu0 %v690
        %v1187 = vpop.f32.mrb[0].mxu0
        %v1188 = vadd.f32 0.0, %v1187
        %v1189 = vpop.f32.mrb[0].mxu0
        %v1190 = vadd.f32 0.0, %v1189
        %1191 = vmatprep.mubr.f32.mxu0 0.0
        %1192 = vmatmul.mubr.f32.gmra.mrb[0].mxu0 %v693
        %v1193 = vpop.f32.mrb[0].mxu0
        %v1194 = vadd.f32 0.0, %v1193
        %v1195 = vpop.f32.mrb[0].mxu0
        %v1196 = vadd.f32 0.0, %v1195
        %1197 = vmatprep.mubr.f32.mxu0 0.0
        %1198 = vmatmul.mubr.f32.gmra.mrb[0].mxu0 %v696
        %v1199 = vpop.f32.mrb[0].mxu0
        %v1200 = vadd.f32 0.0, %v1199
        %v1201 = vpop.f32.mrb[0].mxu0
        %v1202 = vadd.f32 0.0, %v1201
        %1203 = vmatprep.mubr.f32.mxu0 0.0
        %1204 = vmatmul.mubr.f32.gmra.mrb[0].mxu0 %v699
        %v1205 = vpop.f32.mrb[0].mxu0
        %v1206 = vadd.f32 0.0, %v1205
        %v1207 = vpop.f32.mrb[0].mxu0
        %v1208 = vadd.f32 0.0, %v1207
        %1209 = vmatprep.mubr.f32.mxu0 0.0
        %1210 = vmatmul.mubr.f32.gmra.mrb[0].mxu0 %v702
        %v1211 = vpop.f32.mrb[0].mxu0
        %v1212 = vadd.f32 0.0, %v1211
        %v1213 = vpop.f32.mrb[0].mxu0
        %v1214 = vadd.f32 0.0, %v1213
        %1215 = vmatprep.mubr.f32.mxu0 0.0
        %1216 = vmatmul.mubr.f32.gmra.mrb[0].mxu0 %v705
        %v1217 = vpop.f32.mrb[0].mxu0
        %v1218 = vadd.f32 0.0, %v1217
        %v1219 = vpop.f32.mrb[0].mxu0
        %v1220 = vadd.f32 0.0, %v1219
        %1221 = vdwg.mxu0
        %1222 = vmatprep.subr.mxu0 %v468
        %1223 = vmatpush1.msra.mxu0 %v467
        %1224 = vmatprep.subr.mxu0 %v472
        %1225 = vmatpush1.msra.mxu0 %v471
        %1226 = vmatprep.subr.mxu0 %v476
        %1227 = vmatpush1.msra.mxu0 %v475
        %1228 = vmatprep.subr.mxu0 %v480
        %1229 = vmatpush1.msra.mxu0 %v479
        %1230 = vmatprep.subr.mxu0 0.0
        %1231 = vmatpush1.msra.mxu0 0.0
        %1232 = vmatprep.subr.mxu0 0.0
        %1233 = vmatpush1.msra.mxu0 0.0
        %1234 = vmatprep.subr.mxu0 0.0
        %1235 = vmatpush1.msra.mxu0 0.0
        %1236 = vmatprep.subr.mxu0 0.0
        %1237 = vmatpush1.msra.mxu0 0.0
        %1238 = vmatprep.subr.mxu0 0.0
        %1239 = vmatpush1.msra.mxu0 0.0
        %1240 = vmatprep.subr.mxu0 0.0
        %1241 = vmatpush1.msra.mxu0 0.0
        %1242 = vmatprep.subr.mxu0 0.0
        %1243 = vmatpush1.msra.mxu0 0.0
        %1244 = vmatprep.subr.mxu0 0.0
        %1245 = vmatpush1.msra.mxu0 0.0
        %1246 = vmatprep.subr.mxu0 0.0
        %1247 = vmatpush1.msra.mxu0 0.0
        %1248 = vmatprep.subr.mxu0 0.0
        %1249 = vmatpush1.msra.mxu0 0.0
        %1250 = vmatprep.subr.mxu0 0.0
        %1251 = vmatpush1.msra.mxu0 0.0
        %1252 = vmatprep.subr.mxu0 0.0
        %1253 = vmatpush1.msra.mxu0 0.0
        %1254 = vmatprep.subr.mxu0 0.0
        %1255 = vmatpush1.msra.mxu0 0.0
        %1256 = vmatprep.subr.mxu0 0.0
        %1257 = vmatpush1.msra.mxu0 0.0
        %1258 = vmatprep.subr.mxu0 0.0
        %1259 = vmatpush1.msra.mxu0 0.0
        %1260 = vmatprep.subr.mxu0 0.0
        %1261 = vmatpush1.msra.mxu0 0.0
        %1262 = vmatprep.subr.mxu0 0.0
        %1263 = vmatpush1.msra.mxu0 0.0
        %1264 = vmatprep.subr.mxu0 0.0
        %1265 = vmatpush1.msra.mxu0 0.0
        %1266 = vmatprep.subr.mxu0 0.0
        %1267 = vmatpush1.msra.mxu0 0.0
        %1268 = vmatprep.subr.mxu0 0.0
        %1269 = vmatpush1.msra.mxu0 0.0
        %1270 = vmatprep.subr.mxu0 0.0
        %1271 = vmatpush1.msra.mxu0 0.0
        %1272 = vmatprep.subr.mxu0 0.0
        %1273 = vmatpush1.msra.mxu0 0.0
        %1274 = vmatprep.subr.mxu0 0.0
        %1275 = vmatpush1.msra.mxu0 0.0
        %1276 = vmatprep.subr.mxu0 0.0
        %1277 = vmatpush1.msra.mxu0 0.0
        %1278 = vmatprep.subr.mxu0 0.0
        %1279 = vmatpush1.msra.mxu0 0.0
        %1280 = vmatprep.subr.mxu0 0.0
        %1281 = vmatpush1.msra.mxu0 0.0
        %1282 = vmatprep.subr.mxu0 0.0
        %1283 = vmatpush1.msra.mxu0 0.0
        %1284 = vmatprep.subr.mxu0 0.0
        %1285 = vmatpush1.msra.mxu0 0.0
        %1286 = vmatprep.mubr.f32.mxu0 0.0
        %1287 = vmatmul.mubr.f32.gmra.mrb[0].mxu0 %v483
        %v1288 = vpop.f32.mrb[0].mxu0
        %v1289 = vadd.f32 0.0, %v1288
        %v1290 = vpop.f32.mrb[0].mxu0
        %v1291 = vadd.f32 0.0, %v1290
        %1292 = vmatprep.mubr.f32.mxu0 0.0
        %1293 = vmatmul.mubr.f32.gmra.mrb[0].mxu0 %v486
        %v1294 = vpop.f32.mrb[0].mxu0
        %v1295 = vadd.f32 0.0, %v1294
        %v1296 = vpop.f32.mrb[0].mxu0
        %v1297 = vadd.f32 0.0, %v1296
        %1298 = vmatprep.mubr.f32.mxu0 0.0
        %1299 = vmatmul.mubr.f32.gmra.mrb[0].mxu0 %v489
        %v1300 = vpop.f32.mrb[0].mxu0
        %v1301 = vadd.f32 0.0, %v1300
        %v1302 = vpop.f32.mrb[0].mxu0
        %v1303 = vadd.f32 0.0, %v1302
        %1304 = vmatprep.mubr.f32.mxu0 0.0
        %1305 = vmatmul.mubr.f32.gmra.mrb[0].mxu0 %v492
        %v1306 = vpop.f32.mrb[0].mxu0
        %v1307 = vadd.f32 0.0, %v1306
        %v1308 = vpop.f32.mrb[0].mxu0
        %v1309 = vadd.f32 0.0, %v1308
        %1310 = vmatprep.mubr.f32.mxu0 0.0
        %1311 = vmatmul.mubr.f32.gmra.mrb[0].mxu0 %v495
        %v1312 = vpop.f32.mrb[0].mxu0
        %v1313 = vadd.f32 0.0, %v1312
        %v1314 = vpop.f32.mrb[0].mxu0
        %v1315 = vadd.f32 0.0, %v1314
        %1316 = vmatprep.mubr.f32.mxu0 0.0
        %1317 = vmatmul.mubr.f32.gmra.mrb[0].mxu0 %v498
        %v1318 = vpop.f32.mrb[0].mxu0
        %v1319 = vadd.f32 0.0, %v1318
        %v1320 = vpop.f32.mrb[0].mxu0
        %v1321 = vadd.f32 0.0, %v1320
        %1322 = vmatprep.mubr.f32.mxu0 0.0
        %1323 = vmatmul.mubr.f32.gmra.mrb[0].mxu0 %v501
        %v1324 = vpop.f32.mrb[0].mxu0
        %v1325 = vadd.f32 0.0, %v1324
        %v1326 = vpop.f32.mrb[0].mxu0
        %v1327 = vadd.f32 0.0, %v1326
        %1328 = vmatprep.mubr.f32.mxu0 0.0
        %1329 = vmatmul.mubr.f32.gmra.mrb[0].mxu0 %v504
        %v1330 = vpop.f32.mrb[0].mxu0
        %v1331 = vadd.f32 0.0, %v1330
        %v1332 = vpop.f32.mrb[0].mxu0
        %v1333 = vadd.f32 0.0, %v1332
        %1334 = vmatprep.mubr.f32.mxu0 0.0
        %1335 = vmatmul.mubr.f32.gmra.mrb[0].mxu0 %v507
        %v1336 = vpop.f32.mrb[0].mxu0
        %v1337 = vadd.f32 0.0, %v1336
        %v1338 = vpop.f32.mrb[0].mxu0
        %v1339 = vadd.f32 0.0, %v1338
        %1340 = vmatprep.mubr.f32.mxu0 0.0
        %1341 = vmatmul.mubr.f32.gmra.mrb[0].mxu0 %v510
        %v1342 = vpop.f32.mrb[0].mxu0
        %v1343 = vadd.f32 0.0, %v1342
        %v1344 = vpop.f32.mrb[0].mxu0
        %v1345 = vadd.f32 0.0, %v1344
        %1346 = vmatprep.mubr.f32.mxu0 0.0
        %1347 = vmatmul.mubr.f32.gmra.mrb[0].mxu0 %v513
        %v1348 = vpop.f32.mrb[0].mxu0
        %v1349 = vadd.f32 0.0, %v1348
        %v1350 = vpop.f32.mrb[0].mxu0
        %v1351 = vadd.f32 0.0, %v1350
        %1352 = vmatprep.mubr.f32.mxu0 0.0
        %1353 = vmatmul.mubr.f32.gmra.mrb[0].mxu0 %v516
        %v1354 = vpop.f32.mrb[0].mxu0
        %v1355 = vadd.f32 0.0, %v1354
        %v1356 = vpop.f32.mrb[0].mxu0
        %v1357 = vadd.f32 0.0, %v1356
        %1358 = vmatprep.mubr.f32.mxu0 0.0
        %1359 = vmatmul.mubr.f32.gmra.mrb[0].mxu0 %v519
        %v1360 = vpop.f32.mrb[0].mxu0
        %v1361 = vadd.f32 0.0, %v1360
        %v1362 = vpop.f32.mrb[0].mxu0
        %v1363 = vadd.f32 0.0, %v1362
        %1364 = vmatprep.mubr.f32.mxu0 0.0
        %1365 = vmatmul.mubr.f32.gmra.mrb[0].mxu0 %v522
        %v1366 = vpop.f32.mrb[0].mxu0
        %v1367 = vadd.f32 0.0, %v1366
        %v1368 = vpop.f32.mrb[0].mxu0
        %v1369 = vadd.f32 0.0, %v1368
        %1370 = vmatprep.mubr.f32.mxu0 0.0
        %1371 = vmatmul.mubr.f32.gmra.mrb[0].mxu0 %v525
        %v1372 = vpop.f32.mrb[0].mxu0
        %v1373 = vadd.f32 0.0, %v1372
        %v1374 = vpop.f32.mrb[0].mxu0
        %v1375 = vadd.f32 0.0, %v1374
        %1376 = vmatprep.mubr.f32.mxu0 0.0
        %1377 = vmatmul.mubr.f32.gmra.mrb[0].mxu0 %v528
        %v1378 = vpop.f32.mrb[0].mxu0
        %v1379 = vadd.f32 0.0, %v1378
        %v1380 = vpop.f32.mrb[0].mxu0
        %v1381 = vadd.f32 0.0, %v1380
        %1382 = vmatprep.mubr.f32.mxu0 0.0
        %1383 = vmatmul.mubr.f32.gmra.mrb[0].mxu0 %v531
        %v1384 = vpop.f32.mrb[0].mxu0
        %v1385 = vadd.f32 0.0, %v1384
        %v1386 = vpop.f32.mrb[0].mxu0
        %v1387 = vadd.f32 0.0, %v1386
        %1388 = vmatprep.mubr.f32.mxu0 0.0
        %1389 = vmatmul.mubr.f32.gmra.mrb[0].mxu0 %v534
        %v1390 = vpop.f32.mrb[0].mxu0
        %v1391 = vadd.f32 0.0, %v1390
        %v1392 = vpop.f32.mrb[0].mxu0
        %v1393 = vadd.f32 0.0, %v1392
        %1394 = vmatprep.mubr.f32.mxu0 0.0
        %1395 = vmatmul.mubr.f32.gmra.mrb[0].mxu0 %v537
        %v1396 = vpop.f32.mrb[0].mxu0
        %v1397 = vadd.f32 0.0, %v1396
        %v1398 = vpop.f32.mrb[0].mxu0
        %v1399 = vadd.f32 0.0, %v1398
        %1400 = vmatprep.mubr.f32.mxu0 0.0
        %1401 = vmatmul.mubr.f32.gmra.mrb[0].mxu0 %v540
        %v1402 = vpop.f32.mrb[0].mxu0
        %v1403 = vadd.f32 0.0, %v1402
        %v1404 = vpop.f32.mrb[0].mxu0
        %v1405 = vadd.f32 0.0, %v1404
        %1406 = vmatprep.mubr.f32.mxu0 0.0
        %1407 = vmatmul.mubr.f32.gmra.mrb[0].mxu0 %v543
        %v1408 = vpop.f32.mrb[0].mxu0
        %v1409 = vadd.f32 0.0, %v1408
        %v1410 = vpop.f32.mrb[0].mxu0
        %v1411 = vadd.f32 0.0, %v1410
        %1412 = vmatprep.mubr.f32.mxu0 0.0
        %1413 = vmatmul.mubr.f32.gmra.mrb[0].mxu0 %v546
        %v1414 = vpop.f32.mrb[0].mxu0
        %v1415 = vadd.f32 0.0, %v1414
        %v1416 = vpop.f32.mrb[0].mxu0
        %v1417 = vadd.f32 0.0, %v1416
        %1418 = vmatprep.mubr.f32.mxu0 0.0
        %1419 = vmatmul.mubr.f32.gmra.mrb[0].mxu0 %v549
        %v1420 = vpop.f32.mrb[0].mxu0
        %v1421 = vadd.f32 0.0, %v1420
        %v1422 = vpop.f32.mrb[0].mxu0
        %v1423 = vadd.f32 0.0, %v1422
        %1424 = vmatprep.mubr.f32.mxu0 0.0
        %1425 = vmatmul.mubr.f32.gmra.mrb[0].mxu0 %v552
        %v1426 = vpop.f32.mrb[0].mxu0
        %v1427 = vadd.f32 0.0, %v1426
        %v1428 = vpop.f32.mrb[0].mxu0
        %v1429 = vadd.f32 0.0, %v1428
        %1430 = vmatprep.mubr.f32.mxu0 0.0
        %1431 = vmatmul.mubr.f32.gmra.mrb[0].mxu0 %v555
        %v1432 = vpop.f32.mrb[0].mxu0
        %v1433 = vadd.f32 0.0, %v1432
        %v1434 = vpop.f32.mrb[0].mxu0
        %v1435 = vadd.f32 0.0, %v1434
        %1436 = vmatprep.mubr.f32.mxu0 0.0
        %1437 = vmatmul.mubr.f32.gmra.mrb[0].mxu0 %v558
        %v1438 = vpop.f32.mrb[0].mxu0
        %v1439 = vadd.f32 0.0, %v1438
        %v1440 = vpop.f32.mrb[0].mxu0
        %v1441 = vadd.f32 0.0, %v1440
        %1442 = vmatprep.mubr.f32.mxu0 0.0
        %1443 = vmatmul.mubr.f32.gmra.mrb[0].mxu0 %v561
        %v1444 = vpop.f32.mrb[0].mxu0
        %v1445 = vadd.f32 0.0, %v1444
        %v1446 = vpop.f32.mrb[0].mxu0
        %v1447 = vadd.f32 0.0, %v1446
        %1448 = vmatprep.mubr.f32.mxu0 0.0
        %1449 = vmatmul.mubr.f32.gmra.mrb[0].mxu0 %v564
        %v1450 = vpop.f32.mrb[0].mxu0
        %v1451 = vadd.f32 0.0, %v1450
        %v1452 = vpop.f32.mrb[0].mxu0
        %v1453 = vadd.f32 0.0, %v1452
        %1454 = vmatprep.mubr.f32.mxu0 0.0
        %1455 = vmatmul.mubr.f32.gmra.mrb[0].mxu0 %v567
        %v1456 = vpop.f32.mrb[0].mxu0
        %v1457 = vadd.f32 0.0, %v1456
        %v1458 = vpop.f32.mrb[0].mxu0
        %v1459 = vadd.f32 0.0, %v1458
        %1460 = vmatprep.mubr.f32.mxu0 0.0
        %1461 = vmatmul.mubr.f32.gmra.mrb[0].mxu0 %v570
        %v1462 = vpop.f32.mrb[0].mxu0
        %v1463 = vadd.f32 0.0, %v1462
        %v1464 = vpop.f32.mrb[0].mxu0
        %v1465 = vadd.f32 0.0, %v1464
        %1466 = vmatprep.mubr.f32.mxu0 0.0
        %1467 = vmatmul.mubr.f32.gmra.mrb[0].mxu0 %v573
        %v1468 = vpop.f32.mrb[0].mxu0
        %v1469 = vadd.f32 0.0, %v1468
        %v1470 = vpop.f32.mrb[0].mxu0
        %v1471 = vadd.f32 0.0, %v1470
        %1472 = vmatprep.mubr.f32.mxu0 0.0
        %1473 = vmatmul.mubr.f32.gmra.mrb[0].mxu0 %v576
        %v1474 = vpop.f32.mrb[0].mxu0
        %v1475 = vadd.f32 0.0, %v1474
        %v1476 = vpop.f32.mrb[0].mxu0
        %v1477 = vadd.f32 0.0, %v1476
        %1478 = vmatprep.mubr.f32.mxu0 0.0
        %1479 = vmatmul.mubr.f32.gmra.mrb[0].mxu0 %v579
        %v1480 = vpop.f32.mrb[0].mxu0
        %v1481 = vadd.f32 0.0, %v1480
        %v1482 = vpop.f32.mrb[0].mxu0
        %v1483 = vadd.f32 0.0, %v1482
        %1484 = vmatprep.mubr.f32.mxu0 0.0
        %1485 = vmatmul.mubr.f32.gmra.mrb[0].mxu0 %v582
        %v1486 = vpop.f32.mrb[0].mxu0
        %v1487 = vadd.f32 0.0, %v1486
        %v1488 = vpop.f32.mrb[0].mxu0
        %v1489 = vadd.f32 0.0, %v1488
        %1490 = vmatprep.mubr.f32.mxu0 0.0
        %1491 = vmatmul.mubr.f32.gmra.mrb[0].mxu0 %v585
        %v1492 = vpop.f32.mrb[0].mxu0
        %v1493 = vadd.f32 0.0, %v1492
        %v1494 = vpop.f32.mrb[0].mxu0
        %v1495 = vadd.f32 0.0, %v1494
        %1496 = vmatprep.mubr.f32.mxu0 0.0
        %1497 = vmatmul.mubr.f32.gmra.mrb[0].mxu0 %v588
        %v1498 = vpop.f32.mrb[0].mxu0
        %v1499 = vadd.f32 0.0, %v1498
        %v1500 = vpop.f32.mrb[0].mxu0
        %v1501 = vadd.f32 0.0, %v1500
        %1502 = vmatprep.mubr.f32.mxu0 0.0
        %1503 = vmatmul.mubr.f32.gmra.mrb[0].mxu0 %v591
        %v1504 = vpop.f32.mrb[0].mxu0
        %v1505 = vadd.f32 0.0, %v1504
        %v1506 = vpop.f32.mrb[0].mxu0
        %v1507 = vadd.f32 0.0, %v1506
        %1508 = vmatprep.mubr.f32.mxu0 0.0
        %1509 = vmatmul.mubr.f32.gmra.mrb[0].mxu0 %v594
        %v1510 = vpop.f32.mrb[0].mxu0
        %v1511 = vadd.f32 0.0, %v1510
        %v1512 = vpop.f32.mrb[0].mxu0
        %v1513 = vadd.f32 0.0, %v1512
        %1514 = vmatprep.mubr.f32.mxu0 0.0
        %1515 = vmatmul.mubr.f32.gmra.mrb[0].mxu0 %v597
        %v1516 = vpop.f32.mrb[0].mxu0
        %v1517 = vadd.f32 0.0, %v1516
        %v1518 = vpop.f32.mrb[0].mxu0
        %v1519 = vadd.f32 0.0, %v1518
        %1520 = vmatprep.mubr.f32.mxu0 0.0
        %1521 = vmatmul.mubr.f32.gmra.mrb[0].mxu0 %v600
        %v1522 = vpop.f32.mrb[0].mxu0
        %v1523 = vadd.f32 0.0, %v1522
        %v1524 = vpop.f32.mrb[0].mxu0
        %v1525 = vadd.f32 0.0, %v1524
        %1526 = vmatprep.mubr.f32.mxu0 0.0
        %1527 = vmatmul.mubr.f32.gmra.mrb[0].mxu0 %v603
        %v1528 = vpop.f32.mrb[0].mxu0
        %v1529 = vadd.f32 0.0, %v1528
        %v1530 = vpop.f32.mrb[0].mxu0
        %v1531 = vadd.f32 0.0, %v1530
        %1532 = vmatprep.mubr.f32.mxu0 0.0
        %1533 = vmatmul.mubr.f32.gmra.mrb[0].mxu0 %v606
        %v1534 = vpop.f32.mrb[0].mxu0
        %v1535 = vadd.f32 0.0, %v1534
        %v1536 = vpop.f32.mrb[0].mxu0
        %v1537 = vadd.f32 0.0, %v1536
        %1538 = vmatprep.mubr.f32.mxu0 0.0
        %1539 = vmatmul.mubr.f32.gmra.mrb[0].mxu0 %v609
        %v1540 = vpop.f32.mrb[0].mxu0
        %v1541 = vadd.f32 0.0, %v1540
        %v1542 = vpop.f32.mrb[0].mxu0
        %v1543 = vadd.f32 0.0, %v1542
        %1544 = vmatprep.mubr.f32.mxu0 0.0
        %1545 = vmatmul.mubr.f32.gmra.mrb[0].mxu0 %v612
        %v1546 = vpop.f32.mrb[0].mxu0
        %v1547 = vadd.f32 0.0, %v1546
        %v1548 = vpop.f32.mrb[0].mxu0
        %v1549 = vadd.f32 0.0, %v1548
        %1550 = vmatprep.mubr.f32.mxu0 0.0
        %1551 = vmatmul.mubr.f32.gmra.mrb[0].mxu0 %v615
        %v1552 = vpop.f32.mrb[0].mxu0
        %v1553 = vadd.f32 0.0, %v1552
        %v1554 = vpop.f32.mrb[0].mxu0
        %v1555 = vadd.f32 0.0, %v1554
        %1556 = vmatprep.mubr.f32.mxu0 0.0
        %1557 = vmatmul.mubr.f32.gmra.mrb[0].mxu0 %v618
        %v1558 = vpop.f32.mrb[0].mxu0
        %v1559 = vadd.f32 0.0, %v1558
        %v1560 = vpop.f32.mrb[0].mxu0
        %v1561 = vadd.f32 0.0, %v1560
        %1562 = vmatprep.mubr.f32.mxu0 0.0
        %1563 = vmatmul.mubr.f32.gmra.mrb[0].mxu0 %v621
        %v1564 = vpop.f32.mrb[0].mxu0
        %v1565 = vadd.f32 0.0, %v1564
        %v1566 = vpop.f32.mrb[0].mxu0
        %v1567 = vadd.f32 0.0, %v1566
        %1568 = vmatprep.mubr.f32.mxu0 0.0
        %1569 = vmatmul.mubr.f32.gmra.mrb[0].mxu0 %v624
        %v1570 = vpop.f32.mrb[0].mxu0
        %v1571 = vadd.f32 0.0, %v1570
        %v1572 = vpop.f32.mrb[0].mxu0
        %v1573 = vadd.f32 0.0, %v1572
        %1574 = vmatprep.mubr.f32.mxu0 0.0
        %1575 = vmatmul.mubr.f32.gmra.mrb[0].mxu0 %v627
        %v1576 = vpop.f32.mrb[0].mxu0
        %v1577 = vadd.f32 0.0, %v1576
        %v1578 = vpop.f32.mrb[0].mxu0
        %v1579 = vadd.f32 0.0, %v1578
        %1580 = vmatprep.mubr.f32.mxu0 0.0
        %1581 = vmatmul.mubr.f32.gmra.mrb[0].mxu0 %v630
        %v1582 = vpop.f32.mrb[0].mxu0
        %v1583 = vadd.f32 0.0, %v1582
        %v1584 = vpop.f32.mrb[0].mxu0
        %v1585 = vadd.f32 0.0, %v1584
        %1586 = vmatprep.mubr.f32.mxu0 0.0
        %1587 = vmatmul.mubr.f32.gmra.mrb[0].mxu0 %v633
        %v1588 = vpop.f32.mrb[0].mxu0
        %v1589 = vadd.f32 0.0, %v1588
        %v1590 = vpop.f32.mrb[0].mxu0
        %v1591 = vadd.f32 0.0, %v1590
        %1592 = vmatprep.mubr.f32.mxu0 0.0
        %1593 = vmatmul.mubr.f32.gmra.mrb[0].mxu0 %v636
        %v1594 = vpop.f32.mrb[0].mxu0
        %v1595 = vadd.f32 0.0, %v1594
        %v1596 = vpop.f32.mrb[0].mxu0
        %v1597 = vadd.f32 0.0, %v1596
        %1598 = vmatprep.mubr.f32.mxu0 0.0
        %1599 = vmatmul.mubr.f32.gmra.mrb[0].mxu0 %v639
        %v1600 = vpop.f32.mrb[0].mxu0
        %v1601 = vadd.f32 0.0, %v1600
        %v1602 = vpop.f32.mrb[0].mxu0
        %v1603 = vadd.f32 0.0, %v1602
        %1604 = vmatprep.mubr.f32.mxu0 0.0
        %1605 = vmatmul.mubr.f32.gmra.mrb[0].mxu0 %v642
        %v1606 = vpop.f32.mrb[0].mxu0
        %v1607 = vadd.f32 0.0, %v1606
        %v1608 = vpop.f32.mrb[0].mxu0
        %v1609 = vadd.f32 0.0, %v1608
        %1610 = vmatprep.mubr.f32.mxu0 0.0
        %1611 = vmatmul.mubr.f32.gmra.mrb[0].mxu0 %v645
        %v1612 = vpop.f32.mrb[0].mxu0
        %v1613 = vadd.f32 0.0, %v1612
        %v1614 = vpop.f32.mrb[0].mxu0
        %v1615 = vadd.f32 0.0, %v1614
        %1616 = vmatprep.mubr.f32.mxu0 0.0
        %1617 = vmatmul.mubr.f32.gmra.mrb[0].mxu0 %v648
        %v1618 = vpop.f32.mrb[0].mxu0
        %v1619 = vadd.f32 0.0, %v1618
        %v1620 = vpop.f32.mrb[0].mxu0
        %v1621 = vadd.f32 0.0, %v1620
        %1622 = vmatprep.mubr.f32.mxu0 0.0
        %1623 = vmatmul.mubr.f32.gmra.mrb[0].mxu0 %v651
        %v1624 = vpop.f32.mrb[0].mxu0
        %v1625 = vadd.f32 0.0, %v1624
        %v1626 = vpop.f32.mrb[0].mxu0
        %v1627 = vadd.f32 0.0, %v1626
        %1628 = vmatprep.mubr.f32.mxu0 0.0
        %1629 = vmatmul.mubr.f32.gmra.mrb[0].mxu0 %v654
        %v1630 = vpop.f32.mrb[0].mxu0
        %v1631 = vadd.f32 0.0, %v1630
        %v1632 = vpop.f32.mrb[0].mxu0
        %v1633 = vadd.f32 0.0, %v1632
        %1634 = vmatprep.mubr.f32.mxu0 0.0
        %1635 = vmatmul.mubr.f32.gmra.mrb[0].mxu0 %v657
        %v1636 = vpop.f32.mrb[0].mxu0
        %v1637 = vadd.f32 0.0, %v1636
        %v1638 = vpop.f32.mrb[0].mxu0
        %v1639 = vadd.f32 0.0, %v1638
        %1640 = vmatprep.mubr.f32.mxu0 0.0
        %1641 = vmatmul.mubr.f32.gmra.mrb[0].mxu0 %v660
        %v1642 = vpop.f32.mrb[0].mxu0
        %v1643 = vadd.f32 0.0, %v1642
        %v1644 = vpop.f32.mrb[0].mxu0
        %v1645 = vadd.f32 0.0, %v1644
        %1646 = vmatprep.mubr.f32.mxu0 0.0
        %1647 = vmatmul.mubr.f32.gmra.mrb[0].mxu0 %v663
        %v1648 = vpop.f32.mrb[0].mxu0
        %v1649 = vadd.f32 0.0, %v1648
        %v1650 = vpop.f32.mrb[0].mxu0
        %v1651 = vadd.f32 0.0, %v1650
        %1652 = vmatprep.mubr.f32.mxu0 0.0
        %1653 = vmatmul.mubr.f32.gmra.mrb[0].mxu0 %v666
        %v1654 = vpop.f32.mrb[0].mxu0
        %v1655 = vadd.f32 0.0, %v1654
        %v1656 = vpop.f32.mrb[0].mxu0
        %v1657 = vadd.f32 0.0, %v1656
        %1658 = vmatprep.mubr.f32.mxu0 0.0
        %1659 = vmatmul.mubr.f32.gmra.mrb[0].mxu0 %v669
        %v1660 = vpop.f32.mrb[0].mxu0
        %v1661 = vadd.f32 0.0, %v1660
        %v1662 = vpop.f32.mrb[0].mxu0
        %v1663 = vadd.f32 0.0, %v1662
        %1664 = vmatprep.mubr.f32.mxu0 0.0
        %1665 = vmatmul.mubr.f32.gmra.mrb[0].mxu0 %v672
        %v1666 = vpop.f32.mrb[0].mxu0
        %v1667 = vadd.f32 0.0, %v1666
        %v1668 = vpop.f32.mrb[0].mxu0
        %v1669 = vadd.f32 0.0, %v1668
        %1670 = vmatprep.mubr.f32.mxu0 0.0
        %1671 = vmatmul.mubr.f32.gmra.mrb[0].mxu0 %v675
        %v1672 = vpop.f32.mrb[0].mxu0
        %v1673 = vadd.f32 0.0, %v1672
        %v1674 = vpop.f32.mrb[0].mxu0
        %v1675 = vadd.f32 0.0, %v1674
        %1676 = vmatprep.mubr.f32.mxu0 0.0
        %1677 = vmatmul.mubr.f32.gmra.mrb[0].mxu0 %v678
        %v1678 = vpop.f32.mrb[0].mxu0
        %v1679 = vadd.f32 0.0, %v1678
        %v1680 = vpop.f32.mrb[0].mxu0
        %v1681 = vadd.f32 0.0, %v1680
        %1682 = vmatprep.mubr.f32.mxu0 0.0
        %1683 = vmatmul.mubr.f32.gmra.mrb[0].mxu0 %v681
        %v1684 = vpop.f32.mrb[0].mxu0
        %v1685 = vadd.f32 0.0, %v1684
        %v1686 = vpop.f32.mrb[0].mxu0
        %v1687 = vadd.f32 0.0, %v1686
        %1688 = vmatprep.mubr.f32.mxu0 0.0
        %1689 = vmatmul.mubr.f32.gmra.mrb[0].mxu0 %v684
        %v1690 = vpop.f32.mrb[0].mxu0
        %v1691 = vadd.f32 0.0, %v1690
        %v1692 = vpop.f32.mrb[0].mxu0
        %v1693 = vadd.f32 0.0, %v1692
        %1694 = vmatprep.mubr.f32.mxu0 0.0
        %1695 = vmatmul.mubr.f32.gmra.mrb[0].mxu0 %v687
        %v1696 = vpop.f32.mrb[0].mxu0
        %v1697 = vadd.f32 0.0, %v1696
        %v1698 = vpop.f32.mrb[0].mxu0
        %v1699 = vadd.f32 0.0, %v1698
        %1700 = vmatprep.mubr.f32.mxu0 0.0
        %1701 = vmatmul.mubr.f32.gmra.mrb[0].mxu0 %v690
        %v1702 = vpop.f32.mrb[0].mxu0
        %v1703 = vadd.f32 0.0, %v1702
        %v1704 = vpop.f32.mrb[0].mxu0
        %v1705 = vadd.f32 0.0, %v1704
        %1706 = vmatprep.mubr.f32.mxu0 0.0
        %1707 = vmatmul.mubr.f32.gmra.mrb[0].mxu0 %v693
        %v1708 = vpop.f32.mrb[0].mxu0
        %v1709 = vadd.f32 0.0, %v1708
        %v1710 = vpop.f32.mrb[0].mxu0
        %v1711 = vadd.f32 0.0, %v1710
        %1712 = vmatprep.mubr.f32.mxu0 0.0
        %1713 = vmatmul.mubr.f32.gmra.mrb[0].mxu0 %v696
        %v1714 = vpop.f32.mrb[0].mxu0
        %v1715 = vadd.f32 0.0, %v1714
        %v1716 = vpop.f32.mrb[0].mxu0
        %v1717 = vadd.f32 0.0, %v1716
        %1718 = vmatprep.mubr.f32.mxu0 0.0
        %1719 = vmatmul.mubr.f32.gmra.mrb[0].mxu0 %v699
        %v1720 = vpop.f32.mrb[0].mxu0
        %v1721 = vadd.f32 0.0, %v1720
        %v1722 = vpop.f32.mrb[0].mxu0
        %v1723 = vadd.f32 0.0, %v1722
        %1724 = vmatprep.mubr.f32.mxu0 0.0
        %1725 = vmatmul.mubr.f32.gmra.mrb[0].mxu0 %v702
        %v1726 = vpop.f32.mrb[0].mxu0
        %v1727 = vadd.f32 0.0, %v1726
        %v1728 = vpop.f32.mrb[0].mxu0
        %v1729 = vadd.f32 0.0, %v1728
        %1730 = vmatprep.mubr.f32.mxu0 0.0
        %1731 = vmatmul.mubr.f32.gmra.mrb[0].mxu0 %v705
        %v1732 = vpop.f32.mrb[0].mxu0
        %v1733 = vadd.f32 0.0, %v1732
        %v1734 = vpop.f32.mrb[0].mxu0
        %v1735 = vadd.f32 0.0, %v1734
        %1736 = vdwg.mxu0
        %v1737 = vlaneseq
        %v1738 = vand.u32 %v1737, 127
        %v1739 = vadd.s32 %v1738, 128
        %v1740 = vadd.s32 %v1738, 256
        %v1741 = vadd.s32 %v1738, 384
        %s1742 = smul.u32 %s24, 512
        %v1743 = vstv %s1742
        %v1744 = vadd.s32 %v1738, %v1743
        %v1745 = vadd.s32 %v1739, %v1743
        %v1746 = vadd.s32 %v1740, %v1743
        %v1747 = vadd.s32 %v1741, %v1743
        %vm1748 = vcmp.lt.s32.totalorder %v1744, 600
        %vm1749 = vcmp.lt.s32.totalorder %v1745, 600
        %vm1750 = vcmp.lt.s32.totalorder %v1746, 600
        %vm1751 = vcmp.lt.s32.totalorder %v1747, 600
        %v1752 = vlaneseq
        %v1753 = vshrl.u32 %v1752, 7
        %s1754 = smul.u32 %s23, 600
        %v1755 = vstv %s1754
        %v1756 = vadd.s32 %v1753, %v1755
        %v1757 = vld [vmem:[%s308] sm:$0xff]
        %v1758 = vld [vmem:[%s308 + $0x8] sm:$0xff]
        %v1759 = vld [vmem:[%s308 + $0x10] sm:$0xff]
        %v1760 = vld [vmem:[%s308 + $0x18] sm:$0xff]
        %v1761 = vmul.f32 %v1757, %v774
        %v1762 = vmul.f32 %v1758, %v776
        %v1763 = vmul.f32 %v1759, %v1289
        %v1764 = vmul.f32 %v1760, %v1291
        %vm1765 = vcmp.lt.s32.totalorder %v1756, 600
        %vm1766 = vmand %vm1748, %vm1765
        %vm1767 = vmand %vm1749, %vm1765
        %vm1768 = vmand %vm1750, %vm1765
        %vm1769 = vmand %vm1751, %vm1765
        %v1770 = vsel %vm1766, %v1761, 0.0
        %v1771 = vsel %vm1767, %v1762, 0.0
        %v1772 = vsel %vm1768, %v1763, 0.0
        %v1773 = vsel %vm1769, %v1764, 0.0
        %v1774 = vand.u32 2147483647, %v774
        %v1775 = vand.u32 2147483647, %v776
        %v1776 = vand.u32 2147483647, %v1289
        %v1777 = vand.u32 2147483647, %v1291
        %v1778 = vld [vmem:[%s308 + $0x20] sm:$0xff]
        %v1779 = vld [vmem:[%s308 + $0x28] sm:$0xff]
        %v1780 = vld [vmem:[%s308 + $0x30] sm:$0xff]
        %v1781 = vld [vmem:[%s308 + $0x38] sm:$0xff]
        %v1782 = vmul.f32 %v1778, %v780
        %v1783 = vmul.f32 %v1779, %v782
        %v1784 = vmul.f32 %v1780, %v1295
        %v1785 = vmul.f32 %v1781, %v1297
        %v1786 = vadd.s32 %v1756, 8
        %vm1787 = vcmp.lt.s32.totalorder %v1786, 600
        %vm1788 = vmand %vm1748, %vm1787
        %vm1789 = vmand %vm1749, %vm1787
        %vm1790 = vmand %vm1750, %vm1787
        %vm1791 = vmand %vm1751, %vm1787
        %v1792 = vsel %vm1788, %v1782, 0.0
        %v1793 = vsel %vm1789, %v1783, 0.0
        %v1794 = vsel %vm1790, %v1784, 0.0
        %v1795 = vsel %vm1791, %v1785, 0.0
        %v1796 = vand.u32 2147483647, %v780
        %v1797 = vand.u32 2147483647, %v782
        %v1798 = vand.u32 2147483647, %v1295
        %v1799 = vand.u32 2147483647, %v1297
        %v1800 = vadd.f32 %v1770, %v1792
        %v1801 = vadd.f32 %v1771, %v1793
        %v1802 = vadd.f32 %v1772, %v1794
        %v1803 = vadd.f32 %v1773, %v1795
        %v1804 = vadd.f32 %v1774, %v1796
        %v1805 = vadd.f32 %v1775, %v1797
        %v1806 = vadd.f32 %v1776, %v1798
        %v1807 = vadd.f32 %v1777, %v1799
        %v1808 = vld [vmem:[%s308 + $0x40] sm:$0xff]
        %v1809 = vld [vmem:[%s308 + $0x48] sm:$0xff]
        %v1810 = vld [vmem:[%s308 + $0x50] sm:$0xff]
        %v1811 = vld [vmem:[%s308 + $0x58] sm:$0xff]
        %v1812 = vmul.f32 %v1808, %v786
        %v1813 = vmul.f32 %v1809, %v788
        %v1814 = vmul.f32 %v1810, %v1301
        %v1815 = vmul.f32 %v1811, %v1303
        %v1816 = vadd.s32 %v1756, 16
        %vm1817 = vcmp.lt.s32.totalorder %v1816, 600
        %vm1818 = vmand %vm1748, %vm1817
        %vm1819 = vmand %vm1749, %vm1817
        %vm1820 = vmand %vm1750, %vm1817
        %vm1821 = vmand %vm1751, %vm1817
        %v1822 = vsel %vm1818, %v1812, 0.0
        %v1823 = vsel %vm1819, %v1813, 0.0
        %v1824 = vsel %vm1820, %v1814, 0.0
        %v1825 = vsel %vm1821, %v1815, 0.0
        %v1826 = vand.u32 2147483647, %v786
        %v1827 = vand.u32 2147483647, %v788
        %v1828 = vand.u32 2147483647, %v1301
        %v1829 = vand.u32 2147483647, %v1303
        %v1830 = vadd.f32 %v1800, %v1822
        %v1831 = vadd.f32 %v1801, %v1823
        %v1832 = vadd.f32 %v1802, %v1824
        %v1833 = vadd.f32 %v1803, %v1825
        %v1834 = vadd.f32 %v1804, %v1826
        %v1835 = vadd.f32 %v1805, %v1827
        %v1836 = vadd.f32 %v1806, %v1828
        %v1837 = vadd.f32 %v1807, %v1829
        %v1838 = vld [vmem:[%s308 + $0x60] sm:$0xff]
        %v1839 = vld [vmem:[%s308 + $0x68] sm:$0xff]
        %v1840 = vld [vmem:[%s308 + $0x70] sm:$0xff]
        %v1841 = vld [vmem:[%s308 + $0x78] sm:$0xff]
        %v1842 = vmul.f32 %v1838, %v792
        %v1843 = vmul.f32 %v1839, %v794
        %v1844 = vmul.f32 %v1840, %v1307
        %v1845 = vmul.f32 %v1841, %v1309
        %v1846 = vadd.s32 %v1756, 24
        %vm1847 = vcmp.lt.s32.totalorder %v1846, 600
        %vm1848 = vmand %vm1748, %vm1847
        %vm1849 = vmand %vm1749, %vm1847
        %vm1850 = vmand %vm1750, %vm1847
        %vm1851 = vmand %vm1751, %vm1847
        %v1852 = vsel %vm1848, %v1842, 0.0
        %v1853 = vsel %vm1849, %v1843, 0.0
        %v1854 = vsel %vm1850, %v1844, 0.0
        %v1855 = vsel %vm1851, %v1845, 0.0
        %v1856 = vand.u32 2147483647, %v792
        %v1857 = vand.u32 2147483647, %v794
        %v1858 = vand.u32 2147483647, %v1307
        %v1859 = vand.u32 2147483647, %v1309
        %v1860 = vadd.f32 %v1830, %v1852
        %v1861 = vadd.f32 %v1831, %v1853
        %v1862 = vadd.f32 %v1832, %v1854
        %v1863 = vadd.f32 %v1833, %v1855
        %v1864 = vadd.f32 %v1834, %v1856
        %v1865 = vadd.f32 %v1835, %v1857
        %v1866 = vadd.f32 %v1836, %v1858
        %v1867 = vadd.f32 %v1837, %v1859
        %v1868 = vld [vmem:[%s308 + $0x80] sm:$0xff]
        %v1869 = vld [vmem:[%s308 + $0x88] sm:$0xff]
        %v1870 = vld [vmem:[%s308 + $0x90] sm:$0xff]
        %v1871 = vld [vmem:[%s308 + $0x98] sm:$0xff]
        %v1872 = vmul.f32 %v1868, %v798
        %v1873 = vmul.f32 %v1869, %v800
        %v1874 = vmul.f32 %v1870, %v1313
        %v1875 = vmul.f32 %v1871, %v1315
        %v1876 = vadd.s32 %v1756, 32
        %vm1877 = vcmp.lt.s32.totalorder %v1876, 600
        %vm1878 = vmand %vm1748, %vm1877
        %vm1879 = vmand %vm1749, %vm1877
        %vm1880 = vmand %vm1750, %vm1877
        %vm1881 = vmand %vm1751, %vm1877
        %v1882 = vsel %vm1878, %v1872, 0.0
        %v1883 = vsel %vm1879, %v1873, 0.0
        %v1884 = vsel %vm1880, %v1874, 0.0
        %v1885 = vsel %vm1881, %v1875, 0.0
        %v1886 = vand.u32 2147483647, %v798
        %v1887 = vand.u32 2147483647, %v800
        %v1888 = vand.u32 2147483647, %v1313
        %v1889 = vand.u32 2147483647, %v1315
        %v1890 = vadd.f32 %v1860, %v1882
        %v1891 = vadd.f32 %v1861, %v1883
        %v1892 = vadd.f32 %v1862, %v1884
        %v1893 = vadd.f32 %v1863, %v1885
        %v1894 = vadd.f32 %v1864, %v1886
        %v1895 = vadd.f32 %v1865, %v1887
        %v1896 = vadd.f32 %v1866, %v1888
        %v1897 = vadd.f32 %v1867, %v1889
        %v1898 = vld [vmem:[%s308 + $0xa0] sm:$0xff]
        %v1899 = vld [vmem:[%s308 + $0xa8] sm:$0xff]
        %v1900 = vld [vmem:[%s308 + $0xb0] sm:$0xff]
        %v1901 = vld [vmem:[%s308 + $0xb8] sm:$0xff]
        %v1902 = vmul.f32 %v1898, %v804
        %v1903 = vmul.f32 %v1899, %v806
        %v1904 = vmul.f32 %v1900, %v1319
        %v1905 = vmul.f32 %v1901, %v1321
        %v1906 = vadd.s32 %v1756, 40
        %vm1907 = vcmp.lt.s32.totalorder %v1906, 600
        %vm1908 = vmand %vm1748, %vm1907
        %vm1909 = vmand %vm1749, %vm1907
        %vm1910 = vmand %vm1750, %vm1907
        %vm1911 = vmand %vm1751, %vm1907
        %v1912 = vsel %vm1908, %v1902, 0.0
        %v1913 = vsel %vm1909, %v1903, 0.0
        %v1914 = vsel %vm1910, %v1904, 0.0
        %v1915 = vsel %vm1911, %v1905, 0.0
        %v1916 = vand.u32 2147483647, %v804
        %v1917 = vand.u32 2147483647, %v806
        %v1918 = vand.u32 2147483647, %v1319
        %v1919 = vand.u32 2147483647, %v1321
        %v1920 = vadd.f32 %v1890, %v1912
        %v1921 = vadd.f32 %v1891, %v1913
        %v1922 = vadd.f32 %v1892, %v1914
        %v1923 = vadd.f32 %v1893, %v1915
        %v1924 = vadd.f32 %v1894, %v1916
        %v1925 = vadd.f32 %v1895, %v1917
        %v1926 = vadd.f32 %v1896, %v1918
        %v1927 = vadd.f32 %v1897, %v1919
        %v1928 = vld [vmem:[%s308 + $0xc0] sm:$0xff]
        %v1929 = vld [vmem:[%s308 + $0xc8] sm:$0xff]
        %v1930 = vld [vmem:[%s308 + $0xd0] sm:$0xff]
        %v1931 = vld [vmem:[%s308 + $0xd8] sm:$0xff]
        %v1932 = vmul.f32 %v1928, %v810
        %v1933 = vmul.f32 %v1929, %v812
        %v1934 = vmul.f32 %v1930, %v1325
        %v1935 = vmul.f32 %v1931, %v1327
        %v1936 = vadd.s32 %v1756, 48
        %vm1937 = vcmp.lt.s32.totalorder %v1936, 600
        %vm1938 = vmand %vm1748, %vm1937
        %vm1939 = vmand %vm1749, %vm1937
        %vm1940 = vmand %vm1750, %vm1937
        %vm1941 = vmand %vm1751, %vm1937
        %v1942 = vsel %vm1938, %v1932, 0.0
        %v1943 = vsel %vm1939, %v1933, 0.0
        %v1944 = vsel %vm1940, %v1934, 0.0
        %v1945 = vsel %vm1941, %v1935, 0.0
        %v1946 = vand.u32 2147483647, %v810
        %v1947 = vand.u32 2147483647, %v812
        %v1948 = vand.u32 2147483647, %v1325
        %v1949 = vand.u32 2147483647, %v1327
        %v1950 = vadd.f32 %v1920, %v1942
        %v1951 = vadd.f32 %v1921, %v1943
        %v1952 = vadd.f32 %v1922, %v1944
        %v1953 = vadd.f32 %v1923, %v1945
        %v1954 = vadd.f32 %v1924, %v1946
        %v1955 = vadd.f32 %v1925, %v1947
        %v1956 = vadd.f32 %v1926, %v1948
        %v1957 = vadd.f32 %v1927, %v1949
        %v1958 = vld [vmem:[%s308 + $0xe0] sm:$0xff]
        %v1959 = vld [vmem:[%s308 + $0xe8] sm:$0xff]
        %v1960 = vld [vmem:[%s308 + $0xf0] sm:$0xff]
        %v1961 = vld [vmem:[%s308 + $0xf8] sm:$0xff]
        %v1962 = vmul.f32 %v1958, %v816
        %v1963 = vmul.f32 %v1959, %v818
        %v1964 = vmul.f32 %v1960, %v1331
        %v1965 = vmul.f32 %v1961, %v1333
        %v1966 = vadd.s32 %v1756, 56
        %vm1967 = vcmp.lt.s32.totalorder %v1966, 600
        %vm1968 = vmand %vm1748, %vm1967
        %vm1969 = vmand %vm1749, %vm1967
        %vm1970 = vmand %vm1750, %vm1967
        %vm1971 = vmand %vm1751, %vm1967
        %v1972 = vsel %vm1968, %v1962, 0.0
        %v1973 = vsel %vm1969, %v1963, 0.0
        %v1974 = vsel %vm1970, %v1964, 0.0
        %v1975 = vsel %vm1971, %v1965, 0.0
        %v1976 = vand.u32 2147483647, %v816
        %v1977 = vand.u32 2147483647, %v818
        %v1978 = vand.u32 2147483647, %v1331
        %v1979 = vand.u32 2147483647, %v1333
        %v1980 = vadd.f32 %v1950, %v1972
        %v1981 = vadd.f32 %v1951, %v1973
        %v1982 = vadd.f32 %v1952, %v1974
        %v1983 = vadd.f32 %v1953, %v1975
        %v1984 = vadd.f32 %v1954, %v1976
        %v1985 = vadd.f32 %v1955, %v1977
        %v1986 = vadd.f32 %v1956, %v1978
        %v1987 = vadd.f32 %v1957, %v1979
        %v1988 = vld [vmem:[%s308 + $0x100] sm:$0xff]
        %v1989 = vld [vmem:[%s308 + $0x108] sm:$0xff]
        %v1990 = vld [vmem:[%s308 + $0x110] sm:$0xff]
        %v1991 = vld [vmem:[%s308 + $0x118] sm:$0xff]
        %v1992 = vmul.f32 %v1988, %v822
        %v1993 = vmul.f32 %v1989, %v824
        %v1994 = vmul.f32 %v1990, %v1337
        %v1995 = vmul.f32 %v1991, %v1339
        %v1996 = vadd.s32 %v1756, 64
        %vm1997 = vcmp.lt.s32.totalorder %v1996, 600
        %vm1998 = vmand %vm1748, %vm1997
        %vm1999 = vmand %vm1749, %vm1997
        %vm2000 = vmand %vm1750, %vm1997
        %vm2001 = vmand %vm1751, %vm1997
        %v2002 = vsel %vm1998, %v1992, 0.0
        %v2003 = vsel %vm1999, %v1993, 0.0
        %v2004 = vsel %vm2000, %v1994, 0.0
        %v2005 = vsel %vm2001, %v1995, 0.0
        %v2006 = vand.u32 2147483647, %v822
        %v2007 = vand.u32 2147483647, %v824
        %v2008 = vand.u32 2147483647, %v1337
        %v2009 = vand.u32 2147483647, %v1339
        %v2010 = vadd.f32 %v1980, %v2002
        %v2011 = vadd.f32 %v1981, %v2003
        %v2012 = vadd.f32 %v1982, %v2004
        %v2013 = vadd.f32 %v1983, %v2005
        %v2014 = vadd.f32 %v1984, %v2006
        %v2015 = vadd.f32 %v1985, %v2007
        %v2016 = vadd.f32 %v1986, %v2008
        %v2017 = vadd.f32 %v1987, %v2009
        %v2018 = vld [vmem:[%s308 + $0x120] sm:$0xff]
        %v2019 = vld [vmem:[%s308 + $0x128] sm:$0xff]
        %v2020 = vld [vmem:[%s308 + $0x130] sm:$0xff]
        %v2021 = vld [vmem:[%s308 + $0x138] sm:$0xff]
        %v2022 = vmul.f32 %v2018, %v828
        %v2023 = vmul.f32 %v2019, %v830
        %v2024 = vmul.f32 %v2020, %v1343
        %v2025 = vmul.f32 %v2021, %v1345
        %v2026 = vadd.s32 %v1756, 72
        %vm2027 = vcmp.lt.s32.totalorder %v2026, 600
        %vm2028 = vmand %vm1748, %vm2027
        %vm2029 = vmand %vm1749, %vm2027
        %vm2030 = vmand %vm1750, %vm2027
        %vm2031 = vmand %vm1751, %vm2027
        %v2032 = vsel %vm2028, %v2022, 0.0
        %v2033 = vsel %vm2029, %v2023, 0.0
        %v2034 = vsel %vm2030, %v2024, 0.0
        %v2035 = vsel %vm2031, %v2025, 0.0
        %v2036 = vand.u32 2147483647, %v828
        %v2037 = vand.u32 2147483647, %v830
        %v2038 = vand.u32 2147483647, %v1343
        %v2039 = vand.u32 2147483647, %v1345
        %v2040 = vadd.f32 %v2010, %v2032
        %v2041 = vadd.f32 %v2011, %v2033
        %v2042 = vadd.f32 %v2012, %v2034
        %v2043 = vadd.f32 %v2013, %v2035
        %v2044 = vadd.f32 %v2014, %v2036
        %v2045 = vadd.f32 %v2015, %v2037
        %v2046 = vadd.f32 %v2016, %v2038
        %v2047 = vadd.f32 %v2017, %v2039
        %v2048 = vld [vmem:[%s308 + $0x140] sm:$0xff]
        %v2049 = vld [vmem:[%s308 + $0x148] sm:$0xff]
        %v2050 = vld [vmem:[%s308 + $0x150] sm:$0xff]
        %v2051 = vld [vmem:[%s308 + $0x158] sm:$0xff]
        %v2052 = vmul.f32 %v2048, %v834
        %v2053 = vmul.f32 %v2049, %v836
        %v2054 = vmul.f32 %v2050, %v1349
        %v2055 = vmul.f32 %v2051, %v1351
        %v2056 = vadd.s32 %v1756, 80
        %vm2057 = vcmp.lt.s32.totalorder %v2056, 600
        %vm2058 = vmand %vm1748, %vm2057
        %vm2059 = vmand %vm1749, %vm2057
        %vm2060 = vmand %vm1750, %vm2057
        %vm2061 = vmand %vm1751, %vm2057
        %v2062 = vsel %vm2058, %v2052, 0.0
        %v2063 = vsel %vm2059, %v2053, 0.0
        %v2064 = vsel %vm2060, %v2054, 0.0
        %v2065 = vsel %vm2061, %v2055, 0.0
        %v2066 = vand.u32 2147483647, %v834
        %v2067 = vand.u32 2147483647, %v836
        %v2068 = vand.u32 2147483647, %v1349
        %v2069 = vand.u32 2147483647, %v1351
        %v2070 = vadd.f32 %v2040, %v2062
        %v2071 = vadd.f32 %v2041, %v2063
        %v2072 = vadd.f32 %v2042, %v2064
        %v2073 = vadd.f32 %v2043, %v2065
        %v2074 = vadd.f32 %v2044, %v2066
        %v2075 = vadd.f32 %v2045, %v2067
        %v2076 = vadd.f32 %v2046, %v2068
        %v2077 = vadd.f32 %v2047, %v2069
        %v2078 = vld [vmem:[%s308 + $0x160] sm:$0xff]
        %v2079 = vld [vmem:[%s308 + $0x168] sm:$0xff]
        %v2080 = vld [vmem:[%s308 + $0x170] sm:$0xff]
        %v2081 = vld [vmem:[%s308 + $0x178] sm:$0xff]
        %v2082 = vmul.f32 %v2078, %v840
        %v2083 = vmul.f32 %v2079, %v842
        %v2084 = vmul.f32 %v2080, %v1355
        %v2085 = vmul.f32 %v2081, %v1357
        %v2086 = vadd.s32 %v1756, 88
        %vm2087 = vcmp.lt.s32.totalorder %v2086, 600
        %vm2088 = vmand %vm1748, %vm2087
        %vm2089 = vmand %vm1749, %vm2087
        %vm2090 = vmand %vm1750, %vm2087
        %vm2091 = vmand %vm1751, %vm2087
        %v2092 = vsel %vm2088, %v2082, 0.0
        %v2093 = vsel %vm2089, %v2083, 0.0
        %v2094 = vsel %vm2090, %v2084, 0.0
        %v2095 = vsel %vm2091, %v2085, 0.0
        %v2096 = vand.u32 2147483647, %v840
        %v2097 = vand.u32 2147483647, %v842
        %v2098 = vand.u32 2147483647, %v1355
        %v2099 = vand.u32 2147483647, %v1357
        %v2100 = vadd.f32 %v2070, %v2092
        %v2101 = vadd.f32 %v2071, %v2093
        %v2102 = vadd.f32 %v2072, %v2094
        %v2103 = vadd.f32 %v2073, %v2095
        %v2104 = vadd.f32 %v2074, %v2096
        %v2105 = vadd.f32 %v2075, %v2097
        %v2106 = vadd.f32 %v2076, %v2098
        %v2107 = vadd.f32 %v2077, %v2099
        %v2108 = vld [vmem:[%s308 + $0x180] sm:$0xff]
        %v2109 = vld [vmem:[%s308 + $0x188] sm:$0xff]
        %v2110 = vld [vmem:[%s308 + $0x190] sm:$0xff]
        %v2111 = vld [vmem:[%s308 + $0x198] sm:$0xff]
        %v2112 = vmul.f32 %v2108, %v846
        %v2113 = vmul.f32 %v2109, %v848
        %v2114 = vmul.f32 %v2110, %v1361
        %v2115 = vmul.f32 %v2111, %v1363
        %v2116 = vadd.s32 %v1756, 96
        %vm2117 = vcmp.lt.s32.totalorder %v2116, 600
        %vm2118 = vmand %vm1748, %vm2117
        %vm2119 = vmand %vm1749, %vm2117
        %vm2120 = vmand %vm1750, %vm2117
        %vm2121 = vmand %vm1751, %vm2117
        %v2122 = vsel %vm2118, %v2112, 0.0
        %v2123 = vsel %vm2119, %v2113, 0.0
        %v2124 = vsel %vm2120, %v2114, 0.0
        %v2125 = vsel %vm2121, %v2115, 0.0
        %v2126 = vand.u32 2147483647, %v846
        %v2127 = vand.u32 2147483647, %v848
        %v2128 = vand.u32 2147483647, %v1361
        %v2129 = vand.u32 2147483647, %v1363
        %v2130 = vadd.f32 %v2100, %v2122
        %v2131 = vadd.f32 %v2101, %v2123
        %v2132 = vadd.f32 %v2102, %v2124
        %v2133 = vadd.f32 %v2103, %v2125
        %v2134 = vadd.f32 %v2104, %v2126
        %v2135 = vadd.f32 %v2105, %v2127
        %v2136 = vadd.f32 %v2106, %v2128
        %v2137 = vadd.f32 %v2107, %v2129
        %v2138 = vld [vmem:[%s308 + $0x1a0] sm:$0xff]
        %v2139 = vld [vmem:[%s308 + $0x1a8] sm:$0xff]
        %v2140 = vld [vmem:[%s308 + $0x1b0] sm:$0xff]
        %v2141 = vld [vmem:[%s308 + $0x1b8] sm:$0xff]
        %v2142 = vmul.f32 %v2138, %v852
        %v2143 = vmul.f32 %v2139, %v854
        %v2144 = vmul.f32 %v2140, %v1367
        %v2145 = vmul.f32 %v2141, %v1369
        %v2146 = vadd.s32 %v1756, 104
        %vm2147 = vcmp.lt.s32.totalorder %v2146, 600
        %vm2148 = vmand %vm1748, %vm2147
        %vm2149 = vmand %vm1749, %vm2147
        %vm2150 = vmand %vm1750, %vm2147
        %vm2151 = vmand %vm1751, %vm2147
        %v2152 = vsel %vm2148, %v2142, 0.0
        %v2153 = vsel %vm2149, %v2143, 0.0
        %v2154 = vsel %vm2150, %v2144, 0.0
        %v2155 = vsel %vm2151, %v2145, 0.0
        %v2156 = vand.u32 2147483647, %v852
        %v2157 = vand.u32 2147483647, %v854
        %v2158 = vand.u32 2147483647, %v1367
        %v2159 = vand.u32 2147483647, %v1369
        %v2160 = vadd.f32 %v2130, %v2152
        %v2161 = vadd.f32 %v2131, %v2153
        %v2162 = vadd.f32 %v2132, %v2154
        %v2163 = vadd.f32 %v2133, %v2155
        %v2164 = vadd.f32 %v2134, %v2156
        %v2165 = vadd.f32 %v2135, %v2157
        %v2166 = vadd.f32 %v2136, %v2158
        %v2167 = vadd.f32 %v2137, %v2159
        %v2168 = vld [vmem:[%s308 + $0x1c0] sm:$0xff]
        %v2169 = vld [vmem:[%s308 + $0x1c8] sm:$0xff]
        %v2170 = vld [vmem:[%s308 + $0x1d0] sm:$0xff]
        %v2171 = vld [vmem:[%s308 + $0x1d8] sm:$0xff]
        %v2172 = vmul.f32 %v2168, %v858
        %v2173 = vmul.f32 %v2169, %v860
        %v2174 = vmul.f32 %v2170, %v1373
        %v2175 = vmul.f32 %v2171, %v1375
        %v2176 = vadd.s32 %v1756, 112
        %vm2177 = vcmp.lt.s32.totalorder %v2176, 600
        %vm2178 = vmand %vm1748, %vm2177
        %vm2179 = vmand %vm1749, %vm2177
        %vm2180 = vmand %vm1750, %vm2177
        %vm2181 = vmand %vm1751, %vm2177
        %v2182 = vsel %vm2178, %v2172, 0.0
        %v2183 = vsel %vm2179, %v2173, 0.0
        %v2184 = vsel %vm2180, %v2174, 0.0
        %v2185 = vsel %vm2181, %v2175, 0.0
        %v2186 = vand.u32 2147483647, %v858
        %v2187 = vand.u32 2147483647, %v860
        %v2188 = vand.u32 2147483647, %v1373
        %v2189 = vand.u32 2147483647, %v1375
        %v2190 = vadd.f32 %v2160, %v2182
        %v2191 = vadd.f32 %v2161, %v2183
        %v2192 = vadd.f32 %v2162, %v2184
        %v2193 = vadd.f32 %v2163, %v2185
        %v2194 = vadd.f32 %v2164, %v2186
        %v2195 = vadd.f32 %v2165, %v2187
        %v2196 = vadd.f32 %v2166, %v2188
        %v2197 = vadd.f32 %v2167, %v2189
        %v2198 = vld [vmem:[%s308 + $0x1e0] sm:$0xff]
        %v2199 = vld [vmem:[%s308 + $0x1e8] sm:$0xff]
        %v2200 = vld [vmem:[%s308 + $0x1f0] sm:$0xff]
        %v2201 = vld [vmem:[%s308 + $0x1f8] sm:$0xff]
        %v2202 = vmul.f32 %v2198, %v864
        %v2203 = vmul.f32 %v2199, %v866
        %v2204 = vmul.f32 %v2200, %v1379
        %v2205 = vmul.f32 %v2201, %v1381
        %v2206 = vadd.s32 %v1756, 120
        %vm2207 = vcmp.lt.s32.totalorder %v2206, 600
        %vm2208 = vmand %vm1748, %vm2207
        %vm2209 = vmand %vm1749, %vm2207
        %vm2210 = vmand %vm1750, %vm2207
        %vm2211 = vmand %vm1751, %vm2207
        %v2212 = vsel %vm2208, %v2202, 0.0
        %v2213 = vsel %vm2209, %v2203, 0.0
        %v2214 = vsel %vm2210, %v2204, 0.0
        %v2215 = vsel %vm2211, %v2205, 0.0
        %v2216 = vand.u32 2147483647, %v864
        %v2217 = vand.u32 2147483647, %v866
        %v2218 = vand.u32 2147483647, %v1379
        %v2219 = vand.u32 2147483647, %v1381
        %v2220 = vadd.f32 %v2190, %v2212
        %v2221 = vadd.f32 %v2191, %v2213
        %v2222 = vadd.f32 %v2192, %v2214
        %v2223 = vadd.f32 %v2193, %v2215
        %v2224 = vadd.f32 %v2194, %v2216
        %v2225 = vadd.f32 %v2195, %v2217
        %v2226 = vadd.f32 %v2196, %v2218
        %v2227 = vadd.f32 %v2197, %v2219
        %v2228 = vld [vmem:[%s308 + $0x200] sm:$0xff]
        %v2229 = vld [vmem:[%s308 + $0x208] sm:$0xff]
        %v2230 = vld [vmem:[%s308 + $0x210] sm:$0xff]
        %v2231 = vld [vmem:[%s308 + $0x218] sm:$0xff]
        %v2232 = vmul.f32 %v2228, %v870
        %v2233 = vmul.f32 %v2229, %v872
        %v2234 = vmul.f32 %v2230, %v1385
        %v2235 = vmul.f32 %v2231, %v1387
        %v2236 = vadd.s32 %v1756, 128
        %vm2237 = vcmp.lt.s32.totalorder %v2236, 600
        %vm2238 = vmand %vm1748, %vm2237
        %vm2239 = vmand %vm1749, %vm2237
        %vm2240 = vmand %vm1750, %vm2237
        %vm2241 = vmand %vm1751, %vm2237
        %v2242 = vsel %vm2238, %v2232, 0.0
        %v2243 = vsel %vm2239, %v2233, 0.0
        %v2244 = vsel %vm2240, %v2234, 0.0
        %v2245 = vsel %vm2241, %v2235, 0.0
        %v2246 = vand.u32 2147483647, %v870
        %v2247 = vand.u32 2147483647, %v872
        %v2248 = vand.u32 2147483647, %v1385
        %v2249 = vand.u32 2147483647, %v1387
        %v2250 = vadd.f32 %v2220, %v2242
        %v2251 = vadd.f32 %v2221, %v2243
        %v2252 = vadd.f32 %v2222, %v2244
        %v2253 = vadd.f32 %v2223, %v2245
        %v2254 = vadd.f32 %v2224, %v2246
        %v2255 = vadd.f32 %v2225, %v2247
        %v2256 = vadd.f32 %v2226, %v2248
        %v2257 = vadd.f32 %v2227, %v2249
        %v2258 = vld [vmem:[%s308 + $0x220] sm:$0xff]
        %v2259 = vld [vmem:[%s308 + $0x228] sm:$0xff]
        %v2260 = vld [vmem:[%s308 + $0x230] sm:$0xff]
        %v2261 = vld [vmem:[%s308 + $0x238] sm:$0xff]
        %v2262 = vmul.f32 %v2258, %v876
        %v2263 = vmul.f32 %v2259, %v878
        %v2264 = vmul.f32 %v2260, %v1391
        %v2265 = vmul.f32 %v2261, %v1393
        %v2266 = vadd.s32 %v1756, 136
        %vm2267 = vcmp.lt.s32.totalorder %v2266, 600
        %vm2268 = vmand %vm1748, %vm2267
        %vm2269 = vmand %vm1749, %vm2267
        %vm2270 = vmand %vm1750, %vm2267
        %vm2271 = vmand %vm1751, %vm2267
        %v2272 = vsel %vm2268, %v2262, 0.0
        %v2273 = vsel %vm2269, %v2263, 0.0
        %v2274 = vsel %vm2270, %v2264, 0.0
        %v2275 = vsel %vm2271, %v2265, 0.0
        %v2276 = vand.u32 2147483647, %v876
        %v2277 = vand.u32 2147483647, %v878
        %v2278 = vand.u32 2147483647, %v1391
        %v2279 = vand.u32 2147483647, %v1393
        %v2280 = vadd.f32 %v2250, %v2272
        %v2281 = vadd.f32 %v2251, %v2273
        %v2282 = vadd.f32 %v2252, %v2274
        %v2283 = vadd.f32 %v2253, %v2275
        %v2284 = vadd.f32 %v2254, %v2276
        %v2285 = vadd.f32 %v2255, %v2277
        %v2286 = vadd.f32 %v2256, %v2278
        %v2287 = vadd.f32 %v2257, %v2279
        %v2288 = vld [vmem:[%s308 + $0x240] sm:$0xff]
        %v2289 = vld [vmem:[%s308 + $0x248] sm:$0xff]
        %v2290 = vld [vmem:[%s308 + $0x250] sm:$0xff]
        %v2291 = vld [vmem:[%s308 + $0x258] sm:$0xff]
        %v2292 = vmul.f32 %v2288, %v882
        %v2293 = vmul.f32 %v2289, %v884
        %v2294 = vmul.f32 %v2290, %v1397
        %v2295 = vmul.f32 %v2291, %v1399
        %v2296 = vadd.s32 %v1756, 144
        %vm2297 = vcmp.lt.s32.totalorder %v2296, 600
        %vm2298 = vmand %vm1748, %vm2297
        %vm2299 = vmand %vm1749, %vm2297
        %vm2300 = vmand %vm1750, %vm2297
        %vm2301 = vmand %vm1751, %vm2297
        %v2302 = vsel %vm2298, %v2292, 0.0
        %v2303 = vsel %vm2299, %v2293, 0.0
        %v2304 = vsel %vm2300, %v2294, 0.0
        %v2305 = vsel %vm2301, %v2295, 0.0
        %v2306 = vand.u32 2147483647, %v882
        %v2307 = vand.u32 2147483647, %v884
        %v2308 = vand.u32 2147483647, %v1397
        %v2309 = vand.u32 2147483647, %v1399
        %v2310 = vadd.f32 %v2280, %v2302
        %v2311 = vadd.f32 %v2281, %v2303
        %v2312 = vadd.f32 %v2282, %v2304
        %v2313 = vadd.f32 %v2283, %v2305
        %v2314 = vadd.f32 %v2284, %v2306
        %v2315 = vadd.f32 %v2285, %v2307
        %v2316 = vadd.f32 %v2286, %v2308
        %v2317 = vadd.f32 %v2287, %v2309
        %v2318 = vld [vmem:[%s308 + $0x260] sm:$0xff]
        %v2319 = vld [vmem:[%s308 + $0x268] sm:$0xff]
        %v2320 = vld [vmem:[%s308 + $0x270] sm:$0xff]
        %v2321 = vld [vmem:[%s308 + $0x278] sm:$0xff]
        %v2322 = vmul.f32 %v2318, %v888
        %v2323 = vmul.f32 %v2319, %v890
        %v2324 = vmul.f32 %v2320, %v1403
        %v2325 = vmul.f32 %v2321, %v1405
        %v2326 = vadd.s32 %v1756, 152
        %vm2327 = vcmp.lt.s32.totalorder %v2326, 600
        %vm2328 = vmand %vm1748, %vm2327
        %vm2329 = vmand %vm1749, %vm2327
        %vm2330 = vmand %vm1750, %vm2327
        %vm2331 = vmand %vm1751, %vm2327
        %v2332 = vsel %vm2328, %v2322, 0.0
        %v2333 = vsel %vm2329, %v2323, 0.0
        %v2334 = vsel %vm2330, %v2324, 0.0
        %v2335 = vsel %vm2331, %v2325, 0.0
        %v2336 = vand.u32 2147483647, %v888
        %v2337 = vand.u32 2147483647, %v890
        %v2338 = vand.u32 2147483647, %v1403
        %v2339 = vand.u32 2147483647, %v1405
        %v2340 = vadd.f32 %v2310, %v2332
        %v2341 = vadd.f32 %v2311, %v2333
        %v2342 = vadd.f32 %v2312, %v2334
        %v2343 = vadd.f32 %v2313, %v2335
        %v2344 = vadd.f32 %v2314, %v2336
        %v2345 = vadd.f32 %v2315, %v2337
        %v2346 = vadd.f32 %v2316, %v2338
        %v2347 = vadd.f32 %v2317, %v2339
        %v2348 = vld [vmem:[%s308 + $0x280] sm:$0xff]
        %v2349 = vld [vmem:[%s308 + $0x288] sm:$0xff]
        %v2350 = vld [vmem:[%s308 + $0x290] sm:$0xff]
        %v2351 = vld [vmem:[%s308 + $0x298] sm:$0xff]
        %v2352 = vmul.f32 %v2348, %v894
        %v2353 = vmul.f32 %v2349, %v896
        %v2354 = vmul.f32 %v2350, %v1409
        %v2355 = vmul.f32 %v2351, %v1411
        %v2356 = vadd.s32 %v1756, 160
        %vm2357 = vcmp.lt.s32.totalorder %v2356, 600
        %vm2358 = vmand %vm1748, %vm2357
        %vm2359 = vmand %vm1749, %vm2357
        %vm2360 = vmand %vm1750, %vm2357
        %vm2361 = vmand %vm1751, %vm2357
        %v2362 = vsel %vm2358, %v2352, 0.0
        %v2363 = vsel %vm2359, %v2353, 0.0
        %v2364 = vsel %vm2360, %v2354, 0.0
        %v2365 = vsel %vm2361, %v2355, 0.0
        %v2366 = vand.u32 2147483647, %v894
        %v2367 = vand.u32 2147483647, %v896
        %v2368 = vand.u32 2147483647, %v1409
        %v2369 = vand.u32 2147483647, %v1411
        %v2370 = vadd.f32 %v2340, %v2362
        %v2371 = vadd.f32 %v2341, %v2363
        %v2372 = vadd.f32 %v2342, %v2364
        %v2373 = vadd.f32 %v2343, %v2365
        %v2374 = vadd.f32 %v2344, %v2366
        %v2375 = vadd.f32 %v2345, %v2367
        %v2376 = vadd.f32 %v2346, %v2368
        %v2377 = vadd.f32 %v2347, %v2369
        %v2378 = vld [vmem:[%s308 + $0x2a0] sm:$0xff]
        %v2379 = vld [vmem:[%s308 + $0x2a8] sm:$0xff]
        %v2380 = vld [vmem:[%s308 + $0x2b0] sm:$0xff]
        %v2381 = vld [vmem:[%s308 + $0x2b8] sm:$0xff]
        %v2382 = vmul.f32 %v2378, %v900
        %v2383 = vmul.f32 %v2379, %v902
        %v2384 = vmul.f32 %v2380, %v1415
        %v2385 = vmul.f32 %v2381, %v1417
        %v2386 = vadd.s32 %v1756, 168
        %vm2387 = vcmp.lt.s32.totalorder %v2386, 600
        %vm2388 = vmand %vm1748, %vm2387
        %vm2389 = vmand %vm1749, %vm2387
        %vm2390 = vmand %vm1750, %vm2387
        %vm2391 = vmand %vm1751, %vm2387
        %v2392 = vsel %vm2388, %v2382, 0.0
        %v2393 = vsel %vm2389, %v2383, 0.0
        %v2394 = vsel %vm2390, %v2384, 0.0
        %v2395 = vsel %vm2391, %v2385, 0.0
        %v2396 = vand.u32 2147483647, %v900
        %v2397 = vand.u32 2147483647, %v902
        %v2398 = vand.u32 2147483647, %v1415
        %v2399 = vand.u32 2147483647, %v1417
        %v2400 = vadd.f32 %v2370, %v2392
        %v2401 = vadd.f32 %v2371, %v2393
        %v2402 = vadd.f32 %v2372, %v2394
        %v2403 = vadd.f32 %v2373, %v2395
        %v2404 = vadd.f32 %v2374, %v2396
        %v2405 = vadd.f32 %v2375, %v2397
        %v2406 = vadd.f32 %v2376, %v2398
        %v2407 = vadd.f32 %v2377, %v2399
        %v2408 = vld [vmem:[%s308 + $0x2c0] sm:$0xff]
        %v2409 = vld [vmem:[%s308 + $0x2c8] sm:$0xff]
        %v2410 = vld [vmem:[%s308 + $0x2d0] sm:$0xff]
        %v2411 = vld [vmem:[%s308 + $0x2d8] sm:$0xff]
        %v2412 = vmul.f32 %v2408, %v906
        %v2413 = vmul.f32 %v2409, %v908
        %v2414 = vmul.f32 %v2410, %v1421
        %v2415 = vmul.f32 %v2411, %v1423
        %v2416 = vadd.s32 %v1756, 176
        %vm2417 = vcmp.lt.s32.totalorder %v2416, 600
        %vm2418 = vmand %vm1748, %vm2417
        %vm2419 = vmand %vm1749, %vm2417
        %vm2420 = vmand %vm1750, %vm2417
        %vm2421 = vmand %vm1751, %vm2417
        %v2422 = vsel %vm2418, %v2412, 0.0
        %v2423 = vsel %vm2419, %v2413, 0.0
        %v2424 = vsel %vm2420, %v2414, 0.0
        %v2425 = vsel %vm2421, %v2415, 0.0
        %v2426 = vand.u32 2147483647, %v906
        %v2427 = vand.u32 2147483647, %v908
        %v2428 = vand.u32 2147483647, %v1421
        %v2429 = vand.u32 2147483647, %v1423
        %v2430 = vadd.f32 %v2400, %v2422
        %v2431 = vadd.f32 %v2401, %v2423
        %v2432 = vadd.f32 %v2402, %v2424
        %v2433 = vadd.f32 %v2403, %v2425
        %v2434 = vadd.f32 %v2404, %v2426
        %v2435 = vadd.f32 %v2405, %v2427
        %v2436 = vadd.f32 %v2406, %v2428
        %v2437 = vadd.f32 %v2407, %v2429
        %v2438 = vld [vmem:[%s308 + $0x2e0] sm:$0xff]
        %v2439 = vld [vmem:[%s308 + $0x2e8] sm:$0xff]
        %v2440 = vld [vmem:[%s308 + $0x2f0] sm:$0xff]
        %v2441 = vld [vmem:[%s308 + $0x2f8] sm:$0xff]
        %v2442 = vmul.f32 %v2438, %v912
        %v2443 = vmul.f32 %v2439, %v914
        %v2444 = vmul.f32 %v2440, %v1427
        %v2445 = vmul.f32 %v2441, %v1429
        %v2446 = vadd.s32 %v1756, 184
        %vm2447 = vcmp.lt.s32.totalorder %v2446, 600
        %vm2448 = vmand %vm1748, %vm2447
        %vm2449 = vmand %vm1749, %vm2447
        %vm2450 = vmand %vm1750, %vm2447
        %vm2451 = vmand %vm1751, %vm2447
        %v2452 = vsel %vm2448, %v2442, 0.0
        %v2453 = vsel %vm2449, %v2443, 0.0
        %v2454 = vsel %vm2450, %v2444, 0.0
        %v2455 = vsel %vm2451, %v2445, 0.0
        %v2456 = vand.u32 2147483647, %v912
        %v2457 = vand.u32 2147483647, %v914
        %v2458 = vand.u32 2147483647, %v1427
        %v2459 = vand.u32 2147483647, %v1429
        %v2460 = vadd.f32 %v2430, %v2452
        %v2461 = vadd.f32 %v2431, %v2453
        %v2462 = vadd.f32 %v2432, %v2454
        %v2463 = vadd.f32 %v2433, %v2455
        %v2464 = vadd.f32 %v2434, %v2456
        %v2465 = vadd.f32 %v2435, %v2457
        %v2466 = vadd.f32 %v2436, %v2458
        %v2467 = vadd.f32 %v2437, %v2459
        %v2468 = vld [vmem:[%s308 + $0x300] sm:$0xff]
        %v2469 = vld [vmem:[%s308 + $0x308] sm:$0xff]
        %v2470 = vld [vmem:[%s308 + $0x310] sm:$0xff]
        %v2471 = vld [vmem:[%s308 + $0x318] sm:$0xff]
        %v2472 = vmul.f32 %v2468, %v918
        %v2473 = vmul.f32 %v2469, %v920
        %v2474 = vmul.f32 %v2470, %v1433
        %v2475 = vmul.f32 %v2471, %v1435
        %v2476 = vadd.s32 %v1756, 192
        %vm2477 = vcmp.lt.s32.totalorder %v2476, 600
        %vm2478 = vmand %vm1748, %vm2477
        %vm2479 = vmand %vm1749, %vm2477
        %vm2480 = vmand %vm1750, %vm2477
        %vm2481 = vmand %vm1751, %vm2477
        %v2482 = vsel %vm2478, %v2472, 0.0
        %v2483 = vsel %vm2479, %v2473, 0.0
        %v2484 = vsel %vm2480, %v2474, 0.0
        %v2485 = vsel %vm2481, %v2475, 0.0
        %v2486 = vand.u32 2147483647, %v918
        %v2487 = vand.u32 2147483647, %v920
        %v2488 = vand.u32 2147483647, %v1433
        %v2489 = vand.u32 2147483647, %v1435
        %v2490 = vadd.f32 %v2460, %v2482
        %v2491 = vadd.f32 %v2461, %v2483
        %v2492 = vadd.f32 %v2462, %v2484
        %v2493 = vadd.f32 %v2463, %v2485
        %v2494 = vadd.f32 %v2464, %v2486
        %v2495 = vadd.f32 %v2465, %v2487
        %v2496 = vadd.f32 %v2466, %v2488
        %v2497 = vadd.f32 %v2467, %v2489
        %v2498 = vld [vmem:[%s308 + $0x320] sm:$0xff]
        %v2499 = vld [vmem:[%s308 + $0x328] sm:$0xff]
        %v2500 = vld [vmem:[%s308 + $0x330] sm:$0xff]
        %v2501 = vld [vmem:[%s308 + $0x338] sm:$0xff]
        %v2502 = vmul.f32 %v2498, %v924
        %v2503 = vmul.f32 %v2499, %v926
        %v2504 = vmul.f32 %v2500, %v1439
        %v2505 = vmul.f32 %v2501, %v1441
        %v2506 = vadd.s32 %v1756, 200
        %vm2507 = vcmp.lt.s32.totalorder %v2506, 600
        %vm2508 = vmand %vm1748, %vm2507
        %vm2509 = vmand %vm1749, %vm2507
        %vm2510 = vmand %vm1750, %vm2507
        %vm2511 = vmand %vm1751, %vm2507
        %v2512 = vsel %vm2508, %v2502, 0.0
        %v2513 = vsel %vm2509, %v2503, 0.0
        %v2514 = vsel %vm2510, %v2504, 0.0
        %v2515 = vsel %vm2511, %v2505, 0.0
        %v2516 = vand.u32 2147483647, %v924
        %v2517 = vand.u32 2147483647, %v926
        %v2518 = vand.u32 2147483647, %v1439
        %v2519 = vand.u32 2147483647, %v1441
        %v2520 = vadd.f32 %v2490, %v2512
        %v2521 = vadd.f32 %v2491, %v2513
        %v2522 = vadd.f32 %v2492, %v2514
        %v2523 = vadd.f32 %v2493, %v2515
        %v2524 = vadd.f32 %v2494, %v2516
        %v2525 = vadd.f32 %v2495, %v2517
        %v2526 = vadd.f32 %v2496, %v2518
        %v2527 = vadd.f32 %v2497, %v2519
        %v2528 = vld [vmem:[%s308 + $0x340] sm:$0xff]
        %v2529 = vld [vmem:[%s308 + $0x348] sm:$0xff]
        %v2530 = vld [vmem:[%s308 + $0x350] sm:$0xff]
        %v2531 = vld [vmem:[%s308 + $0x358] sm:$0xff]
        %v2532 = vmul.f32 %v2528, %v930
        %v2533 = vmul.f32 %v2529, %v932
        %v2534 = vmul.f32 %v2530, %v1445
        %v2535 = vmul.f32 %v2531, %v1447
        %v2536 = vadd.s32 %v1756, 208
        %vm2537 = vcmp.lt.s32.totalorder %v2536, 600
        %vm2538 = vmand %vm1748, %vm2537
        %vm2539 = vmand %vm1749, %vm2537
        %vm2540 = vmand %vm1750, %vm2537
        %vm2541 = vmand %vm1751, %vm2537
        %v2542 = vsel %vm2538, %v2532, 0.0
        %v2543 = vsel %vm2539, %v2533, 0.0
        %v2544 = vsel %vm2540, %v2534, 0.0
        %v2545 = vsel %vm2541, %v2535, 0.0
        %v2546 = vand.u32 2147483647, %v930
        %v2547 = vand.u32 2147483647, %v932
        %v2548 = vand.u32 2147483647, %v1445
        %v2549 = vand.u32 2147483647, %v1447
        %v2550 = vadd.f32 %v2520, %v2542
        %v2551 = vadd.f32 %v2521, %v2543
        %v2552 = vadd.f32 %v2522, %v2544
        %v2553 = vadd.f32 %v2523, %v2545
        %v2554 = vadd.f32 %v2524, %v2546
        %v2555 = vadd.f32 %v2525, %v2547
        %v2556 = vadd.f32 %v2526, %v2548
        %v2557 = vadd.f32 %v2527, %v2549
        %v2558 = vld [vmem:[%s308 + $0x360] sm:$0xff]
        %v2559 = vld [vmem:[%s308 + $0x368] sm:$0xff]
        %v2560 = vld [vmem:[%s308 + $0x370] sm:$0xff]
        %v2561 = vld [vmem:[%s308 + $0x378] sm:$0xff]
        %v2562 = vmul.f32 %v2558, %v936
        %v2563 = vmul.f32 %v2559, %v938
        %v2564 = vmul.f32 %v2560, %v1451
        %v2565 = vmul.f32 %v2561, %v1453
        %v2566 = vadd.s32 %v1756, 216
        %vm2567 = vcmp.lt.s32.totalorder %v2566, 600
        %vm2568 = vmand %vm1748, %vm2567
        %vm2569 = vmand %vm1749, %vm2567
        %vm2570 = vmand %vm1750, %vm2567
        %vm2571 = vmand %vm1751, %vm2567
        %v2572 = vsel %vm2568, %v2562, 0.0
        %v2573 = vsel %vm2569, %v2563, 0.0
        %v2574 = vsel %vm2570, %v2564, 0.0
        %v2575 = vsel %vm2571, %v2565, 0.0
        %v2576 = vand.u32 2147483647, %v936
        %v2577 = vand.u32 2147483647, %v938
        %v2578 = vand.u32 2147483647, %v1451
        %v2579 = vand.u32 2147483647, %v1453
        %v2580 = vadd.f32 %v2550, %v2572
        %v2581 = vadd.f32 %v2551, %v2573
        %v2582 = vadd.f32 %v2552, %v2574
        %v2583 = vadd.f32 %v2553, %v2575
        %v2584 = vadd.f32 %v2554, %v2576
        %v2585 = vadd.f32 %v2555, %v2577
        %v2586 = vadd.f32 %v2556, %v2578
        %v2587 = vadd.f32 %v2557, %v2579
        %v2588 = vld [vmem:[%s308 + $0x380] sm:$0xff]
        %v2589 = vld [vmem:[%s308 + $0x388] sm:$0xff]
        %v2590 = vld [vmem:[%s308 + $0x390] sm:$0xff]
        %v2591 = vld [vmem:[%s308 + $0x398] sm:$0xff]
        %v2592 = vmul.f32 %v2588, %v942
        %v2593 = vmul.f32 %v2589, %v944
        %v2594 = vmul.f32 %v2590, %v1457
        %v2595 = vmul.f32 %v2591, %v1459
        %v2596 = vadd.s32 %v1756, 224
        %vm2597 = vcmp.lt.s32.totalorder %v2596, 600
        %vm2598 = vmand %vm1748, %vm2597
        %vm2599 = vmand %vm1749, %vm2597
        %vm2600 = vmand %vm1750, %vm2597
        %vm2601 = vmand %vm1751, %vm2597
        %v2602 = vsel %vm2598, %v2592, 0.0
        %v2603 = vsel %vm2599, %v2593, 0.0
        %v2604 = vsel %vm2600, %v2594, 0.0
        %v2605 = vsel %vm2601, %v2595, 0.0
        %v2606 = vand.u32 2147483647, %v942
        %v2607 = vand.u32 2147483647, %v944
        %v2608 = vand.u32 2147483647, %v1457
        %v2609 = vand.u32 2147483647, %v1459
        %v2610 = vadd.f32 %v2580, %v2602
        %v2611 = vadd.f32 %v2581, %v2603
        %v2612 = vadd.f32 %v2582, %v2604
        %v2613 = vadd.f32 %v2583, %v2605
        %v2614 = vadd.f32 %v2584, %v2606
        %v2615 = vadd.f32 %v2585, %v2607
        %v2616 = vadd.f32 %v2586, %v2608
        %v2617 = vadd.f32 %v2587, %v2609
        %v2618 = vld [vmem:[%s308 + $0x3a0] sm:$0xff]
        %v2619 = vld [vmem:[%s308 + $0x3a8] sm:$0xff]
        %v2620 = vld [vmem:[%s308 + $0x3b0] sm:$0xff]
        %v2621 = vld [vmem:[%s308 + $0x3b8] sm:$0xff]
        %v2622 = vmul.f32 %v2618, %v948
        %v2623 = vmul.f32 %v2619, %v950
        %v2624 = vmul.f32 %v2620, %v1463
        %v2625 = vmul.f32 %v2621, %v1465
        %v2626 = vadd.s32 %v1756, 232
        %vm2627 = vcmp.lt.s32.totalorder %v2626, 600
        %vm2628 = vmand %vm1748, %vm2627
        %vm2629 = vmand %vm1749, %vm2627
        %vm2630 = vmand %vm1750, %vm2627
        %vm2631 = vmand %vm1751, %vm2627
        %v2632 = vsel %vm2628, %v2622, 0.0
        %v2633 = vsel %vm2629, %v2623, 0.0
        %v2634 = vsel %vm2630, %v2624, 0.0
        %v2635 = vsel %vm2631, %v2625, 0.0
        %v2636 = vand.u32 2147483647, %v948
        %v2637 = vand.u32 2147483647, %v950
        %v2638 = vand.u32 2147483647, %v1463
        %v2639 = vand.u32 2147483647, %v1465
        %v2640 = vadd.f32 %v2610, %v2632
        %v2641 = vadd.f32 %v2611, %v2633
        %v2642 = vadd.f32 %v2612, %v2634
        %v2643 = vadd.f32 %v2613, %v2635
        %v2644 = vadd.f32 %v2614, %v2636
        %v2645 = vadd.f32 %v2615, %v2637
        %v2646 = vadd.f32 %v2616, %v2638
        %v2647 = vadd.f32 %v2617, %v2639
        %v2648 = vld [vmem:[%s308 + $0x3c0] sm:$0xff]
        %v2649 = vld [vmem:[%s308 + $0x3c8] sm:$0xff]
        %v2650 = vld [vmem:[%s308 + $0x3d0] sm:$0xff]
        %v2651 = vld [vmem:[%s308 + $0x3d8] sm:$0xff]
        %v2652 = vmul.f32 %v2648, %v954
        %v2653 = vmul.f32 %v2649, %v956
        %v2654 = vmul.f32 %v2650, %v1469
        %v2655 = vmul.f32 %v2651, %v1471
        %v2656 = vadd.s32 %v1756, 240
        %vm2657 = vcmp.lt.s32.totalorder %v2656, 600
        %vm2658 = vmand %vm1748, %vm2657
        %vm2659 = vmand %vm1749, %vm2657
        %vm2660 = vmand %vm1750, %vm2657
        %vm2661 = vmand %vm1751, %vm2657
        %v2662 = vsel %vm2658, %v2652, 0.0
        %v2663 = vsel %vm2659, %v2653, 0.0
        %v2664 = vsel %vm2660, %v2654, 0.0
        %v2665 = vsel %vm2661, %v2655, 0.0
        %v2666 = vand.u32 2147483647, %v954
        %v2667 = vand.u32 2147483647, %v956
        %v2668 = vand.u32 2147483647, %v1469
        %v2669 = vand.u32 2147483647, %v1471
        %v2670 = vadd.f32 %v2640, %v2662
        %v2671 = vadd.f32 %v2641, %v2663
        %v2672 = vadd.f32 %v2642, %v2664
        %v2673 = vadd.f32 %v2643, %v2665
        %v2674 = vadd.f32 %v2644, %v2666
        %v2675 = vadd.f32 %v2645, %v2667
        %v2676 = vadd.f32 %v2646, %v2668
        %v2677 = vadd.f32 %v2647, %v2669
        %v2678 = vld [vmem:[%s308 + $0x3e0] sm:$0xff]
        %v2679 = vld [vmem:[%s308 + $0x3e8] sm:$0xff]
        %v2680 = vld [vmem:[%s308 + $0x3f0] sm:$0xff]
        %v2681 = vld [vmem:[%s308 + $0x3f8] sm:$0xff]
        %v2682 = vmul.f32 %v2678, %v960
        %v2683 = vmul.f32 %v2679, %v962
        %v2684 = vmul.f32 %v2680, %v1475
        %v2685 = vmul.f32 %v2681, %v1477
        %v2686 = vadd.s32 %v1756, 248
        %vm2687 = vcmp.lt.s32.totalorder %v2686, 600
        %vm2688 = vmand %vm1748, %vm2687
        %vm2689 = vmand %vm1749, %vm2687
        %vm2690 = vmand %vm1750, %vm2687
        %vm2691 = vmand %vm1751, %vm2687
        %v2692 = vsel %vm2688, %v2682, 0.0
        %v2693 = vsel %vm2689, %v2683, 0.0
        %v2694 = vsel %vm2690, %v2684, 0.0
        %v2695 = vsel %vm2691, %v2685, 0.0
        %v2696 = vand.u32 2147483647, %v960
        %v2697 = vand.u32 2147483647, %v962
        %v2698 = vand.u32 2147483647, %v1475
        %v2699 = vand.u32 2147483647, %v1477
        %v2700 = vadd.f32 %v2670, %v2692
        %v2701 = vadd.f32 %v2671, %v2693
        %v2702 = vadd.f32 %v2672, %v2694
        %v2703 = vadd.f32 %v2673, %v2695
        %v2704 = vadd.f32 %v2674, %v2696
        %v2705 = vadd.f32 %v2675, %v2697
        %v2706 = vadd.f32 %v2676, %v2698
        %v2707 = vadd.f32 %v2677, %v2699
        %v2708 = vld [vmem:[%s308 + $0x400] sm:$0xff]
        %v2709 = vld [vmem:[%s308 + $0x408] sm:$0xff]
        %v2710 = vld [vmem:[%s308 + $0x410] sm:$0xff]
        %v2711 = vld [vmem:[%s308 + $0x418] sm:$0xff]
        %v2712 = vmul.f32 %v2708, %v966
        %v2713 = vmul.f32 %v2709, %v968
        %v2714 = vmul.f32 %v2710, %v1481
        %v2715 = vmul.f32 %v2711, %v1483
        %v2716 = vadd.s32 %v1756, 256
        %vm2717 = vcmp.lt.s32.totalorder %v2716, 600
        %vm2718 = vmand %vm1748, %vm2717
        %vm2719 = vmand %vm1749, %vm2717
        %vm2720 = vmand %vm1750, %vm2717
        %vm2721 = vmand %vm1751, %vm2717
        %v2722 = vsel %vm2718, %v2712, 0.0
        %v2723 = vsel %vm2719, %v2713, 0.0
        %v2724 = vsel %vm2720, %v2714, 0.0
        %v2725 = vsel %vm2721, %v2715, 0.0
        %v2726 = vand.u32 2147483647, %v966
        %v2727 = vand.u32 2147483647, %v968
        %v2728 = vand.u32 2147483647, %v1481
        %v2729 = vand.u32 2147483647, %v1483
        %v2730 = vadd.f32 %v2700, %v2722
        %v2731 = vadd.f32 %v2701, %v2723
        %v2732 = vadd.f32 %v2702, %v2724
        %v2733 = vadd.f32 %v2703, %v2725
        %v2734 = vadd.f32 %v2704, %v2726
        %v2735 = vadd.f32 %v2705, %v2727
        %v2736 = vadd.f32 %v2706, %v2728
        %v2737 = vadd.f32 %v2707, %v2729
        %v2738 = vld [vmem:[%s308 + $0x420] sm:$0xff]
        %v2739 = vld [vmem:[%s308 + $0x428] sm:$0xff]
        %v2740 = vld [vmem:[%s308 + $0x430] sm:$0xff]
        %v2741 = vld [vmem:[%s308 + $0x438] sm:$0xff]
        %v2742 = vmul.f32 %v2738, %v972
        %v2743 = vmul.f32 %v2739, %v974
        %v2744 = vmul.f32 %v2740, %v1487
        %v2745 = vmul.f32 %v2741, %v1489
        %v2746 = vadd.s32 %v1756, 264
        %vm2747 = vcmp.lt.s32.totalorder %v2746, 600
        %vm2748 = vmand %vm1748, %vm2747
        %vm2749 = vmand %vm1749, %vm2747
        %vm2750 = vmand %vm1750, %vm2747
        %vm2751 = vmand %vm1751, %vm2747
        %v2752 = vsel %vm2748, %v2742, 0.0
        %v2753 = vsel %vm2749, %v2743, 0.0
        %v2754 = vsel %vm2750, %v2744, 0.0
        %v2755 = vsel %vm2751, %v2745, 0.0
        %v2756 = vand.u32 2147483647, %v972
        %v2757 = vand.u32 2147483647, %v974
        %v2758 = vand.u32 2147483647, %v1487
        %v2759 = vand.u32 2147483647, %v1489
        %v2760 = vadd.f32 %v2730, %v2752
        %v2761 = vadd.f32 %v2731, %v2753
        %v2762 = vadd.f32 %v2732, %v2754
        %v2763 = vadd.f32 %v2733, %v2755
        %v2764 = vadd.f32 %v2734, %v2756
        %v2765 = vadd.f32 %v2735, %v2757
        %v2766 = vadd.f32 %v2736, %v2758
        %v2767 = vadd.f32 %v2737, %v2759
        %v2768 = vld [vmem:[%s308 + $0x440] sm:$0xff]
        %v2769 = vld [vmem:[%s308 + $0x448] sm:$0xff]
        %v2770 = vld [vmem:[%s308 + $0x450] sm:$0xff]
        %v2771 = vld [vmem:[%s308 + $0x458] sm:$0xff]
        %v2772 = vmul.f32 %v2768, %v978
        %v2773 = vmul.f32 %v2769, %v980
        %v2774 = vmul.f32 %v2770, %v1493
        %v2775 = vmul.f32 %v2771, %v1495
        %v2776 = vadd.s32 %v1756, 272
        %vm2777 = vcmp.lt.s32.totalorder %v2776, 600
        %vm2778 = vmand %vm1748, %vm2777
        %vm2779 = vmand %vm1749, %vm2777
        %vm2780 = vmand %vm1750, %vm2777
        %vm2781 = vmand %vm1751, %vm2777
        %v2782 = vsel %vm2778, %v2772, 0.0
        %v2783 = vsel %vm2779, %v2773, 0.0
        %v2784 = vsel %vm2780, %v2774, 0.0
        %v2785 = vsel %vm2781, %v2775, 0.0
        %v2786 = vand.u32 2147483647, %v978
        %v2787 = vand.u32 2147483647, %v980
        %v2788 = vand.u32 2147483647, %v1493
        %v2789 = vand.u32 2147483647, %v1495
        %v2790 = vadd.f32 %v2760, %v2782
        %v2791 = vadd.f32 %v2761, %v2783
        %v2792 = vadd.f32 %v2762, %v2784
        %v2793 = vadd.f32 %v2763, %v2785
        %v2794 = vadd.f32 %v2764, %v2786
        %v2795 = vadd.f32 %v2765, %v2787
        %v2796 = vadd.f32 %v2766, %v2788
        %v2797 = vadd.f32 %v2767, %v2789
        %v2798 = vld [vmem:[%s308 + $0x460] sm:$0xff]
        %v2799 = vld [vmem:[%s308 + $0x468] sm:$0xff]
        %v2800 = vld [vmem:[%s308 + $0x470] sm:$0xff]
        %v2801 = vld [vmem:[%s308 + $0x478] sm:$0xff]
        %v2802 = vmul.f32 %v2798, %v984
        %v2803 = vmul.f32 %v2799, %v986
        %v2804 = vmul.f32 %v2800, %v1499
        %v2805 = vmul.f32 %v2801, %v1501
        %v2806 = vadd.s32 %v1756, 280
        %vm2807 = vcmp.lt.s32.totalorder %v2806, 600
        %vm2808 = vmand %vm1748, %vm2807
        %vm2809 = vmand %vm1749, %vm2807
        %vm2810 = vmand %vm1750, %vm2807
        %vm2811 = vmand %vm1751, %vm2807
        %v2812 = vsel %vm2808, %v2802, 0.0
        %v2813 = vsel %vm2809, %v2803, 0.0
        %v2814 = vsel %vm2810, %v2804, 0.0
        %v2815 = vsel %vm2811, %v2805, 0.0
        %v2816 = vand.u32 2147483647, %v984
        %v2817 = vand.u32 2147483647, %v986
        %v2818 = vand.u32 2147483647, %v1499
        %v2819 = vand.u32 2147483647, %v1501
        %v2820 = vadd.f32 %v2790, %v2812
        %v2821 = vadd.f32 %v2791, %v2813
        %v2822 = vadd.f32 %v2792, %v2814
        %v2823 = vadd.f32 %v2793, %v2815
        %v2824 = vadd.f32 %v2794, %v2816
        %v2825 = vadd.f32 %v2795, %v2817
        %v2826 = vadd.f32 %v2796, %v2818
        %v2827 = vadd.f32 %v2797, %v2819
        %v2828 = vld [vmem:[%s308 + $0x480] sm:$0xff]
        %v2829 = vld [vmem:[%s308 + $0x488] sm:$0xff]
        %v2830 = vld [vmem:[%s308 + $0x490] sm:$0xff]
        %v2831 = vld [vmem:[%s308 + $0x498] sm:$0xff]
        %v2832 = vmul.f32 %v2828, %v990
        %v2833 = vmul.f32 %v2829, %v992
        %v2834 = vmul.f32 %v2830, %v1505
        %v2835 = vmul.f32 %v2831, %v1507
        %v2836 = vadd.s32 %v1756, 288
        %vm2837 = vcmp.lt.s32.totalorder %v2836, 600
        %vm2838 = vmand %vm1748, %vm2837
        %vm2839 = vmand %vm1749, %vm2837
        %vm2840 = vmand %vm1750, %vm2837
        %vm2841 = vmand %vm1751, %vm2837
        %v2842 = vsel %vm2838, %v2832, 0.0
        %v2843 = vsel %vm2839, %v2833, 0.0
        %v2844 = vsel %vm2840, %v2834, 0.0
        %v2845 = vsel %vm2841, %v2835, 0.0
        %v2846 = vand.u32 2147483647, %v990
        %v2847 = vand.u32 2147483647, %v992
        %v2848 = vand.u32 2147483647, %v1505
        %v2849 = vand.u32 2147483647, %v1507
        %v2850 = vadd.f32 %v2820, %v2842
        %v2851 = vadd.f32 %v2821, %v2843
        %v2852 = vadd.f32 %v2822, %v2844
        %v2853 = vadd.f32 %v2823, %v2845
        %v2854 = vadd.f32 %v2824, %v2846
        %v2855 = vadd.f32 %v2825, %v2847
        %v2856 = vadd.f32 %v2826, %v2848
        %v2857 = vadd.f32 %v2827, %v2849
        %v2858 = vld [vmem:[%s308 + $0x4a0] sm:$0xff]
        %v2859 = vld [vmem:[%s308 + $0x4a8] sm:$0xff]
        %v2860 = vld [vmem:[%s308 + $0x4b0] sm:$0xff]
        %v2861 = vld [vmem:[%s308 + $0x4b8] sm:$0xff]
        %v2862 = vmul.f32 %v2858, %v996
        %v2863 = vmul.f32 %v2859, %v998
        %v2864 = vmul.f32 %v2860, %v1511
        %v2865 = vmul.f32 %v2861, %v1513
        %v2866 = vadd.s32 %v1756, 296
        %vm2867 = vcmp.lt.s32.totalorder %v2866, 600
        %vm2868 = vmand %vm1748, %vm2867
        %vm2869 = vmand %vm1749, %vm2867
        %vm2870 = vmand %vm1750, %vm2867
        %vm2871 = vmand %vm1751, %vm2867
        %v2872 = vsel %vm2868, %v2862, 0.0
        %v2873 = vsel %vm2869, %v2863, 0.0
        %v2874 = vsel %vm2870, %v2864, 0.0
        %v2875 = vsel %vm2871, %v2865, 0.0
        %v2876 = vand.u32 2147483647, %v996
        %v2877 = vand.u32 2147483647, %v998
        %v2878 = vand.u32 2147483647, %v1511
        %v2879 = vand.u32 2147483647, %v1513
        %v2880 = vadd.f32 %v2850, %v2872
        %v2881 = vadd.f32 %v2851, %v2873
        %v2882 = vadd.f32 %v2852, %v2874
        %v2883 = vadd.f32 %v2853, %v2875
        %v2884 = vadd.f32 %v2854, %v2876
        %v2885 = vadd.f32 %v2855, %v2877
        %v2886 = vadd.f32 %v2856, %v2878
        %v2887 = vadd.f32 %v2857, %v2879
        %v2888 = vld [vmem:[%s308 + $0x4c0] sm:$0xff]
        %v2889 = vld [vmem:[%s308 + $0x4c8] sm:$0xff]
        %v2890 = vld [vmem:[%s308 + $0x4d0] sm:$0xff]
        %v2891 = vld [vmem:[%s308 + $0x4d8] sm:$0xff]
        %v2892 = vmul.f32 %v2888, %v1002
        %v2893 = vmul.f32 %v2889, %v1004
        %v2894 = vmul.f32 %v2890, %v1517
        %v2895 = vmul.f32 %v2891, %v1519
        %v2896 = vadd.s32 %v1756, 304
        %vm2897 = vcmp.lt.s32.totalorder %v2896, 600
        %vm2898 = vmand %vm1748, %vm2897
        %vm2899 = vmand %vm1749, %vm2897
        %vm2900 = vmand %vm1750, %vm2897
        %vm2901 = vmand %vm1751, %vm2897
        %v2902 = vsel %vm2898, %v2892, 0.0
        %v2903 = vsel %vm2899, %v2893, 0.0
        %v2904 = vsel %vm2900, %v2894, 0.0
        %v2905 = vsel %vm2901, %v2895, 0.0
        %v2906 = vand.u32 2147483647, %v1002
        %v2907 = vand.u32 2147483647, %v1004
        %v2908 = vand.u32 2147483647, %v1517
        %v2909 = vand.u32 2147483647, %v1519
        %v2910 = vadd.f32 %v2880, %v2902
        %v2911 = vadd.f32 %v2881, %v2903
        %v2912 = vadd.f32 %v2882, %v2904
        %v2913 = vadd.f32 %v2883, %v2905
        %v2914 = vadd.f32 %v2884, %v2906
        %v2915 = vadd.f32 %v2885, %v2907
        %v2916 = vadd.f32 %v2886, %v2908
        %v2917 = vadd.f32 %v2887, %v2909
        %v2918 = vld [vmem:[%s308 + $0x4e0] sm:$0xff]
        %v2919 = vld [vmem:[%s308 + $0x4e8] sm:$0xff]
        %v2920 = vld [vmem:[%s308 + $0x4f0] sm:$0xff]
        %v2921 = vld [vmem:[%s308 + $0x4f8] sm:$0xff]
        %v2922 = vmul.f32 %v2918, %v1008
        %v2923 = vmul.f32 %v2919, %v1010
        %v2924 = vmul.f32 %v2920, %v1523
        %v2925 = vmul.f32 %v2921, %v1525
        %v2926 = vadd.s32 %v1756, 312
        %vm2927 = vcmp.lt.s32.totalorder %v2926, 600
        %vm2928 = vmand %vm1748, %vm2927
        %vm2929 = vmand %vm1749, %vm2927
        %vm2930 = vmand %vm1750, %vm2927
        %vm2931 = vmand %vm1751, %vm2927
        %v2932 = vsel %vm2928, %v2922, 0.0
        %v2933 = vsel %vm2929, %v2923, 0.0
        %v2934 = vsel %vm2930, %v2924, 0.0
        %v2935 = vsel %vm2931, %v2925, 0.0
        %v2936 = vand.u32 2147483647, %v1008
        %v2937 = vand.u32 2147483647, %v1010
        %v2938 = vand.u32 2147483647, %v1523
        %v2939 = vand.u32 2147483647, %v1525
        %v2940 = vadd.f32 %v2910, %v2932
        %v2941 = vadd.f32 %v2911, %v2933
        %v2942 = vadd.f32 %v2912, %v2934
        %v2943 = vadd.f32 %v2913, %v2935
        %v2944 = vadd.f32 %v2914, %v2936
        %v2945 = vadd.f32 %v2915, %v2937
        %v2946 = vadd.f32 %v2916, %v2938
        %v2947 = vadd.f32 %v2917, %v2939
        %v2948 = vld [vmem:[%s308 + $0x500] sm:$0xff]
        %v2949 = vld [vmem:[%s308 + $0x508] sm:$0xff]
        %v2950 = vld [vmem:[%s308 + $0x510] sm:$0xff]
        %v2951 = vld [vmem:[%s308 + $0x518] sm:$0xff]
        %v2952 = vmul.f32 %v2948, %v1014
        %v2953 = vmul.f32 %v2949, %v1016
        %v2954 = vmul.f32 %v2950, %v1529
        %v2955 = vmul.f32 %v2951, %v1531
        %v2956 = vadd.s32 %v1756, 320
        %vm2957 = vcmp.lt.s32.totalorder %v2956, 600
        %vm2958 = vmand %vm1748, %vm2957
        %vm2959 = vmand %vm1749, %vm2957
        %vm2960 = vmand %vm1750, %vm2957
        %vm2961 = vmand %vm1751, %vm2957
        %v2962 = vsel %vm2958, %v2952, 0.0
        %v2963 = vsel %vm2959, %v2953, 0.0
        %v2964 = vsel %vm2960, %v2954, 0.0
        %v2965 = vsel %vm2961, %v2955, 0.0
        %v2966 = vand.u32 2147483647, %v1014
        %v2967 = vand.u32 2147483647, %v1016
        %v2968 = vand.u32 2147483647, %v1529
        %v2969 = vand.u32 2147483647, %v1531
        %v2970 = vadd.f32 %v2940, %v2962
        %v2971 = vadd.f32 %v2941, %v2963
        %v2972 = vadd.f32 %v2942, %v2964
        %v2973 = vadd.f32 %v2943, %v2965
        %v2974 = vadd.f32 %v2944, %v2966
        %v2975 = vadd.f32 %v2945, %v2967
        %v2976 = vadd.f32 %v2946, %v2968
        %v2977 = vadd.f32 %v2947, %v2969
        %v2978 = vld [vmem:[%s308 + $0x520] sm:$0xff]
        %v2979 = vld [vmem:[%s308 + $0x528] sm:$0xff]
        %v2980 = vld [vmem:[%s308 + $0x530] sm:$0xff]
        %v2981 = vld [vmem:[%s308 + $0x538] sm:$0xff]
        %v2982 = vmul.f32 %v2978, %v1020
        %v2983 = vmul.f32 %v2979, %v1022
        %v2984 = vmul.f32 %v2980, %v1535
        %v2985 = vmul.f32 %v2981, %v1537
        %v2986 = vadd.s32 %v1756, 328
        %vm2987 = vcmp.lt.s32.totalorder %v2986, 600
        %vm2988 = vmand %vm1748, %vm2987
        %vm2989 = vmand %vm1749, %vm2987
        %vm2990 = vmand %vm1750, %vm2987
        %vm2991 = vmand %vm1751, %vm2987
        %v2992 = vsel %vm2988, %v2982, 0.0
        %v2993 = vsel %vm2989, %v2983, 0.0
        %v2994 = vsel %vm2990, %v2984, 0.0
        %v2995 = vsel %vm2991, %v2985, 0.0
        %v2996 = vand.u32 2147483647, %v1020
        %v2997 = vand.u32 2147483647, %v1022
        %v2998 = vand.u32 2147483647, %v1535
        %v2999 = vand.u32 2147483647, %v1537
        %v3000 = vadd.f32 %v2970, %v2992
        %v3001 = vadd.f32 %v2971, %v2993
        %v3002 = vadd.f32 %v2972, %v2994
        %v3003 = vadd.f32 %v2973, %v2995
        %v3004 = vadd.f32 %v2974, %v2996
        %v3005 = vadd.f32 %v2975, %v2997
        %v3006 = vadd.f32 %v2976, %v2998
        %v3007 = vadd.f32 %v2977, %v2999
        %v3008 = vld [vmem:[%s308 + $0x540] sm:$0xff]
        %v3009 = vld [vmem:[%s308 + $0x548] sm:$0xff]
        %v3010 = vld [vmem:[%s308 + $0x550] sm:$0xff]
        %v3011 = vld [vmem:[%s308 + $0x558] sm:$0xff]
        %v3012 = vmul.f32 %v3008, %v1026
        %v3013 = vmul.f32 %v3009, %v1028
        %v3014 = vmul.f32 %v3010, %v1541
        %v3015 = vmul.f32 %v3011, %v1543
        %v3016 = vadd.s32 %v1756, 336
        %vm3017 = vcmp.lt.s32.totalorder %v3016, 600
        %vm3018 = vmand %vm1748, %vm3017
        %vm3019 = vmand %vm1749, %vm3017
        %vm3020 = vmand %vm1750, %vm3017
        %vm3021 = vmand %vm1751, %vm3017
        %v3022 = vsel %vm3018, %v3012, 0.0
        %v3023 = vsel %vm3019, %v3013, 0.0
        %v3024 = vsel %vm3020, %v3014, 0.0
        %v3025 = vsel %vm3021, %v3015, 0.0
        %v3026 = vand.u32 2147483647, %v1026
        %v3027 = vand.u32 2147483647, %v1028
        %v3028 = vand.u32 2147483647, %v1541
        %v3029 = vand.u32 2147483647, %v1543
        %v3030 = vadd.f32 %v3000, %v3022
        %v3031 = vadd.f32 %v3001, %v3023
        %v3032 = vadd.f32 %v3002, %v3024
        %v3033 = vadd.f32 %v3003, %v3025
        %v3034 = vadd.f32 %v3004, %v3026
        %v3035 = vadd.f32 %v3005, %v3027
        %v3036 = vadd.f32 %v3006, %v3028
        %v3037 = vadd.f32 %v3007, %v3029
        %v3038 = vld [vmem:[%s308 + $0x560] sm:$0xff]
        %v3039 = vld [vmem:[%s308 + $0x568] sm:$0xff]
        %v3040 = vld [vmem:[%s308 + $0x570] sm:$0xff]
        %v3041 = vld [vmem:[%s308 + $0x578] sm:$0xff]
        %v3042 = vmul.f32 %v3038, %v1032
        %v3043 = vmul.f32 %v3039, %v1034
        %v3044 = vmul.f32 %v3040, %v1547
        %v3045 = vmul.f32 %v3041, %v1549
        %v3046 = vadd.s32 %v1756, 344
        %vm3047 = vcmp.lt.s32.totalorder %v3046, 600
        %vm3048 = vmand %vm1748, %vm3047
        %vm3049 = vmand %vm1749, %vm3047
        %vm3050 = vmand %vm1750, %vm3047
        %vm3051 = vmand %vm1751, %vm3047
        %v3052 = vsel %vm3048, %v3042, 0.0
        %v3053 = vsel %vm3049, %v3043, 0.0
        %v3054 = vsel %vm3050, %v3044, 0.0
        %v3055 = vsel %vm3051, %v3045, 0.0
        %v3056 = vand.u32 2147483647, %v1032
        %v3057 = vand.u32 2147483647, %v1034
        %v3058 = vand.u32 2147483647, %v1547
        %v3059 = vand.u32 2147483647, %v1549
        %v3060 = vadd.f32 %v3030, %v3052
        %v3061 = vadd.f32 %v3031, %v3053
        %v3062 = vadd.f32 %v3032, %v3054
        %v3063 = vadd.f32 %v3033, %v3055
        %v3064 = vadd.f32 %v3034, %v3056
        %v3065 = vadd.f32 %v3035, %v3057
        %v3066 = vadd.f32 %v3036, %v3058
        %v3067 = vadd.f32 %v3037, %v3059
        %v3068 = vld [vmem:[%s308 + $0x580] sm:$0xff]
        %v3069 = vld [vmem:[%s308 + $0x588] sm:$0xff]
        %v3070 = vld [vmem:[%s308 + $0x590] sm:$0xff]
        %v3071 = vld [vmem:[%s308 + $0x598] sm:$0xff]
        %v3072 = vmul.f32 %v3068, %v1038
        %v3073 = vmul.f32 %v3069, %v1040
        %v3074 = vmul.f32 %v3070, %v1553
        %v3075 = vmul.f32 %v3071, %v1555
        %v3076 = vadd.s32 %v1756, 352
        %vm3077 = vcmp.lt.s32.totalorder %v3076, 600
        %vm3078 = vmand %vm1748, %vm3077
        %vm3079 = vmand %vm1749, %vm3077
        %vm3080 = vmand %vm1750, %vm3077
        %vm3081 = vmand %vm1751, %vm3077
        %v3082 = vsel %vm3078, %v3072, 0.0
        %v3083 = vsel %vm3079, %v3073, 0.0
        %v3084 = vsel %vm3080, %v3074, 0.0
        %v3085 = vsel %vm3081, %v3075, 0.0
        %v3086 = vand.u32 2147483647, %v1038
        %v3087 = vand.u32 2147483647, %v1040
        %v3088 = vand.u32 2147483647, %v1553
        %v3089 = vand.u32 2147483647, %v1555
        %v3090 = vadd.f32 %v3060, %v3082
        %v3091 = vadd.f32 %v3061, %v3083
        %v3092 = vadd.f32 %v3062, %v3084
        %v3093 = vadd.f32 %v3063, %v3085
        %v3094 = vadd.f32 %v3064, %v3086
        %v3095 = vadd.f32 %v3065, %v3087
        %v3096 = vadd.f32 %v3066, %v3088
        %v3097 = vadd.f32 %v3067, %v3089
        %v3098 = vld [vmem:[%s308 + $0x5a0] sm:$0xff]
        %v3099 = vld [vmem:[%s308 + $0x5a8] sm:$0xff]
        %v3100 = vld [vmem:[%s308 + $0x5b0] sm:$0xff]
        %v3101 = vld [vmem:[%s308 + $0x5b8] sm:$0xff]
        %v3102 = vmul.f32 %v3098, %v1044
        %v3103 = vmul.f32 %v3099, %v1046
        %v3104 = vmul.f32 %v3100, %v1559
        %v3105 = vmul.f32 %v3101, %v1561
        %v3106 = vadd.s32 %v1756, 360
        %vm3107 = vcmp.lt.s32.totalorder %v3106, 600
        %vm3108 = vmand %vm1748, %vm3107
        %vm3109 = vmand %vm1749, %vm3107
        %vm3110 = vmand %vm1750, %vm3107
        %vm3111 = vmand %vm1751, %vm3107
        %v3112 = vsel %vm3108, %v3102, 0.0
        %v3113 = vsel %vm3109, %v3103, 0.0
        %v3114 = vsel %vm3110, %v3104, 0.0
        %v3115 = vsel %vm3111, %v3105, 0.0
        %v3116 = vand.u32 2147483647, %v1044
        %v3117 = vand.u32 2147483647, %v1046
        %v3118 = vand.u32 2147483647, %v1559
        %v3119 = vand.u32 2147483647, %v1561
        %v3120 = vadd.f32 %v3090, %v3112
        %v3121 = vadd.f32 %v3091, %v3113
        %v3122 = vadd.f32 %v3092, %v3114
        %v3123 = vadd.f32 %v3093, %v3115
        %v3124 = vadd.f32 %v3094, %v3116
        %v3125 = vadd.f32 %v3095, %v3117
        %v3126 = vadd.f32 %v3096, %v3118
        %v3127 = vadd.f32 %v3097, %v3119
        %v3128 = vld [vmem:[%s308 + $0x5c0] sm:$0xff]
        %v3129 = vld [vmem:[%s308 + $0x5c8] sm:$0xff]
        %v3130 = vld [vmem:[%s308 + $0x5d0] sm:$0xff]
        %v3131 = vld [vmem:[%s308 + $0x5d8] sm:$0xff]
        %v3132 = vmul.f32 %v3128, %v1050
        %v3133 = vmul.f32 %v3129, %v1052
        %v3134 = vmul.f32 %v3130, %v1565
        %v3135 = vmul.f32 %v3131, %v1567
        %v3136 = vadd.s32 %v1756, 368
        %vm3137 = vcmp.lt.s32.totalorder %v3136, 600
        %vm3138 = vmand %vm1748, %vm3137
        %vm3139 = vmand %vm1749, %vm3137
        %vm3140 = vmand %vm1750, %vm3137
        %vm3141 = vmand %vm1751, %vm3137
        %v3142 = vsel %vm3138, %v3132, 0.0
        %v3143 = vsel %vm3139, %v3133, 0.0
        %v3144 = vsel %vm3140, %v3134, 0.0
        %v3145 = vsel %vm3141, %v3135, 0.0
        %v3146 = vand.u32 2147483647, %v1050
        %v3147 = vand.u32 2147483647, %v1052
        %v3148 = vand.u32 2147483647, %v1565
        %v3149 = vand.u32 2147483647, %v1567
        %v3150 = vadd.f32 %v3120, %v3142
        %v3151 = vadd.f32 %v3121, %v3143
        %v3152 = vadd.f32 %v3122, %v3144
        %v3153 = vadd.f32 %v3123, %v3145
        %v3154 = vadd.f32 %v3124, %v3146
        %v3155 = vadd.f32 %v3125, %v3147
        %v3156 = vadd.f32 %v3126, %v3148
        %v3157 = vadd.f32 %v3127, %v3149
        %v3158 = vld [vmem:[%s308 + $0x5e0] sm:$0xff]
        %v3159 = vld [vmem:[%s308 + $0x5e8] sm:$0xff]
        %v3160 = vld [vmem:[%s308 + $0x5f0] sm:$0xff]
        %v3161 = vld [vmem:[%s308 + $0x5f8] sm:$0xff]
        %v3162 = vmul.f32 %v3158, %v1056
        %v3163 = vmul.f32 %v3159, %v1058
        %v3164 = vmul.f32 %v3160, %v1571
        %v3165 = vmul.f32 %v3161, %v1573
        %v3166 = vadd.s32 %v1756, 376
        %vm3167 = vcmp.lt.s32.totalorder %v3166, 600
        %vm3168 = vmand %vm1748, %vm3167
        %vm3169 = vmand %vm1749, %vm3167
        %vm3170 = vmand %vm1750, %vm3167
        %vm3171 = vmand %vm1751, %vm3167
        %v3172 = vsel %vm3168, %v3162, 0.0
        %v3173 = vsel %vm3169, %v3163, 0.0
        %v3174 = vsel %vm3170, %v3164, 0.0
        %v3175 = vsel %vm3171, %v3165, 0.0
        %v3176 = vand.u32 2147483647, %v1056
        %v3177 = vand.u32 2147483647, %v1058
        %v3178 = vand.u32 2147483647, %v1571
        %v3179 = vand.u32 2147483647, %v1573
        %v3180 = vadd.f32 %v3150, %v3172
        %v3181 = vadd.f32 %v3151, %v3173
        %v3182 = vadd.f32 %v3152, %v3174
        %v3183 = vadd.f32 %v3153, %v3175
        %v3184 = vadd.f32 %v3154, %v3176
        %v3185 = vadd.f32 %v3155, %v3177
        %v3186 = vadd.f32 %v3156, %v3178
        %v3187 = vadd.f32 %v3157, %v3179
        %v3188 = vld [vmem:[%s308 + $0x600] sm:$0xff]
        %v3189 = vld [vmem:[%s308 + $0x608] sm:$0xff]
        %v3190 = vld [vmem:[%s308 + $0x610] sm:$0xff]
        %v3191 = vld [vmem:[%s308 + $0x618] sm:$0xff]
        %v3192 = vmul.f32 %v3188, %v1062
        %v3193 = vmul.f32 %v3189, %v1064
        %v3194 = vmul.f32 %v3190, %v1577
        %v3195 = vmul.f32 %v3191, %v1579
        %v3196 = vadd.s32 %v1756, 384
        %vm3197 = vcmp.lt.s32.totalorder %v3196, 600
        %vm3198 = vmand %vm1748, %vm3197
        %vm3199 = vmand %vm1749, %vm3197
        %vm3200 = vmand %vm1750, %vm3197
        %vm3201 = vmand %vm1751, %vm3197
        %v3202 = vsel %vm3198, %v3192, 0.0
        %v3203 = vsel %vm3199, %v3193, 0.0
        %v3204 = vsel %vm3200, %v3194, 0.0
        %v3205 = vsel %vm3201, %v3195, 0.0
        %v3206 = vand.u32 2147483647, %v1062
        %v3207 = vand.u32 2147483647, %v1064
        %v3208 = vand.u32 2147483647, %v1577
        %v3209 = vand.u32 2147483647, %v1579
        %v3210 = vadd.f32 %v3180, %v3202
        %v3211 = vadd.f32 %v3181, %v3203
        %v3212 = vadd.f32 %v3182, %v3204
        %v3213 = vadd.f32 %v3183, %v3205
        %v3214 = vadd.f32 %v3184, %v3206
        %v3215 = vadd.f32 %v3185, %v3207
        %v3216 = vadd.f32 %v3186, %v3208
        %v3217 = vadd.f32 %v3187, %v3209
        %v3218 = vld [vmem:[%s308 + $0x620] sm:$0xff]
        %v3219 = vld [vmem:[%s308 + $0x628] sm:$0xff]
        %v3220 = vld [vmem:[%s308 + $0x630] sm:$0xff]
        %v3221 = vld [vmem:[%s308 + $0x638] sm:$0xff]
        %v3222 = vmul.f32 %v3218, %v1068
        %v3223 = vmul.f32 %v3219, %v1070
        %v3224 = vmul.f32 %v3220, %v1583
        %v3225 = vmul.f32 %v3221, %v1585
        %v3226 = vadd.s32 %v1756, 392
        %vm3227 = vcmp.lt.s32.totalorder %v3226, 600
        %vm3228 = vmand %vm1748, %vm3227
        %vm3229 = vmand %vm1749, %vm3227
        %vm3230 = vmand %vm1750, %vm3227
        %vm3231 = vmand %vm1751, %vm3227
        %v3232 = vsel %vm3228, %v3222, 0.0
        %v3233 = vsel %vm3229, %v3223, 0.0
        %v3234 = vsel %vm3230, %v3224, 0.0
        %v3235 = vsel %vm3231, %v3225, 0.0
        %v3236 = vand.u32 2147483647, %v1068
        %v3237 = vand.u32 2147483647, %v1070
        %v3238 = vand.u32 2147483647, %v1583
        %v3239 = vand.u32 2147483647, %v1585
        %v3240 = vadd.f32 %v3210, %v3232
        %v3241 = vadd.f32 %v3211, %v3233
        %v3242 = vadd.f32 %v3212, %v3234
        %v3243 = vadd.f32 %v3213, %v3235
        %v3244 = vadd.f32 %v3214, %v3236
        %v3245 = vadd.f32 %v3215, %v3237
        %v3246 = vadd.f32 %v3216, %v3238
        %v3247 = vadd.f32 %v3217, %v3239
        %v3248 = vld [vmem:[%s308 + $0x640] sm:$0xff]
        %v3249 = vld [vmem:[%s308 + $0x648] sm:$0xff]
        %v3250 = vld [vmem:[%s308 + $0x650] sm:$0xff]
        %v3251 = vld [vmem:[%s308 + $0x658] sm:$0xff]
        %v3252 = vmul.f32 %v3248, %v1074
        %v3253 = vmul.f32 %v3249, %v1076
        %v3254 = vmul.f32 %v3250, %v1589
        %v3255 = vmul.f32 %v3251, %v1591
        %v3256 = vadd.s32 %v1756, 400
        %vm3257 = vcmp.lt.s32.totalorder %v3256, 600
        %vm3258 = vmand %vm1748, %vm3257
        %vm3259 = vmand %vm1749, %vm3257
        %vm3260 = vmand %vm1750, %vm3257
        %vm3261 = vmand %vm1751, %vm3257
        %v3262 = vsel %vm3258, %v3252, 0.0
        %v3263 = vsel %vm3259, %v3253, 0.0
        %v3264 = vsel %vm3260, %v3254, 0.0
        %v3265 = vsel %vm3261, %v3255, 0.0
        %v3266 = vand.u32 2147483647, %v1074
        %v3267 = vand.u32 2147483647, %v1076
        %v3268 = vand.u32 2147483647, %v1589
        %v3269 = vand.u32 2147483647, %v1591
        %v3270 = vadd.f32 %v3240, %v3262
        %v3271 = vadd.f32 %v3241, %v3263
        %v3272 = vadd.f32 %v3242, %v3264
        %v3273 = vadd.f32 %v3243, %v3265
        %v3274 = vadd.f32 %v3244, %v3266
        %v3275 = vadd.f32 %v3245, %v3267
        %v3276 = vadd.f32 %v3246, %v3268
        %v3277 = vadd.f32 %v3247, %v3269
        %v3278 = vld [vmem:[%s308 + $0x660] sm:$0xff]
        %v3279 = vld [vmem:[%s308 + $0x668] sm:$0xff]
        %v3280 = vld [vmem:[%s308 + $0x670] sm:$0xff]
        %v3281 = vld [vmem:[%s308 + $0x678] sm:$0xff]
        %v3282 = vmul.f32 %v3278, %v1080
        %v3283 = vmul.f32 %v3279, %v1082
        %v3284 = vmul.f32 %v3280, %v1595
        %v3285 = vmul.f32 %v3281, %v1597
        %v3286 = vadd.s32 %v1756, 408
        %vm3287 = vcmp.lt.s32.totalorder %v3286, 600
        %vm3288 = vmand %vm1748, %vm3287
        %vm3289 = vmand %vm1749, %vm3287
        %vm3290 = vmand %vm1750, %vm3287
        %vm3291 = vmand %vm1751, %vm3287
        %v3292 = vsel %vm3288, %v3282, 0.0
        %v3293 = vsel %vm3289, %v3283, 0.0
        %v3294 = vsel %vm3290, %v3284, 0.0
        %v3295 = vsel %vm3291, %v3285, 0.0
        %v3296 = vand.u32 2147483647, %v1080
        %v3297 = vand.u32 2147483647, %v1082
        %v3298 = vand.u32 2147483647, %v1595
        %v3299 = vand.u32 2147483647, %v1597
        %v3300 = vadd.f32 %v3270, %v3292
        %v3301 = vadd.f32 %v3271, %v3293
        %v3302 = vadd.f32 %v3272, %v3294
        %v3303 = vadd.f32 %v3273, %v3295
        %v3304 = vadd.f32 %v3274, %v3296
        %v3305 = vadd.f32 %v3275, %v3297
        %v3306 = vadd.f32 %v3276, %v3298
        %v3307 = vadd.f32 %v3277, %v3299
        %v3308 = vld [vmem:[%s308 + $0x680] sm:$0xff]
        %v3309 = vld [vmem:[%s308 + $0x688] sm:$0xff]
        %v3310 = vld [vmem:[%s308 + $0x690] sm:$0xff]
        %v3311 = vld [vmem:[%s308 + $0x698] sm:$0xff]
        %v3312 = vmul.f32 %v3308, %v1086
        %v3313 = vmul.f32 %v3309, %v1088
        %v3314 = vmul.f32 %v3310, %v1601
        %v3315 = vmul.f32 %v3311, %v1603
        %v3316 = vadd.s32 %v1756, 416
        %vm3317 = vcmp.lt.s32.totalorder %v3316, 600
        %vm3318 = vmand %vm1748, %vm3317
        %vm3319 = vmand %vm1749, %vm3317
        %vm3320 = vmand %vm1750, %vm3317
        %vm3321 = vmand %vm1751, %vm3317
        %v3322 = vsel %vm3318, %v3312, 0.0
        %v3323 = vsel %vm3319, %v3313, 0.0
        %v3324 = vsel %vm3320, %v3314, 0.0
        %v3325 = vsel %vm3321, %v3315, 0.0
        %v3326 = vand.u32 2147483647, %v1086
        %v3327 = vand.u32 2147483647, %v1088
        %v3328 = vand.u32 2147483647, %v1601
        %v3329 = vand.u32 2147483647, %v1603
        %v3330 = vadd.f32 %v3300, %v3322
        %v3331 = vadd.f32 %v3301, %v3323
        %v3332 = vadd.f32 %v3302, %v3324
        %v3333 = vadd.f32 %v3303, %v3325
        %v3334 = vadd.f32 %v3304, %v3326
        %v3335 = vadd.f32 %v3305, %v3327
        %v3336 = vadd.f32 %v3306, %v3328
        %v3337 = vadd.f32 %v3307, %v3329
        %v3338 = vld [vmem:[%s308 + $0x6a0] sm:$0xff]
        %v3339 = vld [vmem:[%s308 + $0x6a8] sm:$0xff]
        %v3340 = vld [vmem:[%s308 + $0x6b0] sm:$0xff]
        %v3341 = vld [vmem:[%s308 + $0x6b8] sm:$0xff]
        %v3342 = vmul.f32 %v3338, %v1092
        %v3343 = vmul.f32 %v3339, %v1094
        %v3344 = vmul.f32 %v3340, %v1607
        %v3345 = vmul.f32 %v3341, %v1609
        %v3346 = vadd.s32 %v1756, 424
        %vm3347 = vcmp.lt.s32.totalorder %v3346, 600
        %vm3348 = vmand %vm1748, %vm3347
        %vm3349 = vmand %vm1749, %vm3347
        %vm3350 = vmand %vm1750, %vm3347
        %vm3351 = vmand %vm1751, %vm3347
        %v3352 = vsel %vm3348, %v3342, 0.0
        %v3353 = vsel %vm3349, %v3343, 0.0
        %v3354 = vsel %vm3350, %v3344, 0.0
        %v3355 = vsel %vm3351, %v3345, 0.0
        %v3356 = vand.u32 2147483647, %v1092
        %v3357 = vand.u32 2147483647, %v1094
        %v3358 = vand.u32 2147483647, %v1607
        %v3359 = vand.u32 2147483647, %v1609
        %v3360 = vadd.f32 %v3330, %v3352
        %v3361 = vadd.f32 %v3331, %v3353
        %v3362 = vadd.f32 %v3332, %v3354
        %v3363 = vadd.f32 %v3333, %v3355
        %v3364 = vadd.f32 %v3334, %v3356
        %v3365 = vadd.f32 %v3335, %v3357
        %v3366 = vadd.f32 %v3336, %v3358
        %v3367 = vadd.f32 %v3337, %v3359
        %v3368 = vld [vmem:[%s308 + $0x6c0] sm:$0xff]
        %v3369 = vld [vmem:[%s308 + $0x6c8] sm:$0xff]
        %v3370 = vld [vmem:[%s308 + $0x6d0] sm:$0xff]
        %v3371 = vld [vmem:[%s308 + $0x6d8] sm:$0xff]
        %v3372 = vmul.f32 %v3368, %v1098
        %v3373 = vmul.f32 %v3369, %v1100
        %v3374 = vmul.f32 %v3370, %v1613
        %v3375 = vmul.f32 %v3371, %v1615
        %v3376 = vadd.s32 %v1756, 432
        %vm3377 = vcmp.lt.s32.totalorder %v3376, 600
        %vm3378 = vmand %vm1748, %vm3377
        %vm3379 = vmand %vm1749, %vm3377
        %vm3380 = vmand %vm1750, %vm3377
        %vm3381 = vmand %vm1751, %vm3377
        %v3382 = vsel %vm3378, %v3372, 0.0
        %v3383 = vsel %vm3379, %v3373, 0.0
        %v3384 = vsel %vm3380, %v3374, 0.0
        %v3385 = vsel %vm3381, %v3375, 0.0
        %v3386 = vand.u32 2147483647, %v1098
        %v3387 = vand.u32 2147483647, %v1100
        %v3388 = vand.u32 2147483647, %v1613
        %v3389 = vand.u32 2147483647, %v1615
        %v3390 = vadd.f32 %v3360, %v3382
        %v3391 = vadd.f32 %v3361, %v3383
        %v3392 = vadd.f32 %v3362, %v3384
        %v3393 = vadd.f32 %v3363, %v3385
        %v3394 = vadd.f32 %v3364, %v3386
        %v3395 = vadd.f32 %v3365, %v3387
        %v3396 = vadd.f32 %v3366, %v3388
        %v3397 = vadd.f32 %v3367, %v3389
        %v3398 = vld [vmem:[%s308 + $0x6e0] sm:$0xff]
        %v3399 = vld [vmem:[%s308 + $0x6e8] sm:$0xff]
        %v3400 = vld [vmem:[%s308 + $0x6f0] sm:$0xff]
        %v3401 = vld [vmem:[%s308 + $0x6f8] sm:$0xff]
        %v3402 = vmul.f32 %v3398, %v1104
        %v3403 = vmul.f32 %v3399, %v1106
        %v3404 = vmul.f32 %v3400, %v1619
        %v3405 = vmul.f32 %v3401, %v1621
        %v3406 = vadd.s32 %v1756, 440
        %vm3407 = vcmp.lt.s32.totalorder %v3406, 600
        %vm3408 = vmand %vm1748, %vm3407
        %vm3409 = vmand %vm1749, %vm3407
        %vm3410 = vmand %vm1750, %vm3407
        %vm3411 = vmand %vm1751, %vm3407
        %v3412 = vsel %vm3408, %v3402, 0.0
        %v3413 = vsel %vm3409, %v3403, 0.0
        %v3414 = vsel %vm3410, %v3404, 0.0
        %v3415 = vsel %vm3411, %v3405, 0.0
        %v3416 = vand.u32 2147483647, %v1104
        %v3417 = vand.u32 2147483647, %v1106
        %v3418 = vand.u32 2147483647, %v1619
        %v3419 = vand.u32 2147483647, %v1621
        %v3420 = vadd.f32 %v3390, %v3412
        %v3421 = vadd.f32 %v3391, %v3413
        %v3422 = vadd.f32 %v3392, %v3414
        %v3423 = vadd.f32 %v3393, %v3415
        %v3424 = vadd.f32 %v3394, %v3416
        %v3425 = vadd.f32 %v3395, %v3417
        %v3426 = vadd.f32 %v3396, %v3418
        %v3427 = vadd.f32 %v3397, %v3419
        %v3428 = vld [vmem:[%s308 + $0x700] sm:$0xff]
        %v3429 = vld [vmem:[%s308 + $0x708] sm:$0xff]
        %v3430 = vld [vmem:[%s308 + $0x710] sm:$0xff]
        %v3431 = vld [vmem:[%s308 + $0x718] sm:$0xff]
        %v3432 = vmul.f32 %v3428, %v1110
        %v3433 = vmul.f32 %v3429, %v1112
        %v3434 = vmul.f32 %v3430, %v1625
        %v3435 = vmul.f32 %v3431, %v1627
        %v3436 = vadd.s32 %v1756, 448
        %vm3437 = vcmp.lt.s32.totalorder %v3436, 600
        %vm3438 = vmand %vm1748, %vm3437
        %vm3439 = vmand %vm1749, %vm3437
        %vm3440 = vmand %vm1750, %vm3437
        %vm3441 = vmand %vm1751, %vm3437
        %v3442 = vsel %vm3438, %v3432, 0.0
        %v3443 = vsel %vm3439, %v3433, 0.0
        %v3444 = vsel %vm3440, %v3434, 0.0
        %v3445 = vsel %vm3441, %v3435, 0.0
        %v3446 = vand.u32 2147483647, %v1110
        %v3447 = vand.u32 2147483647, %v1112
        %v3448 = vand.u32 2147483647, %v1625
        %v3449 = vand.u32 2147483647, %v1627
        %v3450 = vadd.f32 %v3420, %v3442
        %v3451 = vadd.f32 %v3421, %v3443
        %v3452 = vadd.f32 %v3422, %v3444
        %v3453 = vadd.f32 %v3423, %v3445
        %v3454 = vadd.f32 %v3424, %v3446
        %v3455 = vadd.f32 %v3425, %v3447
        %v3456 = vadd.f32 %v3426, %v3448
        %v3457 = vadd.f32 %v3427, %v3449
        %v3458 = vld [vmem:[%s308 + $0x720] sm:$0xff]
        %v3459 = vld [vmem:[%s308 + $0x728] sm:$0xff]
        %v3460 = vld [vmem:[%s308 + $0x730] sm:$0xff]
        %v3461 = vld [vmem:[%s308 + $0x738] sm:$0xff]
        %v3462 = vmul.f32 %v3458, %v1116
        %v3463 = vmul.f32 %v3459, %v1118
        %v3464 = vmul.f32 %v3460, %v1631
        %v3465 = vmul.f32 %v3461, %v1633
        %v3466 = vadd.s32 %v1756, 456
        %vm3467 = vcmp.lt.s32.totalorder %v3466, 600
        %vm3468 = vmand %vm1748, %vm3467
        %vm3469 = vmand %vm1749, %vm3467
        %vm3470 = vmand %vm1750, %vm3467
        %vm3471 = vmand %vm1751, %vm3467
        %v3472 = vsel %vm3468, %v3462, 0.0
        %v3473 = vsel %vm3469, %v3463, 0.0
        %v3474 = vsel %vm3470, %v3464, 0.0
        %v3475 = vsel %vm3471, %v3465, 0.0
        %v3476 = vand.u32 2147483647, %v1116
        %v3477 = vand.u32 2147483647, %v1118
        %v3478 = vand.u32 2147483647, %v1631
        %v3479 = vand.u32 2147483647, %v1633
        %v3480 = vadd.f32 %v3450, %v3472
        %v3481 = vadd.f32 %v3451, %v3473
        %v3482 = vadd.f32 %v3452, %v3474
        %v3483 = vadd.f32 %v3453, %v3475
        %v3484 = vadd.f32 %v3454, %v3476
        %v3485 = vadd.f32 %v3455, %v3477
        %v3486 = vadd.f32 %v3456, %v3478
        %v3487 = vadd.f32 %v3457, %v3479
        %v3488 = vld [vmem:[%s308 + $0x740] sm:$0xff]
        %v3489 = vld [vmem:[%s308 + $0x748] sm:$0xff]
        %v3490 = vld [vmem:[%s308 + $0x750] sm:$0xff]
        %v3491 = vld [vmem:[%s308 + $0x758] sm:$0xff]
        %v3492 = vmul.f32 %v3488, %v1122
        %v3493 = vmul.f32 %v3489, %v1124
        %v3494 = vmul.f32 %v3490, %v1637
        %v3495 = vmul.f32 %v3491, %v1639
        %v3496 = vadd.s32 %v1756, 464
        %vm3497 = vcmp.lt.s32.totalorder %v3496, 600
        %vm3498 = vmand %vm1748, %vm3497
        %vm3499 = vmand %vm1749, %vm3497
        %vm3500 = vmand %vm1750, %vm3497
        %vm3501 = vmand %vm1751, %vm3497
        %v3502 = vsel %vm3498, %v3492, 0.0
        %v3503 = vsel %vm3499, %v3493, 0.0
        %v3504 = vsel %vm3500, %v3494, 0.0
        %v3505 = vsel %vm3501, %v3495, 0.0
        %v3506 = vand.u32 2147483647, %v1122
        %v3507 = vand.u32 2147483647, %v1124
        %v3508 = vand.u32 2147483647, %v1637
        %v3509 = vand.u32 2147483647, %v1639
        %v3510 = vadd.f32 %v3480, %v3502
        %v3511 = vadd.f32 %v3481, %v3503
        %v3512 = vadd.f32 %v3482, %v3504
        %v3513 = vadd.f32 %v3483, %v3505
        %v3514 = vadd.f32 %v3484, %v3506
        %v3515 = vadd.f32 %v3485, %v3507
        %v3516 = vadd.f32 %v3486, %v3508
        %v3517 = vadd.f32 %v3487, %v3509
        %v3518 = vld [vmem:[%s308 + $0x760] sm:$0xff]
        %v3519 = vld [vmem:[%s308 + $0x768] sm:$0xff]
        %v3520 = vld [vmem:[%s308 + $0x770] sm:$0xff]
        %v3521 = vld [vmem:[%s308 + $0x778] sm:$0xff]
        %v3522 = vmul.f32 %v3518, %v1128
        %v3523 = vmul.f32 %v3519, %v1130
        %v3524 = vmul.f32 %v3520, %v1643
        %v3525 = vmul.f32 %v3521, %v1645
        %v3526 = vadd.s32 %v1756, 472
        %vm3527 = vcmp.lt.s32.totalorder %v3526, 600
        %vm3528 = vmand %vm1748, %vm3527
        %vm3529 = vmand %vm1749, %vm3527
        %vm3530 = vmand %vm1750, %vm3527
        %vm3531 = vmand %vm1751, %vm3527
        %v3532 = vsel %vm3528, %v3522, 0.0
        %v3533 = vsel %vm3529, %v3523, 0.0
        %v3534 = vsel %vm3530, %v3524, 0.0
        %v3535 = vsel %vm3531, %v3525, 0.0
        %v3536 = vand.u32 2147483647, %v1128
        %v3537 = vand.u32 2147483647, %v1130
        %v3538 = vand.u32 2147483647, %v1643
        %v3539 = vand.u32 2147483647, %v1645
        %v3540 = vadd.f32 %v3510, %v3532
        %v3541 = vadd.f32 %v3511, %v3533
        %v3542 = vadd.f32 %v3512, %v3534
        %v3543 = vadd.f32 %v3513, %v3535
        %v3544 = vadd.f32 %v3514, %v3536
        %v3545 = vadd.f32 %v3515, %v3537
        %v3546 = vadd.f32 %v3516, %v3538
        %v3547 = vadd.f32 %v3517, %v3539
        %v3548 = vld [vmem:[%s308 + $0x780] sm:$0xff]
        %v3549 = vld [vmem:[%s308 + $0x788] sm:$0xff]
        %v3550 = vld [vmem:[%s308 + $0x790] sm:$0xff]
        %v3551 = vld [vmem:[%s308 + $0x798] sm:$0xff]
        %v3552 = vmul.f32 %v3548, %v1134
        %v3553 = vmul.f32 %v3549, %v1136
        %v3554 = vmul.f32 %v3550, %v1649
        %v3555 = vmul.f32 %v3551, %v1651
        %v3556 = vadd.s32 %v1756, 480
        %vm3557 = vcmp.lt.s32.totalorder %v3556, 600
        %vm3558 = vmand %vm1748, %vm3557
        %vm3559 = vmand %vm1749, %vm3557
        %vm3560 = vmand %vm1750, %vm3557
        %vm3561 = vmand %vm1751, %vm3557
        %v3562 = vsel %vm3558, %v3552, 0.0
        %v3563 = vsel %vm3559, %v3553, 0.0
        %v3564 = vsel %vm3560, %v3554, 0.0
        %v3565 = vsel %vm3561, %v3555, 0.0
        %v3566 = vand.u32 2147483647, %v1134
        %v3567 = vand.u32 2147483647, %v1136
        %v3568 = vand.u32 2147483647, %v1649
        %v3569 = vand.u32 2147483647, %v1651
        %v3570 = vadd.f32 %v3540, %v3562
        %v3571 = vadd.f32 %v3541, %v3563
        %v3572 = vadd.f32 %v3542, %v3564
        %v3573 = vadd.f32 %v3543, %v3565
        %v3574 = vadd.f32 %v3544, %v3566
        %v3575 = vadd.f32 %v3545, %v3567
        %v3576 = vadd.f32 %v3546, %v3568
        %v3577 = vadd.f32 %v3547, %v3569
        %v3578 = vld [vmem:[%s308 + $0x7a0] sm:$0xff]
        %v3579 = vld [vmem:[%s308 + $0x7a8] sm:$0xff]
        %v3580 = vld [vmem:[%s308 + $0x7b0] sm:$0xff]
        %v3581 = vld [vmem:[%s308 + $0x7b8] sm:$0xff]
        %v3582 = vmul.f32 %v3578, %v1140
        %v3583 = vmul.f32 %v3579, %v1142
        %v3584 = vmul.f32 %v3580, %v1655
        %v3585 = vmul.f32 %v3581, %v1657
        %v3586 = vadd.s32 %v1756, 488
        %vm3587 = vcmp.lt.s32.totalorder %v3586, 600
        %vm3588 = vmand %vm1748, %vm3587
        %vm3589 = vmand %vm1749, %vm3587
        %vm3590 = vmand %vm1750, %vm3587
        %vm3591 = vmand %vm1751, %vm3587
        %v3592 = vsel %vm3588, %v3582, 0.0
        %v3593 = vsel %vm3589, %v3583, 0.0
        %v3594 = vsel %vm3590, %v3584, 0.0
        %v3595 = vsel %vm3591, %v3585, 0.0
        %v3596 = vand.u32 2147483647, %v1140
        %v3597 = vand.u32 2147483647, %v1142
        %v3598 = vand.u32 2147483647, %v1655
        %v3599 = vand.u32 2147483647, %v1657
        %v3600 = vadd.f32 %v3570, %v3592
        %v3601 = vadd.f32 %v3571, %v3593
        %v3602 = vadd.f32 %v3572, %v3594
        %v3603 = vadd.f32 %v3573, %v3595
        %v3604 = vadd.f32 %v3574, %v3596
        %v3605 = vadd.f32 %v3575, %v3597
        %v3606 = vadd.f32 %v3576, %v3598
        %v3607 = vadd.f32 %v3577, %v3599
        %v3608 = vld [vmem:[%s308 + $0x7c0] sm:$0xff]
        %v3609 = vld [vmem:[%s308 + $0x7c8] sm:$0xff]
        %v3610 = vld [vmem:[%s308 + $0x7d0] sm:$0xff]
        %v3611 = vld [vmem:[%s308 + $0x7d8] sm:$0xff]
        %v3612 = vmul.f32 %v3608, %v1146
        %v3613 = vmul.f32 %v3609, %v1148
        %v3614 = vmul.f32 %v3610, %v1661
        %v3615 = vmul.f32 %v3611, %v1663
        %v3616 = vadd.s32 %v1756, 496
        %vm3617 = vcmp.lt.s32.totalorder %v3616, 600
        %vm3618 = vmand %vm1748, %vm3617
        %vm3619 = vmand %vm1749, %vm3617
        %vm3620 = vmand %vm1750, %vm3617
        %vm3621 = vmand %vm1751, %vm3617
        %v3622 = vsel %vm3618, %v3612, 0.0
        %v3623 = vsel %vm3619, %v3613, 0.0
        %v3624 = vsel %vm3620, %v3614, 0.0
        %v3625 = vsel %vm3621, %v3615, 0.0
        %v3626 = vand.u32 2147483647, %v1146
        %v3627 = vand.u32 2147483647, %v1148
        %v3628 = vand.u32 2147483647, %v1661
        %v3629 = vand.u32 2147483647, %v1663
        %v3630 = vadd.f32 %v3600, %v3622
        %v3631 = vadd.f32 %v3601, %v3623
        %v3632 = vadd.f32 %v3602, %v3624
        %v3633 = vadd.f32 %v3603, %v3625
        %v3634 = vadd.f32 %v3604, %v3626
        %v3635 = vadd.f32 %v3605, %v3627
        %v3636 = vadd.f32 %v3606, %v3628
        %v3637 = vadd.f32 %v3607, %v3629
        %v3638 = vld [vmem:[%s308 + $0x7e0] sm:$0xff]
        %v3639 = vld [vmem:[%s308 + $0x7e8] sm:$0xff]
        %v3640 = vld [vmem:[%s308 + $0x7f0] sm:$0xff]
        %v3641 = vld [vmem:[%s308 + $0x7f8] sm:$0xff]
        %v3642 = vmul.f32 %v3638, %v1152
        %v3643 = vmul.f32 %v3639, %v1154
        %v3644 = vmul.f32 %v3640, %v1667
        %v3645 = vmul.f32 %v3641, %v1669
        %v3646 = vadd.s32 %v1756, 504
        %vm3647 = vcmp.lt.s32.totalorder %v3646, 600
        %vm3648 = vmand %vm1748, %vm3647
        %vm3649 = vmand %vm1749, %vm3647
        %vm3650 = vmand %vm1750, %vm3647
        %vm3651 = vmand %vm1751, %vm3647
        %v3652 = vsel %vm3648, %v3642, 0.0
        %v3653 = vsel %vm3649, %v3643, 0.0
        %v3654 = vsel %vm3650, %v3644, 0.0
        %v3655 = vsel %vm3651, %v3645, 0.0
        %v3656 = vand.u32 2147483647, %v1152
        %v3657 = vand.u32 2147483647, %v1154
        %v3658 = vand.u32 2147483647, %v1667
        %v3659 = vand.u32 2147483647, %v1669
        %v3660 = vadd.f32 %v3630, %v3652
        %v3661 = vadd.f32 %v3631, %v3653
        %v3662 = vadd.f32 %v3632, %v3654
        %v3663 = vadd.f32 %v3633, %v3655
        %v3664 = vadd.f32 %v3634, %v3656
        %v3665 = vadd.f32 %v3635, %v3657
        %v3666 = vadd.f32 %v3636, %v3658
        %v3667 = vadd.f32 %v3637, %v3659
        %v3668 = vld [vmem:[%s308 + $0x800] sm:$0xff]
        %v3669 = vld [vmem:[%s308 + $0x808] sm:$0xff]
        %v3670 = vld [vmem:[%s308 + $0x810] sm:$0xff]
        %v3671 = vld [vmem:[%s308 + $0x818] sm:$0xff]
        %v3672 = vmul.f32 %v3668, %v1158
        %v3673 = vmul.f32 %v3669, %v1160
        %v3674 = vmul.f32 %v3670, %v1673
        %v3675 = vmul.f32 %v3671, %v1675
        %v3676 = vadd.s32 %v1756, 512
        %vm3677 = vcmp.lt.s32.totalorder %v3676, 600
        %vm3678 = vmand %vm1748, %vm3677
        %vm3679 = vmand %vm1749, %vm3677
        %vm3680 = vmand %vm1750, %vm3677
        %vm3681 = vmand %vm1751, %vm3677
        %v3682 = vsel %vm3678, %v3672, 0.0
        %v3683 = vsel %vm3679, %v3673, 0.0
        %v3684 = vsel %vm3680, %v3674, 0.0
        %v3685 = vsel %vm3681, %v3675, 0.0
        %v3686 = vand.u32 2147483647, %v1158
        %v3687 = vand.u32 2147483647, %v1160
        %v3688 = vand.u32 2147483647, %v1673
        %v3689 = vand.u32 2147483647, %v1675
        %v3690 = vadd.f32 %v3660, %v3682
        %v3691 = vadd.f32 %v3661, %v3683
        %v3692 = vadd.f32 %v3662, %v3684
        %v3693 = vadd.f32 %v3663, %v3685
        %v3694 = vadd.f32 %v3664, %v3686
        %v3695 = vadd.f32 %v3665, %v3687
        %v3696 = vadd.f32 %v3666, %v3688
        %v3697 = vadd.f32 %v3667, %v3689
        %v3698 = vld [vmem:[%s308 + $0x820] sm:$0xff]
        %v3699 = vld [vmem:[%s308 + $0x828] sm:$0xff]
        %v3700 = vld [vmem:[%s308 + $0x830] sm:$0xff]
        %v3701 = vld [vmem:[%s308 + $0x838] sm:$0xff]
        %v3702 = vmul.f32 %v3698, %v1164
        %v3703 = vmul.f32 %v3699, %v1166
        %v3704 = vmul.f32 %v3700, %v1679
        %v3705 = vmul.f32 %v3701, %v1681
        %v3706 = vadd.s32 %v1756, 520
        %vm3707 = vcmp.lt.s32.totalorder %v3706, 600
        %vm3708 = vmand %vm1748, %vm3707
        %vm3709 = vmand %vm1749, %vm3707
        %vm3710 = vmand %vm1750, %vm3707
        %vm3711 = vmand %vm1751, %vm3707
        %v3712 = vsel %vm3708, %v3702, 0.0
        %v3713 = vsel %vm3709, %v3703, 0.0
        %v3714 = vsel %vm3710, %v3704, 0.0
        %v3715 = vsel %vm3711, %v3705, 0.0
        %v3716 = vand.u32 2147483647, %v1164
        %v3717 = vand.u32 2147483647, %v1166
        %v3718 = vand.u32 2147483647, %v1679
        %v3719 = vand.u32 2147483647, %v1681
        %v3720 = vadd.f32 %v3690, %v3712
        %v3721 = vadd.f32 %v3691, %v3713
        %v3722 = vadd.f32 %v3692, %v3714
        %v3723 = vadd.f32 %v3693, %v3715
        %v3724 = vadd.f32 %v3694, %v3716
        %v3725 = vadd.f32 %v3695, %v3717
        %v3726 = vadd.f32 %v3696, %v3718
        %v3727 = vadd.f32 %v3697, %v3719
        %v3728 = vld [vmem:[%s308 + $0x840] sm:$0xff]
        %v3729 = vld [vmem:[%s308 + $0x848] sm:$0xff]
        %v3730 = vld [vmem:[%s308 + $0x850] sm:$0xff]
        %v3731 = vld [vmem:[%s308 + $0x858] sm:$0xff]
        %v3732 = vmul.f32 %v3728, %v1170
        %v3733 = vmul.f32 %v3729, %v1172
        %v3734 = vmul.f32 %v3730, %v1685
        %v3735 = vmul.f32 %v3731, %v1687
        %v3736 = vadd.s32 %v1756, 528
        %vm3737 = vcmp.lt.s32.totalorder %v3736, 600
        %vm3738 = vmand %vm1748, %vm3737
        %vm3739 = vmand %vm1749, %vm3737
        %vm3740 = vmand %vm1750, %vm3737
        %vm3741 = vmand %vm1751, %vm3737
        %v3742 = vsel %vm3738, %v3732, 0.0
        %v3743 = vsel %vm3739, %v3733, 0.0
        %v3744 = vsel %vm3740, %v3734, 0.0
        %v3745 = vsel %vm3741, %v3735, 0.0
        %v3746 = vand.u32 2147483647, %v1170
        %v3747 = vand.u32 2147483647, %v1172
        %v3748 = vand.u32 2147483647, %v1685
        %v3749 = vand.u32 2147483647, %v1687
        %v3750 = vadd.f32 %v3720, %v3742
        %v3751 = vadd.f32 %v3721, %v3743
        %v3752 = vadd.f32 %v3722, %v3744
        %v3753 = vadd.f32 %v3723, %v3745
        %v3754 = vadd.f32 %v3724, %v3746
        %v3755 = vadd.f32 %v3725, %v3747
        %v3756 = vadd.f32 %v3726, %v3748
        %v3757 = vadd.f32 %v3727, %v3749
        %v3758 = vld [vmem:[%s308 + $0x860] sm:$0xff]
        %v3759 = vld [vmem:[%s308 + $0x868] sm:$0xff]
        %v3760 = vld [vmem:[%s308 + $0x870] sm:$0xff]
        %v3761 = vld [vmem:[%s308 + $0x878] sm:$0xff]
        %v3762 = vmul.f32 %v3758, %v1176
        %v3763 = vmul.f32 %v3759, %v1178
        %v3764 = vmul.f32 %v3760, %v1691
        %v3765 = vmul.f32 %v3761, %v1693
        %v3766 = vadd.s32 %v1756, 536
        %vm3767 = vcmp.lt.s32.totalorder %v3766, 600
        %vm3768 = vmand %vm1748, %vm3767
        %vm3769 = vmand %vm1749, %vm3767
        %vm3770 = vmand %vm1750, %vm3767
        %vm3771 = vmand %vm1751, %vm3767
        %v3772 = vsel %vm3768, %v3762, 0.0
        %v3773 = vsel %vm3769, %v3763, 0.0
        %v3774 = vsel %vm3770, %v3764, 0.0
        %v3775 = vsel %vm3771, %v3765, 0.0
        %v3776 = vand.u32 2147483647, %v1176
        %v3777 = vand.u32 2147483647, %v1178
        %v3778 = vand.u32 2147483647, %v1691
        %v3779 = vand.u32 2147483647, %v1693
        %v3780 = vadd.f32 %v3750, %v3772
        %v3781 = vadd.f32 %v3751, %v3773
        %v3782 = vadd.f32 %v3752, %v3774
        %v3783 = vadd.f32 %v3753, %v3775
        %v3784 = vadd.f32 %v3754, %v3776
        %v3785 = vadd.f32 %v3755, %v3777
        %v3786 = vadd.f32 %v3756, %v3778
        %v3787 = vadd.f32 %v3757, %v3779
        %v3788 = vld [vmem:[%s308 + $0x880] sm:$0xff]
        %v3789 = vld [vmem:[%s308 + $0x888] sm:$0xff]
        %v3790 = vld [vmem:[%s308 + $0x890] sm:$0xff]
        %v3791 = vld [vmem:[%s308 + $0x898] sm:$0xff]
        %v3792 = vmul.f32 %v3788, %v1182
        %v3793 = vmul.f32 %v3789, %v1184
        %v3794 = vmul.f32 %v3790, %v1697
        %v3795 = vmul.f32 %v3791, %v1699
        %v3796 = vadd.s32 %v1756, 544
        %vm3797 = vcmp.lt.s32.totalorder %v3796, 600
        %vm3798 = vmand %vm1748, %vm3797
        %vm3799 = vmand %vm1749, %vm3797
        %vm3800 = vmand %vm1750, %vm3797
        %vm3801 = vmand %vm1751, %vm3797
        %v3802 = vsel %vm3798, %v3792, 0.0
        %v3803 = vsel %vm3799, %v3793, 0.0
        %v3804 = vsel %vm3800, %v3794, 0.0
        %v3805 = vsel %vm3801, %v3795, 0.0
        %v3806 = vand.u32 2147483647, %v1182
        %v3807 = vand.u32 2147483647, %v1184
        %v3808 = vand.u32 2147483647, %v1697
        %v3809 = vand.u32 2147483647, %v1699
        %v3810 = vadd.f32 %v3780, %v3802
        %v3811 = vadd.f32 %v3781, %v3803
        %v3812 = vadd.f32 %v3782, %v3804
        %v3813 = vadd.f32 %v3783, %v3805
        %v3814 = vadd.f32 %v3784, %v3806
        %v3815 = vadd.f32 %v3785, %v3807
        %v3816 = vadd.f32 %v3786, %v3808
        %v3817 = vadd.f32 %v3787, %v3809
        %v3818 = vld [vmem:[%s308 + $0x8a0] sm:$0xff]
        %v3819 = vld [vmem:[%s308 + $0x8a8] sm:$0xff]
        %v3820 = vld [vmem:[%s308 + $0x8b0] sm:$0xff]
        %v3821 = vld [vmem:[%s308 + $0x8b8] sm:$0xff]
        %v3822 = vmul.f32 %v3818, %v1188
        %v3823 = vmul.f32 %v3819, %v1190
        %v3824 = vmul.f32 %v3820, %v1703
        %v3825 = vmul.f32 %v3821, %v1705
        %v3826 = vadd.s32 %v1756, 552
        %vm3827 = vcmp.lt.s32.totalorder %v3826, 600
        %vm3828 = vmand %vm1748, %vm3827
        %vm3829 = vmand %vm1749, %vm3827
        %vm3830 = vmand %vm1750, %vm3827
        %vm3831 = vmand %vm1751, %vm3827
        %v3832 = vsel %vm3828, %v3822, 0.0
        %v3833 = vsel %vm3829, %v3823, 0.0
        %v3834 = vsel %vm3830, %v3824, 0.0
        %v3835 = vsel %vm3831, %v3825, 0.0
        %v3836 = vand.u32 2147483647, %v1188
        %v3837 = vand.u32 2147483647, %v1190
        %v3838 = vand.u32 2147483647, %v1703
        %v3839 = vand.u32 2147483647, %v1705
        %v3840 = vadd.f32 %v3810, %v3832
        %v3841 = vadd.f32 %v3811, %v3833
        %v3842 = vadd.f32 %v3812, %v3834
        %v3843 = vadd.f32 %v3813, %v3835
        %v3844 = vadd.f32 %v3814, %v3836
        %v3845 = vadd.f32 %v3815, %v3837
        %v3846 = vadd.f32 %v3816, %v3838
        %v3847 = vadd.f32 %v3817, %v3839
        %v3848 = vld [vmem:[%s308 + $0x8c0] sm:$0xff]
        %v3849 = vld [vmem:[%s308 + $0x8c8] sm:$0xff]
        %v3850 = vld [vmem:[%s308 + $0x8d0] sm:$0xff]
        %v3851 = vld [vmem:[%s308 + $0x8d8] sm:$0xff]
        %v3852 = vmul.f32 %v3848, %v1194
        %v3853 = vmul.f32 %v3849, %v1196
        %v3854 = vmul.f32 %v3850, %v1709
        %v3855 = vmul.f32 %v3851, %v1711
        %v3856 = vadd.s32 %v1756, 560
        %vm3857 = vcmp.lt.s32.totalorder %v3856, 600
        %vm3858 = vmand %vm1748, %vm3857
        %vm3859 = vmand %vm1749, %vm3857
        %vm3860 = vmand %vm1750, %vm3857
        %vm3861 = vmand %vm1751, %vm3857
        %v3862 = vsel %vm3858, %v3852, 0.0
        %v3863 = vsel %vm3859, %v3853, 0.0
        %v3864 = vsel %vm3860, %v3854, 0.0
        %v3865 = vsel %vm3861, %v3855, 0.0
        %v3866 = vand.u32 2147483647, %v1194
        %v3867 = vand.u32 2147483647, %v1196
        %v3868 = vand.u32 2147483647, %v1709
        %v3869 = vand.u32 2147483647, %v1711
        %v3870 = vadd.f32 %v3840, %v3862
        %v3871 = vadd.f32 %v3841, %v3863
        %v3872 = vadd.f32 %v3842, %v3864
        %v3873 = vadd.f32 %v3843, %v3865
        %v3874 = vadd.f32 %v3844, %v3866
        %v3875 = vadd.f32 %v3845, %v3867
        %v3876 = vadd.f32 %v3846, %v3868
        %v3877 = vadd.f32 %v3847, %v3869
        %v3878 = vld [vmem:[%s308 + $0x8e0] sm:$0xff]
        %v3879 = vld [vmem:[%s308 + $0x8e8] sm:$0xff]
        %v3880 = vld [vmem:[%s308 + $0x8f0] sm:$0xff]
        %v3881 = vld [vmem:[%s308 + $0x8f8] sm:$0xff]
        %v3882 = vmul.f32 %v3878, %v1200
        %v3883 = vmul.f32 %v3879, %v1202
        %v3884 = vmul.f32 %v3880, %v1715
        %v3885 = vmul.f32 %v3881, %v1717
        %v3886 = vadd.s32 %v1756, 568
        %vm3887 = vcmp.lt.s32.totalorder %v3886, 600
        %vm3888 = vmand %vm1748, %vm3887
        %vm3889 = vmand %vm1749, %vm3887
        %vm3890 = vmand %vm1750, %vm3887
        %vm3891 = vmand %vm1751, %vm3887
        %v3892 = vsel %vm3888, %v3882, 0.0
        %v3893 = vsel %vm3889, %v3883, 0.0
        %v3894 = vsel %vm3890, %v3884, 0.0
        %v3895 = vsel %vm3891, %v3885, 0.0
        %v3896 = vand.u32 2147483647, %v1200
        %v3897 = vand.u32 2147483647, %v1202
        %v3898 = vand.u32 2147483647, %v1715
        %v3899 = vand.u32 2147483647, %v1717
        %v3900 = vadd.f32 %v3870, %v3892
        %v3901 = vadd.f32 %v3871, %v3893
        %v3902 = vadd.f32 %v3872, %v3894
        %v3903 = vadd.f32 %v3873, %v3895
        %v3904 = vadd.f32 %v3874, %v3896
        %v3905 = vadd.f32 %v3875, %v3897
        %v3906 = vadd.f32 %v3876, %v3898
        %v3907 = vadd.f32 %v3877, %v3899
        %v3908 = vld [vmem:[%s308 + $0x900] sm:$0xff]
        %v3909 = vld [vmem:[%s308 + $0x908] sm:$0xff]
        %v3910 = vld [vmem:[%s308 + $0x910] sm:$0xff]
        %v3911 = vld [vmem:[%s308 + $0x918] sm:$0xff]
        %v3912 = vmul.f32 %v3908, %v1206
        %v3913 = vmul.f32 %v3909, %v1208
        %v3914 = vmul.f32 %v3910, %v1721
        %v3915 = vmul.f32 %v3911, %v1723
        %v3916 = vadd.s32 %v1756, 576
        %vm3917 = vcmp.lt.s32.totalorder %v3916, 600
        %vm3918 = vmand %vm1748, %vm3917
        %vm3919 = vmand %vm1749, %vm3917
        %vm3920 = vmand %vm1750, %vm3917
        %vm3921 = vmand %vm1751, %vm3917
        %v3922 = vsel %vm3918, %v3912, 0.0
        %v3923 = vsel %vm3919, %v3913, 0.0
        %v3924 = vsel %vm3920, %v3914, 0.0
        %v3925 = vsel %vm3921, %v3915, 0.0
        %v3926 = vand.u32 2147483647, %v1206
        %v3927 = vand.u32 2147483647, %v1208
        %v3928 = vand.u32 2147483647, %v1721
        %v3929 = vand.u32 2147483647, %v1723
        %v3930 = vadd.f32 %v3900, %v3922
        %v3931 = vadd.f32 %v3901, %v3923
        %v3932 = vadd.f32 %v3902, %v3924
        %v3933 = vadd.f32 %v3903, %v3925
        %v3934 = vadd.f32 %v3904, %v3926
        %v3935 = vadd.f32 %v3905, %v3927
        %v3936 = vadd.f32 %v3906, %v3928
        %v3937 = vadd.f32 %v3907, %v3929
        %v3938 = vld [vmem:[%s308 + $0x920] sm:$0xff]
        %v3939 = vld [vmem:[%s308 + $0x928] sm:$0xff]
        %v3940 = vld [vmem:[%s308 + $0x930] sm:$0xff]
        %v3941 = vld [vmem:[%s308 + $0x938] sm:$0xff]
        %v3942 = vmul.f32 %v3938, %v1212
        %v3943 = vmul.f32 %v3939, %v1214
        %v3944 = vmul.f32 %v3940, %v1727
        %v3945 = vmul.f32 %v3941, %v1729
        %v3946 = vadd.s32 %v1756, 584
        %vm3947 = vcmp.lt.s32.totalorder %v3946, 600
        %vm3948 = vmand %vm1748, %vm3947
        %vm3949 = vmand %vm1749, %vm3947
        %vm3950 = vmand %vm1750, %vm3947
        %vm3951 = vmand %vm1751, %vm3947
        %v3952 = vsel %vm3948, %v3942, 0.0
        %v3953 = vsel %vm3949, %v3943, 0.0
        %v3954 = vsel %vm3950, %v3944, 0.0
        %v3955 = vsel %vm3951, %v3945, 0.0
        %v3956 = vand.u32 2147483647, %v1212
        %v3957 = vand.u32 2147483647, %v1214
        %v3958 = vand.u32 2147483647, %v1727
        %v3959 = vand.u32 2147483647, %v1729
        %v3960 = vadd.f32 %v3930, %v3952
        %v3961 = vadd.f32 %v3931, %v3953
        %v3962 = vadd.f32 %v3932, %v3954
        %v3963 = vadd.f32 %v3933, %v3955
        %v3964 = vadd.f32 %v3934, %v3956
        %v3965 = vadd.f32 %v3935, %v3957
        %v3966 = vadd.f32 %v3936, %v3958
        %v3967 = vadd.f32 %v3937, %v3959
        %v3968 = vld [vmem:[%s308 + $0x940] sm:$0xff]
        %v3969 = vld [vmem:[%s308 + $0x948] sm:$0xff]
        %v3970 = vld [vmem:[%s308 + $0x950] sm:$0xff]
        %v3971 = vld [vmem:[%s308 + $0x958] sm:$0xff]
        %v3972 = vmul.f32 %v3968, %v1218
        %v3973 = vmul.f32 %v3969, %v1220
        %v3974 = vmul.f32 %v3970, %v1733
        %v3975 = vmul.f32 %v3971, %v1735
        %v3976 = vadd.s32 %v1756, 592
        %vm3977 = vcmp.lt.s32.totalorder %v3976, 600
        %vm3978 = vmand %vm1748, %vm3977
        %vm3979 = vmand %vm1749, %vm3977
        %vm3980 = vmand %vm1750, %vm3977
        %vm3981 = vmand %vm1751, %vm3977
        %v3982 = vsel %vm3978, %v3972, 0.0
        %v3983 = vsel %vm3979, %v3973, 0.0
        %v3984 = vsel %vm3980, %v3974, 0.0
        %v3985 = vsel %vm3981, %v3975, 0.0
        %v3986 = vand.u32 2147483647, %v1218
        %v3987 = vand.u32 2147483647, %v1220
        %v3988 = vand.u32 2147483647, %v1733
        %v3989 = vand.u32 2147483647, %v1735
        %v3990 = vadd.f32 %v3960, %v3982
        %v3991 = vadd.f32 %v3961, %v3983
        %v3992 = vadd.f32 %v3962, %v3984
        %v3993 = vadd.f32 %v3963, %v3985
        %v3994 = vadd.f32 %v3964, %v3986
        %v3995 = vadd.f32 %v3965, %v3987
        %v3996 = vadd.f32 %v3966, %v3988
        %v3997 = vadd.f32 %v3967, %v3989
        %v3998 = vadd.f32 %v3990, %v3991
        %v3999 = vadd.f32 %v3994, %v3995
        %v4000 = vadd.f32 %v3998, %v3992
        %v4001 = vadd.f32 %v3999, %v3996
        %v4002 = vadd.f32 %v4000, %v3993
        %v4003 = vadd.f32 %v4001, %v3997
        %4004 = vst [vmem:[%s379] sm:$0xff] %v4002
        %4005 = vst [vmem:[%s387] sm:$0xff] %v4003
        %s4006 = smul.u32 %s23, 2
        %s4007 = sadd.s32 %s4006, %s24
        %p4008 = scmp.lt.s32.totalorder %s4007, 1
        %s4009 = scalar_select %p4008, %s4007, 1
        %s4010 = smul.addr %s4009, 8
        %s4011 = scalar_lea.vmem %s3, %s4010
        %s4012 = smul.u32 %s23, 2
        %s4013 = sadd.s32 %s4012, %s24
        %p4014 = scmp.lt.s32.totalorder %s4013, 1
        %s4015 = scalar_select %p4014, %s4013, 1
        %s4016 = smul.addr %s4015, 8
        %s4017 = scalar_lea.vmem %s4, %s4016
        // Predicated region
        $region60: #{l1_loss_beta.1} parent=50 // pred_check
          %p4018 = pneg %p133
        $region61: #{l1_loss_beta.1} parent=50 // pred_check_branch
          %4020 = sbr.rel (%p4018) target = $region63
        $region62: #{l1_loss_beta.1} parent=50 // pred_region
          %s4021 = smul.u32 %s23, 2
          %s4022 = sadd.s32 %s4021, %s24
        $region63: #{l1_loss_beta.1} parent=50 // pred_fallthru
          _
        // Predicated region
        $region64: #{l1_loss_beta.1} parent=50 // pred_check
          %p4023 = pneg %p163
        $region65: #{l1_loss_beta.1} parent=50 // pred_check_branch
          %4025 = sbr.rel (%p4023) target = $region67
        $region66: #{l1_loss_beta.1} parent=50 // pred_region
          %s4026 = smul.u32 %s23, 2
          %s4027 = sadd.s32 %s4026, %s24
        $region67: #{l1_loss_beta.1} parent=50 // pred_fallthru
          _
      $region51: #{l1_loss_beta.1} parent=5 // pred_fallthru
        _
      %p4028 = scmp.le.s32.totalorder 2, %s14
      // Predicated region
      $region68: #{l1_loss_beta.1} parent=5 // pred_check
        %p4029 = pneg %p4028
      $region69: #{l1_loss_beta.1} parent=5 // pred_check_branch
        %4031 = sbr.rel (%p4029) target = $region71
      $region70: #{l1_loss_beta.1} parent=5 // pred_region
        %s4032 = ssub.s32 %s14, 2
        // Predicated region
        $region72: #{l1_loss_beta.1} parent=70 // pred_check
          %p4033 = pneg %p139
        $region73: #{l1_loss_beta.1} parent=70 // pred_check_branch
          %4035 = sbr.rel (%p4033) target = $region75
        $region74: #{l1_loss_beta.1} parent=70 // pred_region
          %s4036 = smul.u32 %s25, 2
          %s4037 = sadd.s32 %s4036, %s26
          %p4038 = scmp.lt.s32.totalorder %s4037, 1
          %s4039 = scalar_select %p4038, %s4037, 1
          %s4040 = smul.addr %s4039, 8
          %s4041 = scalar_lea.vmem %s3, %s4040
        $region75: #{l1_loss_beta.1} parent=70 // pred_fallthru
          _
        // Predicated region
        $region76: #{l1_loss_beta.1} parent=70 // pred_check
          %p4042 = pneg %p169
        $region77: #{l1_loss_beta.1} parent=70 // pred_check_branch
          %4044 = sbr.rel (%p4042) target = $region79
        $region78: #{l1_loss_beta.1} parent=70 // pred_region
          %s4045 = smul.u32 %s25, 2
          %s4046 = sadd.s32 %s4045, %s26
          %p4047 = scmp.lt.s32.totalorder %s4046, 1
          %s4048 = scalar_select %p4047, %s4046, 1
          %s4049 = smul.addr %s4048, 8
          %s4050 = scalar_lea.vmem %s4, %s4049
        $region79: #{l1_loss_beta.1} parent=70 // pred_fallthru
          _
      $region71: #{l1_loss_beta.1} parent=5 // pred_fallthru
        _
    $region6: #{l1_loss_beta.1} parent=1 // loop_footer
      %s18 = sadd.s32 1, %s14
    $region7: #{l1_loss_beta.1} parent=1 // loop_footer_branch
      %13 = sbr.rel target = $region3
    $region8: #{l1_loss_beta.1} parent=1 // loop_exit
      _
    %4051 = vsyncpa [#allocation4], 1
    %s4052 = scalar_lea.sflag [#allocation4], 1
    %4053 = vsyncpa %s4052, 1

</llo_original>
